<compile_context>
chip_gen: v7x
topology: tpu7x:2x2x1
jax: 0.10.0
libtpu: 0.0.40
codegen_flags: <defaults>
</compile_context>

<pallas_src>
import functools

import jax
import jax.numpy as jnp
from jax import lax
from jax.experimental import pallas as pl
from jax.experimental.pallas import tpu as pltpu


def _dcb_kernel(offs_ref, x_ref, base_ref, w_def_ref, w_bal_ref, bal_b_ref,
                out_ref, g_ref, *, K, pad, dil, H, W, TG):
    f32 = jnp.float32
    bf16 = jnp.bfloat16
    KK = K * K

    x_bf = x_ref[0]                       # (C, HW)  bf16 flattened input
    w_def = w_def_ref[...]                # (C, KK)  f32 depthwise deform weights
    h_base = base_ref[0:1, :]             # (1, TP)  output-pixel row (float)
    w_base = base_ref[1:2, :]             # (1, TP)  output-pixel col (float)

    C = x_bf.shape[0]
    TP = h_base.shape[1]

    # Source-pixel row / col indices generated in-kernel (no DMA'd iota inputs).
    r_idx = lax.broadcasted_iota(jnp.int32, (H, TP), 0).astype(f32)    # (H, TP)
    c_idx = lax.broadcasted_iota(jnp.int32, (W, TP), 0).astype(f32)    # (W, TP)

    d_acc = jnp.zeros((C, TP), f32)
    for g in range(KK // TG):
        # Build the tap-stacked gather matrix for this group: (HW, TG*TP) bf16.
        for j in range(TG):
            t = g * TG + j
            kh, kw = divmod(t, K)
            dy = offs_ref[0, 2 * t:2 * t + 1, :]             # (1, TP)
            dx = offs_ref[0, 2 * t + 1:2 * t + 2, :]
            y = h_base + float(dil * kh - pad) + dy          # sampling row
            xs = w_base + float(dil * kw - pad) + dx         # sampling col

            # Separable bilinear tent weights (f32 elementwise; bf16 only at the
            # very end for the MXU).  Rows/cols >= 1 away get weight 0, which
            # reproduces torchvision's bilinear border handling without masks.
            row_f = jnp.maximum(0.0, 1.0 - jnp.abs(r_idx - y))     # (H, TP)
            col_f = jnp.maximum(0.0, 1.0 - jnp.abs(c_idx - xs))    # (W, TP)
            # NOTE: W % 8 == 0 keeps this reshape a free (tile-aligned) collapse.
            gt = (row_f[:, None, :] * col_f[None, :, :]).reshape(H * W, TP)
            g_ref[:, j * TP:(j + 1) * TP] = gt.astype(bf16)

        # One wide MXU matmul for the whole tap group (bf16 operands, f32 acc).
        samp = jnp.dot(x_bf, g_ref[...], preferred_element_type=f32)  # (C, TG*TP)

        for j in range(TG):
            t = g * TG + j
            d_acc = d_acc + w_def[:, t:t + 1] * samp[:, j * TP:(j + 1) * TP]

    # Balance branch: 1x1 conv (BN scale folded into weights) + shift, in f32.
    out = jnp.dot(w_bal_ref[...], d_acc, preferred_element_type=f32) + bal_b_ref[...]
    out_ref[0] = out.astype(out_ref.dtype)


def init_params(key, C, K):
    KK = K * K
    ks = jax.random.split(key, 13)

    def nrm(k, shape, s=1.0):
        return s * jax.random.normal(k, shape, jnp.float32)

    p = {}
    # offset = Conv2d(C, 2*K*K, K, padding=K//2) + BatchNorm2d(2*K*K)
    p["w_off_full"] = nrm(ks[0], (2 * KK, C, K, K), 0.1)
    p["b_off"] = nrm(ks[1], (2 * KK,), 0.1)
    p["gamma_off"] = 1.0 + nrm(ks[2], (2 * KK,), 0.1)
    p["beta_off"] = nrm(ks[3], (2 * KK,), 0.1)
    p["mean_off"] = nrm(ks[4], (2 * KK,), 0.1)
    p["var_off"] = jax.random.uniform(ks[5], (2 * KK,), jnp.float32, 0.5, 1.5)
    # deform = DeformConv2d(C, C, K, padding=1, groups=C, bias=False)
    p["w_def_full"] = nrm(ks[6], (C, 1, K, K), 0.3)
    # balance = Conv2d(C, C, 1) + BatchNorm2d(C)
    p["w_bal_full"] = nrm(ks[7], (C, C, 1, 1), 0.3)
    p["b_bal"] = nrm(ks[8], (C,), 0.1)
    p["gamma_bal"] = 1.0 + nrm(ks[9], (C,), 0.1)
    p["beta_bal"] = nrm(ks[10], (C,), 0.1)
    p["mean_bal"] = nrm(ks[11], (C,), 0.1)
    p["var_bal"] = jax.random.uniform(ks[12], (C,), jnp.float32, 0.5, 1.5)
    return p


def _round_up(v, m):
    return ((v + m - 1) // m) * m


def _vmem_budget():
    """Per-chip VMEM budget with headroom (never the full physical capacity)."""
    try:
        cap = int(pltpu.get_tpu_info().vmem_capacity_bytes)
    except Exception:
        cap = 64 << 20            # conservative fallback (v7x per-TC capacity)
    return int(0.75 * cap)


def _choose_pixel_tile(HWp, HW, C, KK, budget):
    """Largest 128-multiple output-pixel tile whose working set fits the budget."""
    for cand in (512, 256, 128):
        if cand > HWp or HWp % cand != 0:
            continue
        est = (2 * C * HW * 2            # x block, double-buffered (bf16)
               + HW * KK * cand * 2      # tap-stacked gather scratch (worst case)
               + 6 * HW * cand * 4       # Gt construction temporaries (f32)
               + (8 << 20))              # weights + compiler headroom
        if est <= budget:
            return cand
    return 128


def dcb_func_pallas(x, p, K=3, pad=1, dil=1, tp=None):
    assert dil == 1, "dilation > 1 not implemented"   # TODO(synk): dilation > 1
    eps = 1e-5
    N, C, H, W = x.shape
    HW = H * W
    KK = K * K
    hp = lax.Precision.HIGHEST

    # ---- offset branch outside the kernel (tiny conv; avoids 9x im2col DMA) ----
    a_off = p["gamma_off"] / jnp.sqrt(p["var_off"] + eps)
    w_off_s = p["w_off_full"] * a_off[:, None, None, None]          # BN scale folded
    b_off_s = a_off * p["b_off"] + p["beta_off"] - a_off * p["mean_off"]
    offs = lax.conv_general_dilated(
        x, w_off_s, window_strides=(1, 1),
        padding=[(K // 2, K // 2), (K // 2, K // 2)],
        rhs_dilation=(dil, dil),
        dimension_numbers=("NCHW", "OIHW", "NCHW"), precision=hp)
    offs = (offs + b_off_s[None, :, None, None]).reshape(N, 2 * KK, HW)
    offs = offs.astype(jnp.float32)                                 # coords stay f32

    # ---- kernel inputs ----
    x_flat = x.reshape(N, C, HW).astype(jnp.bfloat16)               # MXU operand

    w_def = p["w_def_full"].reshape(C, KK).astype(jnp.float32)

    a_bal = p["gamma_bal"] / jnp.sqrt(p["var_bal"] + eps)
    w_bal_s = (a_bal[:, None] * p["w_bal_full"].reshape(C, C)).astype(jnp.float32)
    bal_b = (a_bal * p["b_bal"] + p["beta_bal"] - a_bal * p["mean_bal"])[:, None]
    bal_b = bal_b.astype(jnp.float32)

    # ---- pad the OUTPUT-pixel axis to a multiple of 128 (lane-dense stores) ----
    HWp = max(_round_up(HW, 128), 128)
    if HWp != HW:
        offs = jnp.pad(offs, ((0, 0), (0, 0), (0, HWp - HW)))

    pidx = jnp.arange(HWp, dtype=jnp.int32)
    base_hw = jnp.stack([(pidx // W).astype(jnp.float32),
                         (pidx % W).astype(jnp.float32)], axis=0)    # (2, HWp)

    # ---- tiling / VMEM budgeting ----
    budget = _vmem_budget()
    if tp is None:
        tp = _choose_pixel_tile(HWp, HW, C, KK, budget)
    assert HWp % tp == 0
    n_pt = HWp // tp

    # tap-group size: taps batched into one (HW, TG*tp) matmul per group
    tg = 1
    for cand in (KK, 3, 1):
        if KK % cand == 0 and HW * cand * tp * 2 <= (12 << 20):
            tg = cand
            break

    vmem_est = (2 * C * HW * 2                       # x block (bf16), double-buffered
                + 2 * _round_up(2 * KK, 8) * tp * 4  # offsets block
                + 2 * 8 * tp * 4                     # base coords block
                + 2 * _round_up(C, 8) * tp * 4       # output block
                + HW * tg * tp * 2                   # tap-stacked gather scratch
                + 6 * HW * tp * 4                    # Gt construction temporaries
                + _round_up(C, 8) * tg * tp * 4      # group matmul result
                + (8 << 20))                         # weights + compiler headroom
    vmem_bytes = int(min(max(vmem_est, 16 << 20), budget))

    kern = functools.partial(_dcb_kernel, K=K, pad=pad, dil=dil, H=H, W=W, TG=tg)
    out_flat = pl.pallas_call(
        kern,
        out_shape=jax.ShapeDtypeStruct((N, C, HWp), jnp.float32),
        grid=(N, n_pt),
        in_specs=[
            pl.BlockSpec((1, 2 * KK, tp), lambda n, pi: (n, 0, pi)),   # offsets
            pl.BlockSpec((1, C, HW), lambda n, pi: (n, 0, 0)),         # x (bf16)
            pl.BlockSpec((2, tp), lambda n, pi: (0, pi)),              # dest pixel coords
            pl.BlockSpec((C, KK), lambda n, pi: (0, 0)),               # deform weights
            pl.BlockSpec((C, C), lambda n, pi: (0, 0)),                # balance weights
            pl.BlockSpec((C, 1), lambda n, pi: (0, 0)),                # balance shift
        ],
        out_specs=pl.BlockSpec((1, C, tp), lambda n, pi: (n, 0, pi)),
        scratch_shapes=[pltpu.VMEM((HW, tg * tp), jnp.bfloat16)],      # tap-stacked Gt
        compiler_params=pltpu.CompilerParams(
            dimension_semantics=("parallel", "parallel"),
            vmem_limit_bytes=vmem_bytes),
    )(offs, x_flat, base_hw, w_def, w_bal_s, bal_b)

    return out_flat[:, :, :HW].reshape(N, C, H, W)


def dcb_func_reference(x, p, K=3, pad=1, dil=1):
    """Plain-JAX reference (matches torchvision deform_conv2d bilinear semantics)."""
    eps = 1e-5
    N, C, H, W = x.shape
    KK = K * K
    hp = lax.Precision.HIGHEST

    y = lax.conv_general_dilated(
        x, p["w_off_full"], window_strides=(1, 1),
        padding=[(K // 2, K // 2), (K // 2, K // 2)],
        rhs_dilation=(dil, dil),
        dimension_numbers=("NCHW", "OIHW", "NCHW"), precision=hp)
    y = y + p["b_off"][None, :, None, None]
    offs = ((y - p["mean_off"][None, :, None, None])
            / jnp.sqrt(p["var_off"] + eps)[None, :, None, None]
            * p["gamma_off"][None, :, None, None] + p["beta_off"][None, :, None, None])

    hgrid = jnp.arange(H, dtype=jnp.float32)[None, :, None]
    wgrid = jnp.arange(W, dtype=jnp.float32)[None, None, :]
    n_idx = jnp.arange(N)[:, None, None, None]
    c_idx = jnp.arange(C)[None, :, None, None]
    d_out = jnp.zeros((N, C, H, W), jnp.float32)
    for t in range(KK):
        kh, kw = divmod(t, K)
        dy = offs[:, 2 * t]
        dx = offs[:, 2 * t + 1]
        yy = hgrid + float(dil * kh - pad) + dy
        xx = wgrid + float(dil * kw - pad) + dx
        inb = (yy > -1.0) & (yy < H) & (xx > -1.0) & (xx < W)
        h_lo = jnp.floor(yy)
        w_lo = jnp.floor(xx)
        lh = yy - h_lo
        lw = xx - w_lo
        hh = 1.0 - lh
        hw = 1.0 - lw
        h_lo_i = h_lo.astype(jnp.int32)
        w_lo_i = w_lo.astype(jnp.int32)
        h_hi_i = h_lo_i + 1
        w_hi_i = w_lo_i + 1

        def corner(hi, wi, wgt):
            valid = (hi >= 0) & (hi <= H - 1) & (wi >= 0) & (wi <= W - 1) & inb
            hic = jnp.clip(hi, 0, H - 1)
            wic = jnp.clip(wi, 0, W - 1)
            v = x[n_idx, c_idx, hic[:, None], wic[:, None]]          # (N,C,H,W)
            return jnp.where(valid[:, None], wgt[:, None] * v, 0.0)

        samp = (corner(h_lo_i, w_lo_i, hh * hw) + corner(h_lo_i, w_hi_i, hh * lw)
                + corner(h_hi_i, w_lo_i, lh * hw) + corner(h_hi_i, w_hi_i, lh * lw))
        d_out = d_out + p["w_def_full"][:, 0, kh, kw][None, :, None, None] * samp

    z = jnp.einsum("oc,nchw->nohw", p["w_bal_full"][:, :, 0, 0], d_out,
                   precision=hp) + p["b_bal"][None, :, None, None]
    out = ((z - p["mean_bal"][None, :, None, None])
           / jnp.sqrt(p["var_bal"] + eps)[None, :, None, None]
           * p["gamma_bal"][None, :, None, None] + p["beta_bal"][None, :, None, None])
    return out


if __name__ == "__main__":
    N, C, H, W = 2, 4, 16, 16
    K, pad, dil = 3, 1, 1

    key = jax.random.PRNGKey(0)
    kx, kp = jax.random.split(key)
    x = jax.random.normal(kx, (N, C, H, W), jnp.float32)
    params = init_params(kp, C, K)

    out = dcb_func_pallas(x, params, K=K, pad=pad, dil=dil)
    out = jax.block_until_ready(out)
    assert out.shape == (N, C, H, W)

    ref = dcb_func_reference(x, params, K=K, pad=pad, dil=dil)
    max_err = float(jnp.max(jnp.abs(out - ref)))
    scale = float(jnp.max(jnp.abs(ref))) + 1e-6
    if not (max_err <= 5e-2 * scale):
        raise AssertionError(f"kernel/reference mismatch: max_err={max_err}, scale={scale}")

    print("KERNEL_OK")
</pallas_src>

<mosaic_0001>
module attributes {stable_mosaic.version = 11 : i64} {
  func.func @_dcb_kernel(%arg0: i32, %arg1: i32, %arg2: memref<1x18x256xf32, #tpu.memory_space<vmem>>, %arg3: memref<1x4x256xbf16, #tpu.memory_space<vmem>>, %arg4: memref<2x256xf32, #tpu.memory_space<vmem>>, %arg5: memref<4x9xf32, #tpu.memory_space<vmem>>, %arg6: memref<4x4xf32, #tpu.memory_space<vmem>>, %arg7: memref<4x1xf32, #tpu.memory_space<vmem>>, %arg8: memref<1x4x256xf32, #tpu.memory_space<vmem>>, %arg9: memref<256x2304xbf16, #tpu.memory_space<vmem>>) attributes {dimension_semantics = [#tpu.dimension_semantics<parallel>, #tpu.dimension_semantics<parallel>], iteration_bounds = array<i64: 2, 1>, scalar_prefetch = 0 : i64, scratch_operands = 1 : i64, tpu.core_type = #tpu.core_type<tc>, window_params = [{transform_indices = @transform_0, window_bounds = array<i64: 1, 18, 256>}, {transform_indices = @transform_1, window_bounds = array<i64: 1, 4, 256>}, {transform_indices = @transform_2, window_bounds = array<i64: 2, 256>}, {pipeline_mode = #tpu.pipeline_mode<synchronous>, transform_indices = @transform_3, window_bounds = array<i64: 4, 9>}, {pipeline_mode = #tpu.pipeline_mode<synchronous>, transform_indices = @transform_4, window_bounds = array<i64: 4, 4>}, {pipeline_mode = #tpu.pipeline_mode<synchronous>, transform_indices = @transform_5, window_bounds = array<i64: 4, 1>}, {transform_indices = @transform_6, window_bounds = array<i64: 1, 4, 256>}]} {
    %c0 = arith.constant 0 : index
    %c0_0 = arith.constant 0 : index
    %c0_1 = arith.constant 0 : index
    %0 = vector.load %arg3[%c0, %c0_0, %c0_1] : memref<1x4x256xbf16, #tpu.memory_space<vmem>>, vector<1x4x256xbf16>
    %1 = vector.shape_cast %0 : vector<1x4x256xbf16> to vector<4x256xbf16>
    %c0_2 = arith.constant 0 : index
    %c0_3 = arith.constant 0 : index
    %2 = vector.load %arg5[%c0_2, %c0_3] : memref<4x9xf32, #tpu.memory_space<vmem>>, vector<4x9xf32>
    %c0_4 = arith.constant 0 : index
    %c0_5 = arith.constant 0 : index
    %3 = vector.load %arg4[%c0_4, %c0_5] : memref<2x256xf32, #tpu.memory_space<vmem>>, vector<1x256xf32>
    %c1 = arith.constant 1 : index
    %c0_6 = arith.constant 0 : index
    %4 = vector.load %arg4[%c1, %c0_6] : memref<2x256xf32, #tpu.memory_space<vmem>>, vector<1x256xf32>
    %5 = tpu.iota {dimensions = array<i32: 0>} : vector<16x256xi32>
    %6 = arith.sitofp %5 : vector<16x256xi32> to vector<16x256xf32>
    %7 = tpu.iota {dimensions = array<i32: 0>} : vector<16x256xi32>
    %8 = arith.sitofp %7 : vector<16x256xi32> to vector<16x256xf32>
    %cst = arith.constant 0.000000e+00 : f32
    %9 = vector.broadcast %cst : f32 to vector<4x256xf32>
    %c0_7 = arith.constant 0 : index
    %c0_8 = arith.constant 0 : index
    %c0_9 = arith.constant 0 : index
    %10 = vector.load %arg2[%c0_7, %c0_8, %c0_9] : memref<1x18x256xf32, #tpu.memory_space<vmem>>, vector<1x1x256xf32>
    %11 = vector.shape_cast %10 : vector<1x1x256xf32> to vector<1x256xf32>
    %c0_10 = arith.constant 0 : index
    %c1_11 = arith.constant 1 : index
    %c0_12 = arith.constant 0 : index
    %12 = vector.load %arg2[%c0_10, %c1_11, %c0_12] : memref<1x18x256xf32, #tpu.memory_space<vmem>>, vector<1x1x256xf32>
    %13 = vector.shape_cast %12 : vector<1x1x256xf32> to vector<1x256xf32>
    %cst_13 = arith.constant -1.000000e+00 : f32
    %14 = vector.broadcast %cst_13 : f32 to vector<1x256xf32>
    %15 = arith.addf %3, %14 : vector<1x256xf32>
    %16 = arith.addf %15, %11 : vector<1x256xf32>
    %cst_14 = arith.constant -1.000000e+00 : f32
    %17 = vector.broadcast %cst_14 : f32 to vector<1x256xf32>
    %18 = arith.addf %4, %17 : vector<1x256xf32>
    %19 = arith.addf %18, %13 : vector<1x256xf32>
    %20 = vector.broadcast %16 : vector<1x256xf32> to vector<16x256xf32>
    %21 = arith.subf %6, %20 : vector<16x256xf32>
    %22 = math.absf %21 : vector<16x256xf32>
    %cst_15 = arith.constant 1.000000e+00 : f32
    %23 = vector.broadcast %cst_15 : f32 to vector<16x256xf32>
    %24 = arith.subf %23, %22 : vector<16x256xf32>
    %cst_16 = arith.constant 0.000000e+00 : f32
    %25 = vector.broadcast %cst_16 : f32 to vector<16x256xf32>
    %26 = arith.maximumf %25, %24 : vector<16x256xf32>
    %27 = vector.broadcast %19 : vector<1x256xf32> to vector<16x256xf32>
    %28 = arith.subf %8, %27 : vector<16x256xf32>
    %29 = math.absf %28 : vector<16x256xf32>
    %cst_17 = arith.constant 1.000000e+00 : f32
    %30 = vector.broadcast %cst_17 : f32 to vector<16x256xf32>
    %31 = arith.subf %30, %29 : vector<16x256xf32>
    %cst_18 = arith.constant 0.000000e+00 : f32
    %32 = vector.broadcast %cst_18 : f32 to vector<16x256xf32>
    %33 = arith.maximumf %32, %31 : vector<16x256xf32>
    %34 = vector.shape_cast %26 : vector<16x256xf32> to vector<16x1x256xf32>
    %35 = vector.shape_cast %33 : vector<16x256xf32> to vector<1x16x256xf32>
    %36 = vector.broadcast %34 : vector<16x1x256xf32> to vector<16x16x256xf32>
    %37 = vector.broadcast %35 : vector<1x16x256xf32> to vector<16x16x256xf32>
    %38 = arith.mulf %36, %37 : vector<16x16x256xf32>
    %39 = vector.shape_cast %38 : vector<16x16x256xf32> to vector<256x256xf32>
    %40 = arith.truncf %39 : vector<256x256xf32> to vector<256x256xbf16>
    %c0_19 = arith.constant 0 : index
    %c0_20 = arith.constant 0 : index
    %41 = vector.load %arg9[%c0_19, %c0_20] : memref<256x2304xbf16, #tpu.memory_space<vmem>>, vector<256x256xbf16>
    tpu.vector_store %arg9[%c0_19, %c0_20], %40 {strides = array<i32>} : memref<256x2304xbf16, #tpu.memory_space<vmem>>, vector<256x256xbf16>,
    %c0_21 = arith.constant 0 : index
    %c2 = arith.constant 2 : index
    %c0_22 = arith.constant 0 : index
    %42 = vector.load %arg2[%c0_21, %c2, %c0_22] : memref<1x18x256xf32, #tpu.memory_space<vmem>>, vector<1x1x256xf32>
    %43 = vector.shape_cast %42 : vector<1x1x256xf32> to vector<1x256xf32>
    %c0_23 = arith.constant 0 : index
    %c3 = arith.constant 3 : index
    %c0_24 = arith.constant 0 : index
    %44 = vector.load %arg2[%c0_23, %c3, %c0_24] : memref<1x18x256xf32, #tpu.memory_space<vmem>>, vector<1x1x256xf32>
    %45 = vector.shape_cast %44 : vector<1x1x256xf32> to vector<1x256xf32>
    %cst_25 = arith.constant -1.000000e+00 : f32
    %46 = vector.broadcast %cst_25 : f32 to vector<1x256xf32>
    %47 = arith.addf %3, %46 : vector<1x256xf32>
    %48 = arith.addf %47, %43 : vector<1x256xf32>
    %cst_26 = arith.constant 0.000000e+00 : f32
    %49 = vector.broadcast %cst_26 : f32 to vector<1x256xf32>
    %50 = arith.addf %4, %49 : vector<1x256xf32>
    %51 = arith.addf %50, %45 : vector<1x256xf32>
    %52 = vector.broadcast %48 : vector<1x256xf32> to vector<16x256xf32>
    %53 = arith.subf %6, %52 : vector<16x256xf32>
    %54 = math.absf %53 : vector<16x256xf32>
    %cst_27 = arith.constant 1.000000e+00 : f32
    %55 = vector.broadcast %cst_27 : f32 to vector<16x256xf32>
    %56 = arith.subf %55, %54 : vector<16x256xf32>
    %cst_28 = arith.constant 0.000000e+00 : f32
    %57 = vector.broadcast %cst_28 : f32 to vector<16x256xf32>
    %58 = arith.maximumf %57, %56 : vector<16x256xf32>
    %59 = vector.broadcast %51 : vector<1x256xf32> to vector<16x256xf32>
    %60 = arith.subf %8, %59 : vector<16x256xf32>
    %61 = math.absf %60 : vector<16x256xf32>
    %cst_29 = arith.constant 1.000000e+00 : f32
    %62 = vector.broadcast %cst_29 : f32 to vector<16x256xf32>
    %63 = arith.subf %62, %61 : vector<16x256xf32>
    %cst_30 = arith.constant 0.000000e+00 : f32
    %64 = vector.broadcast %cst_30 : f32 to vector<16x256xf32>
    %65 = arith.maximumf %64, %63 : vector<16x256xf32>
    %66 = vector.shape_cast %58 : vector<16x256xf32> to vector<16x1x256xf32>
    %67 = vector.shape_cast %65 : vector<16x256xf32> to vector<1x16x256xf32>
    %68 = vector.broadcast %66 : vector<16x1x256xf32> to vector<16x16x256xf32>
    %69 = vector.broadcast %67 : vector<1x16x256xf32> to vector<16x16x256xf32>
    %70 = arith.mulf %68, %69 : vector<16x16x256xf32>
    %71 = vector.shape_cast %70 : vector<16x16x256xf32> to vector<256x256xf32>
    %72 = arith.truncf %71 : vector<256x256xf32> to vector<256x256xbf16>
    %c0_31 = arith.constant 0 : index
    %c256 = arith.constant 256 : index
    %73 = vector.load %arg9[%c0_31, %c256] : memref<256x2304xbf16, #tpu.memory_space<vmem>>, vector<256x256xbf16>
    tpu.vector_store %arg9[%c0_31, %c256], %72 {strides = array<i32>} : memref<256x2304xbf16, #tpu.memory_space<vmem>>, vector<256x256xbf16>,
    %c0_32 = arith.constant 0 : index
    %c4 = arith.constant 4 : index
    %c0_33 = arith.constant 0 : index
    %74 = vector.load %arg2[%c0_32, %c4, %c0_33] : memref<1x18x256xf32, #tpu.memory_space<vmem>>, vector<1x1x256xf32>
    %75 = vector.shape_cast %74 : vector<1x1x256xf32> to vector<1x256xf32>
    %c0_34 = arith.constant 0 : index
    %c5 = arith.constant 5 : index
    %c0_35 = arith.constant 0 : index
    %76 = vector.load %arg2[%c0_34, %c5, %c0_35] : memref<1x18x256xf32, #tpu.memory_space<vmem>>, vector<1x1x256xf32>
    %77 = vector.shape_cast %76 : vector<1x1x256xf32> to vector<1x256xf32>
    %cst_36 = arith.constant -1.000000e+00 : f32
    %78 = vector.broadcast %cst_36 : f32 to vector<1x256xf32>
    %79 = arith.addf %3, %78 : vector<1x256xf32>
    %80 = arith.addf %79, %75 : vector<1x256xf32>
    %cst_37 = arith.constant 1.000000e+00 : f32
    %81 = vector.broadcast %cst_37 : f32 to vector<1x256xf32>
    %82 = arith.addf %4, %81 : vector<1x256xf32>
    %83 = arith.addf %82, %77 : vector<1x256xf32>
    %84 = vector.broadcast %80 : vector<1x256xf32> to vector<16x256xf32>
    %85 = arith.subf %6, %84 : vector<16x256xf32>
    %86 = math.absf %85 : vector<16x256xf32>
    %cst_38 = arith.constant 1.000000e+00 : f32
    %87 = vector.broadcast %cst_38 : f32 to vector<16x256xf32>
    %88 = arith.subf %87, %86 : vector<16x256xf32>
    %cst_39 = arith.constant 0.000000e+00 : f32
    %89 = vector.broadcast %cst_39 : f32 to vector<16x256xf32>
    %90 = arith.maximumf %89, %88 : vector<16x256xf32>
    %91 = vector.broadcast %83 : vector<1x256xf32> to vector<16x256xf32>
    %92 = arith.subf %8, %91 : vector<16x256xf32>
    %93 = math.absf %92 : vector<16x256xf32>
    %cst_40 = arith.constant 1.000000e+00 : f32
    %94 = vector.broadcast %cst_40 : f32 to vector<16x256xf32>
    %95 = arith.subf %94, %93 : vector<16x256xf32>
    %cst_41 = arith.constant 0.000000e+00 : f32
    %96 = vector.broadcast %cst_41 : f32 to vector<16x256xf32>
    %97 = arith.maximumf %96, %95 : vector<16x256xf32>
    %98 = vector.shape_cast %90 : vector<16x256xf32> to vector<16x1x256xf32>
    %99 = vector.shape_cast %97 : vector<16x256xf32> to vector<1x16x256xf32>
    %100 = vector.broadcast %98 : vector<16x1x256xf32> to vector<16x16x256xf32>
    %101 = vector.broadcast %99 : vector<1x16x256xf32> to vector<16x16x256xf32>
    %102 = arith.mulf %100, %101 : vector<16x16x256xf32>
    %103 = vector.shape_cast %102 : vector<16x16x256xf32> to vector<256x256xf32>
    %104 = arith.truncf %103 : vector<256x256xf32> to vector<256x256xbf16>
    %c0_42 = arith.constant 0 : index
    %c512 = arith.constant 512 : index
    %105 = vector.load %arg9[%c0_42, %c512] : memref<256x2304xbf16, #tpu.memory_space<vmem>>, vector<256x256xbf16>
    tpu.vector_store %arg9[%c0_42, %c512], %104 {strides = array<i32>} : memref<256x2304xbf16, #tpu.memory_space<vmem>>, vector<256x256xbf16>,
    %c0_43 = arith.constant 0 : index
    %c6 = arith.constant 6 : index
    %c0_44 = arith.constant 0 : index
    %106 = vector.load %arg2[%c0_43, %c6, %c0_44] : memref<1x18x256xf32, #tpu.memory_space<vmem>>, vector<1x1x256xf32>
    %107 = vector.shape_cast %106 : vector<1x1x256xf32> to vector<1x256xf32>
    %c0_45 = arith.constant 0 : index
    %c7 = arith.constant 7 : index
    %c0_46 = arith.constant 0 : index
    %108 = vector.load %arg2[%c0_45, %c7, %c0_46] : memref<1x18x256xf32, #tpu.memory_space<vmem>>, vector<1x1x256xf32>
    %109 = vector.shape_cast %108 : vector<1x1x256xf32> to vector<1x256xf32>
    %cst_47 = arith.constant 0.000000e+00 : f32
    %110 = vector.broadcast %cst_47 : f32 to vector<1x256xf32>
    %111 = arith.addf %3, %110 : vector<1x256xf32>
    %112 = arith.addf %111, %107 : vector<1x256xf32>
    %cst_48 = arith.constant -1.000000e+00 : f32
    %113 = vector.broadcast %cst_48 : f32 to vector<1x256xf32>
    %114 = arith.addf %4, %113 : vector<1x256xf32>
    %115 = arith.addf %114, %109 : vector<1x256xf32>
    %116 = vector.broadcast %112 : vector<1x256xf32> to vector<16x256xf32>
    %117 = arith.subf %6, %116 : vector<16x256xf32>
    %118 = math.absf %117 : vector<16x256xf32>
    %cst_49 = arith.constant 1.000000e+00 : f32
    %119 = vector.broadcast %cst_49 : f32 to vector<16x256xf32>
    %120 = arith.subf %119, %118 : vector<16x256xf32>
    %cst_50 = arith.constant 0.000000e+00 : f32
    %121 = vector.broadcast %cst_50 : f32 to vector<16x256xf32>
    %122 = arith.maximumf %121, %120 : vector<16x256xf32>
    %123 = vector.broadcast %115 : vector<1x256xf32> to vector<16x256xf32>
    %124 = arith.subf %8, %123 : vector<16x256xf32>
    %125 = math.absf %124 : vector<16x256xf32>
    %cst_51 = arith.constant 1.000000e+00 : f32
    %126 = vector.broadcast %cst_51 : f32 to vector<16x256xf32>
    %127 = arith.subf %126, %125 : vector<16x256xf32>
    %cst_52 = arith.constant 0.000000e+00 : f32
    %128 = vector.broadcast %cst_52 : f32 to vector<16x256xf32>
    %129 = arith.maximumf %128, %127 : vector<16x256xf32>
    %130 = vector.shape_cast %122 : vector<16x256xf32> to vector<16x1x256xf32>
    %131 = vector.shape_cast %129 : vector<16x256xf32> to vector<1x16x256xf32>
    %132 = vector.broadcast %130 : vector<16x1x256xf32> to vector<16x16x256xf32>
    %133 = vector.broadcast %131 : vector<1x16x256xf32> to vector<16x16x256xf32>
    %134 = arith.mulf %132, %133 : vector<16x16x256xf32>
    %135 = vector.shape_cast %134 : vector<16x16x256xf32> to vector<256x256xf32>
    %136 = arith.truncf %135 : vector<256x256xf32> to vector<256x256xbf16>
    %c0_53 = arith.constant 0 : index
    %c768 = arith.constant 768 : index
    %137 = vector.load %arg9[%c0_53, %c768] : memref<256x2304xbf16, #tpu.memory_space<vmem>>, vector<256x256xbf16>
    tpu.vector_store %arg9[%c0_53, %c768], %136 {strides = array<i32>} : memref<256x2304xbf16, #tpu.memory_space<vmem>>, vector<256x256xbf16>,
    %c0_54 = arith.constant 0 : index
    %c8 = arith.constant 8 : index
    %c0_55 = arith.constant 0 : index
    %138 = vector.load %arg2[%c0_54, %c8, %c0_55] : memref<1x18x256xf32, #tpu.memory_space<vmem>>, vector<1x1x256xf32>
    %139 = vector.shape_cast %138 : vector<1x1x256xf32> to vector<1x256xf32>
    %c0_56 = arith.constant 0 : index
    %c9 = arith.constant 9 : index
    %c0_57 = arith.constant 0 : index
    %140 = vector.load %arg2[%c0_56, %c9, %c0_57] : memref<1x18x256xf32, #tpu.memory_space<vmem>>, vector<1x1x256xf32>
    %141 = vector.shape_cast %140 : vector<1x1x256xf32> to vector<1x256xf32>
    %cst_58 = arith.constant 0.000000e+00 : f32
    %142 = vector.broadcast %cst_58 : f32 to vector<1x256xf32>
    %143 = arith.addf %3, %142 : vector<1x256xf32>
    %144 = arith.addf %143, %139 : vector<1x256xf32>
    %cst_59 = arith.constant 0.000000e+00 : f32
    %145 = vector.broadcast %cst_59 : f32 to vector<1x256xf32>
    %146 = arith.addf %4, %145 : vector<1x256xf32>
    %147 = arith.addf %146, %141 : vector<1x256xf32>
    %148 = vector.broadcast %144 : vector<1x256xf32> to vector<16x256xf32>
    %149 = arith.subf %6, %148 : vector<16x256xf32>
    %150 = math.absf %149 : vector<16x256xf32>
    %cst_60 = arith.constant 1.000000e+00 : f32
    %151 = vector.broadcast %cst_60 : f32 to vector<16x256xf32>
    %152 = arith.subf %151, %150 : vector<16x256xf32>
    %cst_61 = arith.constant 0.000000e+00 : f32
    %153 = vector.broadcast %cst_61 : f32 to vector<16x256xf32>
    %154 = arith.maximumf %153, %152 : vector<16x256xf32>
    %155 = vector.broadcast %147 : vector<1x256xf32> to vector<16x256xf32>
    %156 = arith.subf %8, %155 : vector<16x256xf32>
    %157 = math.absf %156 : vector<16x256xf32>
    %cst_62 = arith.constant 1.000000e+00 : f32
    %158 = vector.broadcast %cst_62 : f32 to vector<16x256xf32>
    %159 = arith.subf %158, %157 : vector<16x256xf32>
    %cst_63 = arith.constant 0.000000e+00 : f32
    %160 = vector.broadcast %cst_63 : f32 to vector<16x256xf32>
    %161 = arith.maximumf %160, %159 : vector<16x256xf32>
    %162 = vector.shape_cast %154 : vector<16x256xf32> to vector<16x1x256xf32>
    %163 = vector.shape_cast %161 : vector<16x256xf32> to vector<1x16x256xf32>
    %164 = vector.broadcast %162 : vector<16x1x256xf32> to vector<16x16x256xf32>
    %165 = vector.broadcast %163 : vector<1x16x256xf32> to vector<16x16x256xf32>
    %166 = arith.mulf %164, %165 : vector<16x16x256xf32>
    %167 = vector.shape_cast %166 : vector<16x16x256xf32> to vector<256x256xf32>
    %168 = arith.truncf %167 : vector<256x256xf32> to vector<256x256xbf16>
    %c0_64 = arith.constant 0 : index
    %c1024 = arith.constant 1024 : index
    %169 = vector.load %arg9[%c0_64, %c1024] : memref<256x2304xbf16, #tpu.memory_space<vmem>>, vector<256x256xbf16>
    tpu.vector_store %arg9[%c0_64, %c1024], %168 {strides = array<i32>} : memref<256x2304xbf16, #tpu.memory_space<vmem>>, vector<256x256xbf16>,
    %c0_65 = arith.constant 0 : index
    %c10 = arith.constant 10 : index
    %c0_66 = arith.constant 0 : index
    %170 = vector.load %arg2[%c0_65, %c10, %c0_66] : memref<1x18x256xf32, #tpu.memory_space<vmem>>, vector<1x1x256xf32>
    %171 = vector.shape_cast %170 : vector<1x1x256xf32> to vector<1x256xf32>
    %c0_67 = arith.constant 0 : index
    %c11 = arith.constant 11 : index
    %c0_68 = arith.constant 0 : index
    %172 = vector.load %arg2[%c0_67, %c11, %c0_68] : memref<1x18x256xf32, #tpu.memory_space<vmem>>, vector<1x1x256xf32>
    %173 = vector.shape_cast %172 : vector<1x1x256xf32> to vector<1x256xf32>
    %cst_69 = arith.constant 0.000000e+00 : f32
    %174 = vector.broadcast %cst_69 : f32 to vector<1x256xf32>
    %175 = arith.addf %3, %174 : vector<1x256xf32>
    %176 = arith.addf %175, %171 : vector<1x256xf32>
    %cst_70 = arith.constant 1.000000e+00 : f32
    %177 = vector.broadcast %cst_70 : f32 to vector<1x256xf32>
    %178 = arith.addf %4, %177 : vector<1x256xf32>
    %179 = arith.addf %178, %173 : vector<1x256xf32>
    %180 = vector.broadcast %176 : vector<1x256xf32> to vector<16x256xf32>
    %181 = arith.subf %6, %180 : vector<16x256xf32>
    %182 = math.absf %181 : vector<16x256xf32>
    %cst_71 = arith.constant 1.000000e+00 : f32
    %183 = vector.broadcast %cst_71 : f32 to vector<16x256xf32>
    %184 = arith.subf %183, %182 : vector<16x256xf32>
    %cst_72 = arith.constant 0.000000e+00 : f32
    %185 = vector.broadcast %cst_72 : f32 to vector<16x256xf32>
    %186 = arith.maximumf %185, %184 : vector<16x256xf32>
    %187 = vector.broadcast %179 : vector<1x256xf32> to vector<16x256xf32>
    %188 = arith.subf %8, %187 : vector<16x256xf32>
    %189 = math.absf %188 : vector<16x256xf32>
    %cst_73 = arith.constant 1.000000e+00 : f32
    %190 = vector.broadcast %cst_73 : f32 to vector<16x256xf32>
    %191 = arith.subf %190, %189 : vector<16x256xf32>
    %cst_74 = arith.constant 0.000000e+00 : f32
    %192 = vector.broadcast %cst_74 : f32 to vector<16x256xf32>
    %193 = arith.maximumf %192, %191 : vector<16x256xf32>
    %194 = vector.shape_cast %186 : vector<16x256xf32> to vector<16x1x256xf32>
    %195 = vector.shape_cast %193 : vector<16x256xf32> to vector<1x16x256xf32>
    %196 = vector.broadcast %194 : vector<16x1x256xf32> to vector<16x16x256xf32>
    %197 = vector.broadcast %195 : vector<1x16x256xf32> to vector<16x16x256xf32>
    %198 = arith.mulf %196, %197 : vector<16x16x256xf32>
    %199 = vector.shape_cast %198 : vector<16x16x256xf32> to vector<256x256xf32>
    %200 = arith.truncf %199 : vector<256x256xf32> to vector<256x256xbf16>
    %c0_75 = arith.constant 0 : index
    %c1280 = arith.constant 1280 : index
    %201 = vector.load %arg9[%c0_75, %c1280] : memref<256x2304xbf16, #tpu.memory_space<vmem>>, vector<256x256xbf16>
    tpu.vector_store %arg9[%c0_75, %c1280], %200 {strides = array<i32>} : memref<256x2304xbf16, #tpu.memory_space<vmem>>, vector<256x256xbf16>,
    %c0_76 = arith.constant 0 : index
    %c12 = arith.constant 12 : index
    %c0_77 = arith.constant 0 : index
    %202 = vector.load %arg2[%c0_76, %c12, %c0_77] : memref<1x18x256xf32, #tpu.memory_space<vmem>>, vector<1x1x256xf32>
    %203 = vector.shape_cast %202 : vector<1x1x256xf32> to vector<1x256xf32>
    %c0_78 = arith.constant 0 : index
    %c13 = arith.constant 13 : index
    %c0_79 = arith.constant 0 : index
    %204 = vector.load %arg2[%c0_78, %c13, %c0_79] : memref<1x18x256xf32, #tpu.memory_space<vmem>>, vector<1x1x256xf32>
    %205 = vector.shape_cast %204 : vector<1x1x256xf32> to vector<1x256xf32>
    %cst_80 = arith.constant 1.000000e+00 : f32
    %206 = vector.broadcast %cst_80 : f32 to vector<1x256xf32>
    %207 = arith.addf %3, %206 : vector<1x256xf32>
    %208 = arith.addf %207, %203 : vector<1x256xf32>
    %cst_81 = arith.constant -1.000000e+00 : f32
    %209 = vector.broadcast %cst_81 : f32 to vector<1x256xf32>
    %210 = arith.addf %4, %209 : vector<1x256xf32>
    %211 = arith.addf %210, %205 : vector<1x256xf32>
    %212 = vector.broadcast %208 : vector<1x256xf32> to vector<16x256xf32>
    %213 = arith.subf %6, %212 : vector<16x256xf32>
    %214 = math.absf %213 : vector<16x256xf32>
    %cst_82 = arith.constant 1.000000e+00 : f32
    %215 = vector.broadcast %cst_82 : f32 to vector<16x256xf32>
    %216 = arith.subf %215, %214 : vector<16x256xf32>
    %cst_83 = arith.constant 0.000000e+00 : f32
    %217 = vector.broadcast %cst_83 : f32 to vector<16x256xf32>
    %218 = arith.maximumf %217, %216 : vector<16x256xf32>
    %219 = vector.broadcast %211 : vector<1x256xf32> to vector<16x256xf32>
    %220 = arith.subf %8, %219 : vector<16x256xf32>
    %221 = math.absf %220 : vector<16x256xf32>
    %cst_84 = arith.constant 1.000000e+00 : f32
    %222 = vector.broadcast %cst_84 : f32 to vector<16x256xf32>
    %223 = arith.subf %222, %221 : vector<16x256xf32>
    %cst_85 = arith.constant 0.000000e+00 : f32
    %224 = vector.broadcast %cst_85 : f32 to vector<16x256xf32>
    %225 = arith.maximumf %224, %223 : vector<16x256xf32>
    %226 = vector.shape_cast %218 : vector<16x256xf32> to vector<16x1x256xf32>
    %227 = vector.shape_cast %225 : vector<16x256xf32> to vector<1x16x256xf32>
    %228 = vector.broadcast %226 : vector<16x1x256xf32> to vector<16x16x256xf32>
    %229 = vector.broadcast %227 : vector<1x16x256xf32> to vector<16x16x256xf32>
    %230 = arith.mulf %228, %229 : vector<16x16x256xf32>
    %231 = vector.shape_cast %230 : vector<16x16x256xf32> to vector<256x256xf32>
    %232 = arith.truncf %231 : vector<256x256xf32> to vector<256x256xbf16>
    %c0_86 = arith.constant 0 : index
    %c1536 = arith.constant 1536 : index
    %233 = vector.load %arg9[%c0_86, %c1536] : memref<256x2304xbf16, #tpu.memory_space<vmem>>, vector<256x256xbf16>
    tpu.vector_store %arg9[%c0_86, %c1536], %232 {strides = array<i32>} : memref<256x2304xbf16, #tpu.memory_space<vmem>>, vector<256x256xbf16>,
    %c0_87 = arith.constant 0 : index
    %c14 = arith.constant 14 : index
    %c0_88 = arith.constant 0 : index
    %234 = vector.load %arg2[%c0_87, %c14, %c0_88] : memref<1x18x256xf32, #tpu.memory_space<vmem>>, vector<1x1x256xf32>
    %235 = vector.shape_cast %234 : vector<1x1x256xf32> to vector<1x256xf32>
    %c0_89 = arith.constant 0 : index
    %c15 = arith.constant 15 : index
    %c0_90 = arith.constant 0 : index
    %236 = vector.load %arg2[%c0_89, %c15, %c0_90] : memref<1x18x256xf32, #tpu.memory_space<vmem>>, vector<1x1x256xf32>
    %237 = vector.shape_cast %236 : vector<1x1x256xf32> to vector<1x256xf32>
    %cst_91 = arith.constant 1.000000e+00 : f32
    %238 = vector.broadcast %cst_91 : f32 to vector<1x256xf32>
    %239 = arith.addf %3, %238 : vector<1x256xf32>
    %240 = arith.addf %239, %235 : vector<1x256xf32>
    %cst_92 = arith.constant 0.000000e+00 : f32
    %241 = vector.broadcast %cst_92 : f32 to vector<1x256xf32>
    %242 = arith.addf %4, %241 : vector<1x256xf32>
    %243 = arith.addf %242, %237 : vector<1x256xf32>
    %244 = vector.broadcast %240 : vector<1x256xf32> to vector<16x256xf32>
    %245 = arith.subf %6, %244 : vector<16x256xf32>
    %246 = math.absf %245 : vector<16x256xf32>
    %cst_93 = arith.constant 1.000000e+00 : f32
    %247 = vector.broadcast %cst_93 : f32 to vector<16x256xf32>
    %248 = arith.subf %247, %246 : vector<16x256xf32>
    %cst_94 = arith.constant 0.000000e+00 : f32
    %249 = vector.broadcast %cst_94 : f32 to vector<16x256xf32>
    %250 = arith.maximumf %249, %248 : vector<16x256xf32>
    %251 = vector.broadcast %243 : vector<1x256xf32> to vector<16x256xf32>
    %252 = arith.subf %8, %251 : vector<16x256xf32>
    %253 = math.absf %252 : vector<16x256xf32>
    %cst_95 = arith.constant 1.000000e+00 : f32
    %254 = vector.broadcast %cst_95 : f32 to vector<16x256xf32>
    %255 = arith.subf %254, %253 : vector<16x256xf32>
    %cst_96 = arith.constant 0.000000e+00 : f32
    %256 = vector.broadcast %cst_96 : f32 to vector<16x256xf32>
    %257 = arith.maximumf %256, %255 : vector<16x256xf32>
    %258 = vector.shape_cast %250 : vector<16x256xf32> to vector<16x1x256xf32>
    %259 = vector.shape_cast %257 : vector<16x256xf32> to vector<1x16x256xf32>
    %260 = vector.broadcast %258 : vector<16x1x256xf32> to vector<16x16x256xf32>
    %261 = vector.broadcast %259 : vector<1x16x256xf32> to vector<16x16x256xf32>
    %262 = arith.mulf %260, %261 : vector<16x16x256xf32>
    %263 = vector.shape_cast %262 : vector<16x16x256xf32> to vector<256x256xf32>
    %264 = arith.truncf %263 : vector<256x256xf32> to vector<256x256xbf16>
    %c0_97 = arith.constant 0 : index
    %c1792 = arith.constant 1792 : index
    %265 = vector.load %arg9[%c0_97, %c1792] : memref<256x2304xbf16, #tpu.memory_space<vmem>>, vector<256x256xbf16>
    tpu.vector_store %arg9[%c0_97, %c1792], %264 {strides = array<i32>} : memref<256x2304xbf16, #tpu.memory_space<vmem>>, vector<256x256xbf16>,
    %c0_98 = arith.constant 0 : index
    %c16 = arith.constant 16 : index
    %c0_99 = arith.constant 0 : index
    %266 = vector.load %arg2[%c0_98, %c16, %c0_99] : memref<1x18x256xf32, #tpu.memory_space<vmem>>, vector<1x1x256xf32>
    %267 = vector.shape_cast %266 : vector<1x1x256xf32> to vector<1x256xf32>
    %c0_100 = arith.constant 0 : index
    %c17 = arith.constant 17 : index
    %c0_101 = arith.constant 0 : index
    %268 = vector.load %arg2[%c0_100, %c17, %c0_101] : memref<1x18x256xf32, #tpu.memory_space<vmem>>, vector<1x1x256xf32>
    %269 = vector.shape_cast %268 : vector<1x1x256xf32> to vector<1x256xf32>
    %cst_102 = arith.constant 1.000000e+00 : f32
    %270 = vector.broadcast %cst_102 : f32 to vector<1x256xf32>
    %271 = arith.addf %3, %270 : vector<1x256xf32>
    %272 = arith.addf %271, %267 : vector<1x256xf32>
    %cst_103 = arith.constant 1.000000e+00 : f32
    %273 = vector.broadcast %cst_103 : f32 to vector<1x256xf32>
    %274 = arith.addf %4, %273 : vector<1x256xf32>
    %275 = arith.addf %274, %269 : vector<1x256xf32>
    %276 = vector.broadcast %272 : vector<1x256xf32> to vector<16x256xf32>
    %277 = arith.subf %6, %276 : vector<16x256xf32>
    %278 = math.absf %277 : vector<16x256xf32>
    %cst_104 = arith.constant 1.000000e+00 : f32
    %279 = vector.broadcast %cst_104 : f32 to vector<16x256xf32>
    %280 = arith.subf %279, %278 : vector<16x256xf32>
    %cst_105 = arith.constant 0.000000e+00 : f32
    %281 = vector.broadcast %cst_105 : f32 to vector<16x256xf32>
    %282 = arith.maximumf %281, %280 : vector<16x256xf32>
    %283 = vector.broadcast %275 : vector<1x256xf32> to vector<16x256xf32>
    %284 = arith.subf %8, %283 : vector<16x256xf32>
    %285 = math.absf %284 : vector<16x256xf32>
    %cst_106 = arith.constant 1.000000e+00 : f32
    %286 = vector.broadcast %cst_106 : f32 to vector<16x256xf32>
    %287 = arith.subf %286, %285 : vector<16x256xf32>
    %cst_107 = arith.constant 0.000000e+00 : f32
    %288 = vector.broadcast %cst_107 : f32 to vector<16x256xf32>
    %289 = arith.maximumf %288, %287 : vector<16x256xf32>
    %290 = vector.shape_cast %282 : vector<16x256xf32> to vector<16x1x256xf32>
    %291 = vector.shape_cast %289 : vector<16x256xf32> to vector<1x16x256xf32>
    %292 = vector.broadcast %290 : vector<16x1x256xf32> to vector<16x16x256xf32>
    %293 = vector.broadcast %291 : vector<1x16x256xf32> to vector<16x16x256xf32>
    %294 = arith.mulf %292, %293 : vector<16x16x256xf32>
    %295 = vector.shape_cast %294 : vector<16x16x256xf32> to vector<256x256xf32>
    %296 = arith.truncf %295 : vector<256x256xf32> to vector<256x256xbf16>
    %c0_108 = arith.constant 0 : index
    %c2048 = arith.constant 2048 : index
    %297 = vector.load %arg9[%c0_108, %c2048] : memref<256x2304xbf16, #tpu.memory_space<vmem>>, vector<256x256xbf16>
    tpu.vector_store %arg9[%c0_108, %c2048], %296 {strides = array<i32>} : memref<256x2304xbf16, #tpu.memory_space<vmem>>, vector<256x256xbf16>,
    %c0_109 = arith.constant 0 : index
    %c0_110 = arith.constant 0 : index
    %298 = vector.load %arg9[%c0_109, %c0_110] : memref<256x2304xbf16, #tpu.memory_space<vmem>>, vector<256x2304xbf16>
    %cst_111 = arith.constant dense<0.000000e+00> : vector<4x2304xf32>
    %299 = tpu.matmul %1, %298, %cst_111 {dimension_numbers = #tpu.dot_dimension_numbers<[1], [0], [0], [1], [0, 0, 1, 1], [], []>} : vector<4x256xbf16>, vector<256x2304xbf16>, vector<4x2304xf32> -> vector<4x2304xf32>
    %300 = vector.extract_strided_slice %2 {offsets = [0, 0], sizes = [4, 1], strides = [1, 1]} : vector<4x9xf32> to vector<4x1xf32>
    %301 = vector.extract_strided_slice %299 {offsets = [0, 0], sizes = [4, 256], strides = [1, 1]} : vector<4x2304xf32> to vector<4x256xf32>
    %302 = vector.broadcast %300 : vector<4x1xf32> to vector<4x256xf32>
    %303 = arith.mulf %302, %301 : vector<4x256xf32>
    %304 = arith.addf %9, %303 : vector<4x256xf32>
    %305 = vector.extract_strided_slice %2 {offsets = [0, 1], sizes = [4, 1], strides = [1, 1]} : vector<4x9xf32> to vector<4x1xf32>
    %306 = vector.extract_strided_slice %299 {offsets = [0, 256], sizes = [4, 256], strides = [1, 1]} : vector<4x2304xf32> to vector<4x256xf32>
    %307 = vector.broadcast %305 : vector<4x1xf32> to vector<4x256xf32>
    %308 = arith.mulf %307, %306 : vector<4x256xf32>
    %309 = arith.addf %304, %308 : vector<4x256xf32>
    %310 = vector.extract_strided_slice %2 {offsets = [0, 2], sizes = [4, 1], strides = [1, 1]} : vector<4x9xf32> to vector<4x1xf32>
    %311 = vector.extract_strided_slice %299 {offsets = [0, 512], sizes = [4, 256], strides = [1, 1]} : vector<4x2304xf32> to vector<4x256xf32>
    %312 = vector.broadcast %310 : vector<4x1xf32> to vector<4x256xf32>
    %313 = arith.mulf %312, %311 : vector<4x256xf32>
    %314 = arith.addf %309, %313 : vector<4x256xf32>
    %315 = vector.extract_strided_slice %2 {offsets = [0, 3], sizes = [4, 1], strides = [1, 1]} : vector<4x9xf32> to vector<4x1xf32>
    %316 = vector.extract_strided_slice %299 {offsets = [0, 768], sizes = [4, 256], strides = [1, 1]} : vector<4x2304xf32> to vector<4x256xf32>
    %317 = vector.broadcast %315 : vector<4x1xf32> to vector<4x256xf32>
    %318 = arith.mulf %317, %316 : vector<4x256xf32>
    %319 = arith.addf %314, %318 : vector<4x256xf32>
    %320 = vector.extract_strided_slice %2 {offsets = [0, 4], sizes = [4, 1], strides = [1, 1]} : vector<4x9xf32> to vector<4x1xf32>
    %321 = vector.extract_strided_slice %299 {offsets = [0, 1024], sizes = [4, 256], strides = [1, 1]} : vector<4x2304xf32> to vector<4x256xf32>
    %322 = vector.broadcast %320 : vector<4x1xf32> to vector<4x256xf32>
    %323 = arith.mulf %322, %321 : vector<4x256xf32>
    %324 = arith.addf %319, %323 : vector<4x256xf32>
    %325 = vector.extract_strided_slice %2 {offsets = [0, 5], sizes = [4, 1], strides = [1, 1]} : vector<4x9xf32> to vector<4x1xf32>
    %326 = vector.extract_strided_slice %299 {offsets = [0, 1280], sizes = [4, 256], strides = [1, 1]} : vector<4x2304xf32> to vector<4x256xf32>
    %327 = vector.broadcast %325 : vector<4x1xf32> to vector<4x256xf32>
    %328 = arith.mulf %327, %326 : vector<4x256xf32>
    %329 = arith.addf %324, %328 : vector<4x256xf32>
    %330 = vector.extract_strided_slice %2 {offsets = [0, 6], sizes = [4, 1], strides = [1, 1]} : vector<4x9xf32> to vector<4x1xf32>
    %331 = vector.extract_strided_slice %299 {offsets = [0, 1536], sizes = [4, 256], strides = [1, 1]} : vector<4x2304xf32> to vector<4x256xf32>
    %332 = vector.broadcast %330 : vector<4x1xf32> to vector<4x256xf32>
    %333 = arith.mulf %332, %331 : vector<4x256xf32>
    %334 = arith.addf %329, %333 : vector<4x256xf32>
    %335 = vector.extract_strided_slice %2 {offsets = [0, 7], sizes = [4, 1], strides = [1, 1]} : vector<4x9xf32> to vector<4x1xf32>
    %336 = vector.extract_strided_slice %299 {offsets = [0, 1792], sizes = [4, 256], strides = [1, 1]} : vector<4x2304xf32> to vector<4x256xf32>
    %337 = vector.broadcast %335 : vector<4x1xf32> to vector<4x256xf32>
    %338 = arith.mulf %337, %336 : vector<4x256xf32>
    %339 = arith.addf %334, %338 : vector<4x256xf32>
    %340 = vector.extract_strided_slice %2 {offsets = [0, 8], sizes = [4, 1], strides = [1, 1]} : vector<4x9xf32> to vector<4x1xf32>
    %341 = vector.extract_strided_slice %299 {offsets = [0, 2048], sizes = [4, 256], strides = [1, 1]} : vector<4x2304xf32> to vector<4x256xf32>
    %342 = vector.broadcast %340 : vector<4x1xf32> to vector<4x256xf32>
    %343 = arith.mulf %342, %341 : vector<4x256xf32>
    %344 = arith.addf %339, %343 : vector<4x256xf32>
    %c0_112 = arith.constant 0 : index
    %c0_113 = arith.constant 0 : index
    %345 = vector.load %arg6[%c0_112, %c0_113] : memref<4x4xf32, #tpu.memory_space<vmem>>, vector<4x4xf32>
    %cst_114 = arith.constant dense<0.000000e+00> : vector<4x256xf32>
    %346 = tpu.matmul %345, %344, %cst_114 {dimension_numbers = #tpu.dot_dimension_numbers<[1], [0], [0], [1], [0, 0, 1, 1], [], []>} : vector<4x4xf32>, vector<4x256xf32>, vector<4x256xf32> -> vector<4x256xf32>
    %c0_115 = arith.constant 0 : index
    %c0_116 = arith.constant 0 : index
    %347 = vector.load %arg7[%c0_115, %c0_116] : memref<4x1xf32, #tpu.memory_space<vmem>>, vector<4x1xf32>
    %348 = vector.broadcast %347 : vector<4x1xf32> to vector<4x256xf32>
    %349 = arith.addf %346, %348 : vector<4x256xf32>
    %c0_117 = arith.constant 0 : index
    %c0_118 = arith.constant 0 : index
    %c0_119 = arith.constant 0 : index
    %350 = vector.load %arg8[%c0_117, %c0_118, %c0_119] : memref<1x4x256xf32, #tpu.memory_space<vmem>>, vector<1x4x256xf32>
    %351 = vector.shape_cast %350 : vector<1x4x256xf32> to vector<4x256xf32>
    %352 = vector.shape_cast %349 : vector<4x256xf32> to vector<1x4x256xf32>
    tpu.vector_store %arg8[%c0_117, %c0_118, %c0_119], %352 {strides = array<i32>} : memref<1x4x256xf32, #tpu.memory_space<vmem>>, vector<1x4x256xf32>,
    return
  }
  func.func @transform_0(%arg0: i32, %arg1: i32) -> (i32, i32, i32) {
    %c0_i32 = arith.constant 0 : i32
    %c0_i32_0 = arith.constant 0 : i32
    return %arg0, %c0_i32, %arg1 : i32, i32, i32
  }
  func.func @transform_1(%arg0: i32, %arg1: i32) -> (i32, i32, i32) {
    %c0_i32 = arith.constant 0 : i32
    %c0_i32_0 = arith.constant 0 : i32
    %c0_i32_1 = arith.constant 0 : i32
    return %arg0, %c0_i32, %c0_i32_0 : i32, i32, i32
  }
  func.func @transform_2(%arg0: i32, %arg1: i32) -> (i32, i32) {
    %c0_i32 = arith.constant 0 : i32
    %c0_i32_0 = arith.constant 0 : i32
    return %c0_i32, %arg1 : i32, i32
  }
  func.func @transform_3(%arg0: i32, %arg1: i32) -> (i32, i32) {
    %c0_i32 = arith.constant 0 : i32
    %c0_i32_0 = arith.constant 0 : i32
    %c0_i32_1 = arith.constant 0 : i32
    return %c0_i32, %c0_i32_0 : i32, i32
  }
  func.func @transform_4(%arg0: i32, %arg1: i32) -> (i32, i32) {
    %c0_i32 = arith.constant 0 : i32
    %c0_i32_0 = arith.constant 0 : i32
    %c0_i32_1 = arith.constant 0 : i32
    return %c0_i32, %c0_i32_0 : i32, i32
  }
  func.func @transform_5(%arg0: i32, %arg1: i32) -> (i32, i32) {
    %c0_i32 = arith.constant 0 : i32
    %c0_i32_0 = arith.constant 0 : i32
    %c0_i32_1 = arith.constant 0 : i32
    return %c0_i32, %c0_i32_0 : i32, i32
  }
  func.func @transform_6(%arg0: i32, %arg1: i32) -> (i32, i32, i32) {
    %c0_i32 = arith.constant 0 : i32
    %c0_i32_0 = arith.constant 0 : i32
    return %arg0, %c0_i32, %arg1 : i32, i32, i32
  }
}

</mosaic_0001>

<llo_original>
// kernel: tpu_custom_call.1
$region0: #{tpu_custom_call.1}
  #allocation0 [shape = 'u32[]', space=smem, size = 0x4, offset = 0x4, fixed_abs, tag = 'smem constant byte address 0x4 - core index']
  #allocation1 [shape = 'u32[144,128]{1,0:T(1,128)}', space=vmem, size = 0x12000, scoped, tag = 'internal scratch']
  #allocation2 [shape = 'bf16[256,2304]{1,0:T(16,128)(2,1)}', space=vmem, size = 0x120000, scoped, tag = 'scratch operand']
  %s0 = inlined_call_operand.vmem [shape: f32[2,18,256], index: 0, kind: input, shape index: {}]
  %s1 = inlined_call_operand.vmem [shape: bf16[2,4,256], index: 1, kind: input, shape index: {}]
  %s2 = inlined_call_operand.vmem [shape: f32[2,256], index: 2, kind: input, shape index: {}]
  %s3 = inlined_call_operand.vmem [shape: f32[4,9], index: 3, kind: input, shape index: {}]
  %s4 = inlined_call_operand.vmem [shape: f32[4,4], index: 4, kind: input, shape index: {}]
  %s5 = inlined_call_operand.vmem [shape: f32[4,1], index: 5, kind: input, shape index: {}]
  %s6 = inlined_call_operand.hbm [shape: f32[2,4,256], index: 6, kind: output, shape index: {}]
  %s7 = sld [smem:[#allocation0]]
  $region57: #{tpu_custom_call.1} parent=0
    _
  %s9 = ssub.s32 1, %s7
  %s10 = scalar_select 0, %s9, %s7
  $region1: #{tpu_custom_call.1} parent=0
    #allocation3 [shape = 'u8[8192]{0}', space=vmem, size = 0x2000, scoped, tag = 'output window, operand 0']
    #allocation4 [shape = 's32[2]{0}', space=sflag, size = 0x8, scoped, tag = 'scoped memory for tpu_custom_call.1']
    %11 = vsyncpa [#allocation4], 0
    %s12 = scalar_lea.sflag [#allocation4], 1
    %13 = vsyncpa %s12, 0
    loop: start=0, step=1, limit=4
    $region2: #{tpu_custom_call.1} parent=1 // loop_pre_header
      _
    $region3: #{tpu_custom_call.1} parent=1 // loop_header
      %s15 = sphi 0, %s19
      %p16 = scmp.ge.s32.totalorder %s15, 4
      %s22 = sphi 0, %s34
      %s23 = sphi 0, %s30
      %s24 = sphi 0, %s22
      %s25 = sphi 0, %s23
      %s26 = sphi 0, %s24
      %s27 = sphi 0, %s25
      %s39 = sphi 0, %s41
      %s42 = sphi 0, %s39
      %s43 = sphi 0, %s42
      %s59 = sphi 0, %s43
      %s65 = sphi 0, %s67
      %s68 = sphi 0, %s65
      %s69 = sphi 0, %s68
      %s85 = sphi 0, %s69
      %s91 = sphi 0, %s93
      %s94 = sphi 0, %s91
      %s95 = sphi 0, %s94
      %s111 = sphi 0, %s95
      %s115 = sphi 0, %s115
      %s117 = sphi 0, %s115
      %s118 = sphi 0, %s117
      %s132 = sphi 0, %s118
      %s136 = sphi 0, %s136
      %s138 = sphi 0, %s136
      %s139 = sphi 0, %s138
      %s153 = sphi 0, %s139
      %s157 = sphi 0, %s157
      %s159 = sphi 0, %s157
      %s160 = sphi 0, %s159
      %s174 = sphi 0, %s160
      %s182 = sphi 0, %s184
      %s185 = sphi 0, %s182
      %s186 = sphi 0, %s185
      %s202 = sphi 0, %s186
    $region4: #{tpu_custom_call.1} parent=1 // loop_header_branch
      %18 = sbr.rel (%p16) target = $region8
    $region5: #{tpu_custom_call.1} parent=1 // loop_body
      %s20 = ssub.s32 %s15, 1
      %s21 = ssub.s32 %s15, 2
      %s28 = sadd.s32 1, %s23
      %p29 = scmp.ge.s32.totalorder %s28, 1
      %s30 = scalar_select %p29, 0, %s28
      %s31 = sadd.s32 1, %s22
      %s32 = scalar_select %p29, %s31, %s22
      %p33 = scmp.ge.s32.totalorder %s32, 2
      %s34 = scalar_select %p33, 0, %s32
      %s35 = ssub.s32 %s22, %s34
      %s36 = ssub.s32 %s23, %s30
      %s37 = sor.u32 %s35, %s36
      %p38 = scmp.eq.s32.totalorder %s37, 0
      %s40 = sadd.s32 %s39, 1
      %s41 = scalar_select %p38, %s39, %s40
      %p44 = pneg %p38
      %p45 = scmp.eq.s32.totalorder %s15, 1
      %p46 = por %p44, %p45
      %p47 = scmp.ne.s32.totalorder %s39, %s42
      %p48 = scmp.eq.s32.totalorder %s15, 0
      %p49 = por %p47, %p48
      %p50 = scmp.ne.s32.totalorder %s39, %s42
      %p51 = scmp.eq.s32.totalorder %s20, 1
      %p52 = por %p50, %p51
      %p53 = scmp.ne.s32.totalorder %s42, %s43
      %p54 = scmp.eq.s32.totalorder %s20, 0
      %p55 = por %p53, %p54
      %p56 = scmp.ne.s32.totalorder %s42, %s43
      %p57 = scmp.eq.s32.totalorder %s21, 1
      %p58 = por %p56, %p57
      %p60 = scmp.ne.s32.totalorder %s43, %s59
      %p61 = scmp.eq.s32.totalorder %s21, 0
      %p62 = por %p60, %p61
      %s63 = ssub.s32 %s22, %s34
      %p64 = scmp.eq.s32.totalorder %s63, 0
      %s66 = sadd.s32 %s65, 1
      %s67 = scalar_select %p64, %s65, %s66
      %p70 = pneg %p64
      %p71 = scmp.eq.s32.totalorder %s15, 1
      %p72 = por %p70, %p71
      %p73 = scmp.ne.s32.totalorder %s65, %s68
      %p74 = scmp.eq.s32.totalorder %s15, 0
      %p75 = por %p73, %p74
      %p76 = scmp.ne.s32.totalorder %s65, %s68
      %p77 = scmp.eq.s32.totalorder %s20, 1
      %p78 = por %p76, %p77
      %p79 = scmp.ne.s32.totalorder %s68, %s69
      %p80 = scmp.eq.s32.totalorder %s20, 0
      %p81 = por %p79, %p80
      %p82 = scmp.ne.s32.totalorder %s68, %s69
      %p83 = scmp.eq.s32.totalorder %s21, 1
      %p84 = por %p82, %p83
      %p86 = scmp.ne.s32.totalorder %s69, %s85
      %p87 = scmp.eq.s32.totalorder %s21, 0
      %p88 = por %p86, %p87
      %s89 = ssub.s32 %s23, %s30
      %p90 = scmp.eq.s32.totalorder %s89, 0
      %s92 = sadd.s32 %s91, 1
      %s93 = scalar_select %p90, %s91, %s92
      %p96 = pneg %p90
      %p97 = scmp.eq.s32.totalorder %s15, 1
      %p98 = por %p96, %p97
      %p99 = scmp.ne.s32.totalorder %s91, %s94
      %p100 = scmp.eq.s32.totalorder %s15, 0
      %p101 = por %p99, %p100
      %p102 = scmp.ne.s32.totalorder %s91, %s94
      %p103 = scmp.eq.s32.totalorder %s20, 1
      %p104 = por %p102, %p103
      %p105 = scmp.ne.s32.totalorder %s94, %s95
      %p106 = scmp.eq.s32.totalorder %s20, 0
      %p107 = por %p105, %p106
      %p108 = scmp.ne.s32.totalorder %s94, %s95
      %p109 = scmp.eq.s32.totalorder %s21, 1
      %p110 = por %p108, %p109
      %p112 = scmp.ne.s32.totalorder %s95, %s111
      %p113 = scmp.eq.s32.totalorder %s21, 0
      %p114 = por %p112, %p113
      %s116 = sadd.s32 %s115, 1
      %p119 = scmp.eq.s32.totalorder %s15, 1
      %p120 = scmp.ne.s32.totalorder %s115, %s117
      %p121 = scmp.eq.s32.totalorder %s15, 0
      %p122 = por %p120, %p121
      %p123 = scmp.ne.s32.totalorder %s115, %s117
      %p124 = scmp.eq.s32.totalorder %s20, 1
      %p125 = por %p123, %p124
      %p126 = scmp.ne.s32.totalorder %s117, %s118
      %p127 = scmp.eq.s32.totalorder %s20, 0
      %p128 = por %p126, %p127
      %p129 = scmp.ne.s32.totalorder %s117, %s118
      %p130 = scmp.eq.s32.totalorder %s21, 1
      %p131 = por %p129, %p130
      %p133 = scmp.ne.s32.totalorder %s118, %s132
      %p134 = scmp.eq.s32.totalorder %s21, 0
      %p135 = por %p133, %p134
      %s137 = sadd.s32 %s136, 1
      %p140 = scmp.eq.s32.totalorder %s15, 1
      %p141 = scmp.ne.s32.totalorder %s136, %s138
      %p142 = scmp.eq.s32.totalorder %s15, 0
      %p143 = por %p141, %p142
      %p144 = scmp.ne.s32.totalorder %s136, %s138
      %p145 = scmp.eq.s32.totalorder %s20, 1
      %p146 = por %p144, %p145
      %p147 = scmp.ne.s32.totalorder %s138, %s139
      %p148 = scmp.eq.s32.totalorder %s20, 0
      %p149 = por %p147, %p148
      %p150 = scmp.ne.s32.totalorder %s138, %s139
      %p151 = scmp.eq.s32.totalorder %s21, 1
      %p152 = por %p150, %p151
      %p154 = scmp.ne.s32.totalorder %s139, %s153
      %p155 = scmp.eq.s32.totalorder %s21, 0
      %p156 = por %p154, %p155
      %s158 = sadd.s32 %s157, 1
      %p161 = scmp.eq.s32.totalorder %s15, 1
      %p162 = scmp.ne.s32.totalorder %s157, %s159
      %p163 = scmp.eq.s32.totalorder %s15, 0
      %p164 = por %p162, %p163
      %p165 = scmp.ne.s32.totalorder %s157, %s159
      %p166 = scmp.eq.s32.totalorder %s20, 1
      %p167 = por %p165, %p166
      %p168 = scmp.ne.s32.totalorder %s159, %s160
      %p169 = scmp.eq.s32.totalorder %s20, 0
      %p170 = por %p168, %p169
      %p171 = scmp.ne.s32.totalorder %s159, %s160
      %p172 = scmp.eq.s32.totalorder %s21, 1
      %p173 = por %p171, %p172
      %p175 = scmp.ne.s32.totalorder %s160, %s174
      %p176 = scmp.eq.s32.totalorder %s21, 0
      %p177 = por %p175, %p176
      %s178 = ssub.s32 %s22, %s34
      %s179 = ssub.s32 %s23, %s30
      %s180 = sor.u32 %s178, %s179
      %p181 = scmp.eq.s32.totalorder %s180, 0
      %s183 = sadd.s32 %s182, 1
      %s184 = scalar_select %p181, %s182, %s183
      %p187 = pneg %p181
      %p188 = scmp.eq.s32.totalorder %s15, 1
      %p189 = por %p187, %p188
      %p190 = scmp.ne.s32.totalorder %s182, %s185
      %p191 = scmp.eq.s32.totalorder %s15, 0
      %p192 = por %p190, %p191
      %p193 = scmp.ne.s32.totalorder %s182, %s185
      %p194 = scmp.eq.s32.totalorder %s20, 1
      %p195 = por %p193, %p194
      %p196 = scmp.ne.s32.totalorder %s185, %s186
      %p197 = scmp.eq.s32.totalorder %s20, 0
      %p198 = por %p196, %p197
      %p199 = scmp.ne.s32.totalorder %s185, %s186
      %p200 = scmp.eq.s32.totalorder %s21, 1
      %p201 = por %p199, %p200
      %p203 = scmp.ne.s32.totalorder %s186, %s202
      %p204 = scmp.eq.s32.totalorder %s21, 0
      %p205 = por %p203, %p204
      %p206 = scmp.le.s32.totalorder 1, %s15
      %p207 = scmp.lt.s32.totalorder %s15, 3
      %p208 = pnand %p206, %p207
      %p209 = pneg %p208
      // Predicated region
      $region9: #{tpu_custom_call.1} parent=5 // pred_check
        _
      $region10: #{tpu_custom_call.1} parent=5 // pred_check_branch
        %211 = sbr.rel (%p208) target = $region12
      $region11: #{tpu_custom_call.1} parent=5 // pred_region
        %s212 = ssub.s32 %s15, 1
        // Predicated region
        $region13: #{tpu_custom_call.1} parent=11 // pred_check
          %p213 = pneg %p107
        $region14: #{tpu_custom_call.1} parent=11 // pred_check_branch
          %215 = sbr.rel (%p213) target = $region16
        $region15: #{tpu_custom_call.1} parent=11 // pred_region
          %s216 = smul.u32 2, %s25
          %p217 = scmp.lt.s32.totalorder %s216, 1
          %s218 = scalar_select %p217, %s216, 1
          %s219 = smul.addr %s218, 2
          %s220 = scalar_lea.vmem %s2, %s219
          %s221 = smul.u32 2, %s25
        $region16: #{tpu_custom_call.1} parent=11 // pred_fallthru
          _
        // Predicated region
        $region17: #{tpu_custom_call.1} parent=11 // pred_check
          %p222 = pneg %p128
        $region18: #{tpu_custom_call.1} parent=11 // pred_check_branch
          %224 = sbr.rel (%p222) target = $region20
        $region19: #{tpu_custom_call.1} parent=11 // pred_region
          _
        $region20: #{tpu_custom_call.1} parent=11 // pred_fallthru
          _
        // Predicated region
        $region21: #{tpu_custom_call.1} parent=11 // pred_check
          %p225 = pneg %p149
        $region22: #{tpu_custom_call.1} parent=11 // pred_check_branch
          %227 = sbr.rel (%p225) target = $region24
        $region23: #{tpu_custom_call.1} parent=11 // pred_region
          _
        $region24: #{tpu_custom_call.1} parent=11 // pred_fallthru
          _
        // Predicated region
        $region25: #{tpu_custom_call.1} parent=11 // pred_check
          %p228 = pneg %p170
        $region26: #{tpu_custom_call.1} parent=11 // pred_check_branch
          %230 = sbr.rel (%p228) target = $region28
        $region27: #{tpu_custom_call.1} parent=11 // pred_region
          _
        $region28: #{tpu_custom_call.1} parent=11 // pred_fallthru
          _
      $region12: #{tpu_custom_call.1} parent=5 // pred_fallthru
        _
      %p231 = scmp.lt.s32.totalorder %s15, 2
      // Predicated region
      $region29: #{tpu_custom_call.1} parent=5 // pred_check
        %p232 = pneg %p231
      $region30: #{tpu_custom_call.1} parent=5 // pred_check_branch
        %234 = sbr.rel (%p232) target = $region32
      $region31: #{tpu_custom_call.1} parent=5 // pred_region
        // Predicated region
        $region33: #{tpu_custom_call.1} parent=31 // pred_check
          %p235 = pneg %p49
        $region34: #{tpu_custom_call.1} parent=31 // pred_check_branch
          %237 = sbr.rel (%p235) target = $region36
        $region35: #{tpu_custom_call.1} parent=31 // pred_region
          %s238 = smul.u32 2, %s23
          %p239 = scmp.lt.s32.totalorder %s22, 1
          %s240 = scalar_select %p239, %s22, 1
          %p241 = scmp.lt.s32.totalorder %s238, 1
          %s242 = scalar_select %p241, %s238, 1
          %s243 = smul.addr %s240, 6
          %s244 = sadd.s32 %s242, %s243
          %s245 = smul.addr %s244, 8
          %s246 = scalar_lea.vmem %s0, %s245
          %s247 = smul.u32 2, %s23
        $region36: #{tpu_custom_call.1} parent=31 // pred_fallthru
          _
        // Predicated region
        $region37: #{tpu_custom_call.1} parent=31 // pred_check
          %p248 = pneg %p75
        $region38: #{tpu_custom_call.1} parent=31 // pred_check_branch
          %250 = sbr.rel (%p248) target = $region40
        $region39: #{tpu_custom_call.1} parent=31 // pred_region
          %p251 = scmp.lt.s32.totalorder %s22, 1
          %s252 = scalar_select %p251, %s22, 1
          %s253 = smul.addr %s252, 2
          %s254 = smul.addr %s253, 2
          %s255 = scalar_lea.vmem %s1, %s254
        $region40: #{tpu_custom_call.1} parent=31 // pred_fallthru
          _
      $region32: #{tpu_custom_call.1} parent=5 // pred_fallthru
        _
      %p256 = scmp.le.s32.totalorder 1, %s15
      %p257 = scmp.lt.s32.totalorder %s15, 3
      %p258 = pnand %p256, %p257
      %p259 = pneg %p258
      // Predicated region
      $region41: #{tpu_custom_call.1} parent=5 // pred_check
        _
      $region42: #{tpu_custom_call.1} parent=5 // pred_check_branch
        %261 = sbr.rel (%p258) target = $region44
      $region43: #{tpu_custom_call.1} parent=5 // pred_region
        %s262 = ssub.s32 %s15, 1
        %s263 = smul.u32 2, %s25
        %p264 = scmp.lt.s32.totalorder %s24, 1
        %s265 = scalar_select %p264, %s24, 1
        %p266 = scmp.lt.s32.totalorder %s263, 1
        %s267 = scalar_select %p266, %s263, 1
        %s268 = smul.addr %s265, 6
        %s269 = sadd.s32 %s267, %s268
        %s270 = smul.addr %s269, 8
        %s271 = scalar_lea.vmem %s0, %s270
        %p272 = pneg %p55
        %p273 = pneg %p52
        %p274 = scmp.lt.s32.totalorder %s24, 1
        %s275 = scalar_select %p274, %s24, 1
        %s276 = smul.addr %s275, 2
        %s277 = smul.addr %s276, 2
        %s278 = scalar_lea.vmem %s1, %s277
        %p279 = pneg %p81
        %p280 = pneg %p78
        %s281 = smul.u32 2, %s25
        %p282 = scmp.lt.s32.totalorder %s281, 1
        %s283 = scalar_select %p282, %s281, 1
        %s284 = smul.addr %s283, 2
        %s285 = scalar_lea.vmem %s2, %s284
        %p286 = pneg %p107
        %p287 = pneg %p104
        %p288 = pneg %p128
        %p289 = pneg %p125
        %p290 = pneg %p149
        %p291 = pneg %p146
        %p292 = pneg %p170
        %p293 = pneg %p167
        %p294 = pneg %p198
        %p295 = pneg %p195
        %s296 = sand.u32 %s185, 1
        %s297 = scalar_lea.sflag [#allocation4], %s296
        %s298 = sand.u32 %s185, 1
        %s299 = smul.addr %s298, 8
        %s300 = scalar_lea.vmem [#allocation3], %s299
        %s301 = smul.u32 2, %s25
        %p302 = scmp.lt.s32.totalorder %s24, 1
        %s303 = scalar_select %p302, %s24, 1
        %p304 = scmp.lt.s32.totalorder %s301, 1
        %s305 = scalar_select %p304, %s301, 1
        %s306 = smul.addr %s303, 6
        %s307 = sadd.s32 %s305, %s306
        %s308 = smul.addr %s307, 8
        %s309 = scalar_lea.vmem %s0, %s308
        %s310 = smul.u32 2, %s25
        %p311 = scmp.lt.s32.totalorder %s24, 1
        %s312 = scalar_select %p311, %s24, 1
        %s313 = smul.addr %s312, 2
        %s314 = smul.addr %s313, 2
        %s315 = scalar_lea.vmem %s1, %s314
        %s316 = smul.u32 2, %s25
        %p317 = scmp.lt.s32.totalorder %s316, 1
        %s318 = scalar_select %p317, %s316, 1
        %s319 = smul.addr %s318, 2
        %s320 = scalar_lea.vmem %s2, %s319
        %s321 = smul.u32 2, %s25
        %s322 = smul.u32 2, %s25
        %v323 = vld [vmem:[%s315] sm:$0xf]
        %v324 = vld [vmem:[%s3] sm:$0xf]
        %v325 = vld [vmem:[%s320] ss:$2 sm:$0x3]
        %s326 = scalar_lea.vmem %s320, 1
        %v327 = vld [vmem:[%s326] ss:$2 sm:$0x3]
        %v328 = vlaneseq
        %v329 = vshrl.u32 %v328, 7
        %v330 = vadd.s32 %v329, 8
        %v331 = vcvt.s32.f32 %v329
        %v332 = vcvt.s32.f32 %v330
        %v333 = vld [vmem:[%s309] ss:$8 sm:$0x3]
        %s334 = scalar_lea.vmem %s309, 1
        %v335 = vld [vmem:[%s334] ss:$8 sm:$0x3]
        %v336 = vadd.f32 %v325, -1.0
        %v337 = vadd.f32 %v336, %v333
        %v338 = vadd.f32 %v327, -1.0
        %v339 = vadd.f32 %v338, %v335
        %v341 = vlaneseq
        %v342 = vshrl.u32 %v341, 7
        %v343 = vsub.s32 0, %v342
        %v344 = vrot.slane %v337, %v343
        %v345 = vlaneseq
        %v346 = vshrl.u32 %v345, 7
        %v347 = vsub.s32 1, %v346
        %v348 = vrot.slane %v337, %v347
        %v351 = vsub.f32 %v331, %v344
        %v352 = vsub.f32 %v331, %v348
        %v353 = vsub.f32 %v332, %v344
        %v354 = vsub.f32 %v332, %v348
        %v355 = vand.u32 2147483647, %v351
        %v356 = vand.u32 2147483647, %v352
        %v357 = vand.u32 2147483647, %v353
        %v358 = vand.u32 2147483647, %v354
        %v359 = vsub.f32 1.0, %v355
        %v360 = vsub.f32 1.0, %v356
        %v361 = vsub.f32 1.0, %v357
        %v362 = vsub.f32 1.0, %v358
        %v363 = vmax.f32 %v359, 0.0
        %v364 = vmax.f32 %v360, 0.0
        %v365 = vmax.f32 %v361, 0.0
        %v366 = vmax.f32 %v362, 0.0
        %v368 = vlaneseq
        %v369 = vshrl.u32 %v368, 7
        %v370 = vsub.s32 0, %v369
        %v371 = vrot.slane %v339, %v370
        %v372 = vlaneseq
        %v373 = vshrl.u32 %v372, 7
        %v374 = vsub.s32 1, %v373
        %v375 = vrot.slane %v339, %v374
        %v378 = vsub.f32 %v331, %v371
        %v379 = vsub.f32 %v331, %v375
        %v380 = vsub.f32 %v332, %v371
        %v381 = vsub.f32 %v332, %v375
        %v382 = vand.u32 2147483647, %v378
        %v383 = vand.u32 2147483647, %v379
        %v384 = vand.u32 2147483647, %v380
        %v385 = vand.u32 2147483647, %v381
        %v386 = vsub.f32 1.0, %v382
        %v387 = vsub.f32 1.0, %v383
        %v388 = vsub.f32 1.0, %v384
        %v389 = vsub.f32 1.0, %v385
        %v390 = vmax.f32 %v386, 0.0
        %v391 = vmax.f32 %v387, 0.0
        %v392 = vmax.f32 %v388, 0.0
        %v393 = vmax.f32 %v389, 0.0
        %v398 = vcombine.low %v363, %v364
        %v399 = vcombine.high %v363, %v364
        %v401 = vunpack.c.l.s4 1966171168
        %v402 = vunpack.c.0.s8 %v401
        %v403 = vlaneseq
        %v404 = vshrl.u32 %v403, 7
        %v405 = vsub.s32 %v402, %v404
        %v406 = vrot.slane %v398, %v405
        %v408 = vunpack.c.l.s4 1966171168
        %v409 = vunpack.c.0.s8 %v408
        %v410 = vlaneseq
        %v411 = vshrl.u32 %v410, 7
        %v412 = vsub.s32 %v409, %v411
        %v413 = vrot.slane %v399, %v412
        %v414 = vcombine.high %v406, %v406
        %v415 = vcombine.high %v413, %v413
        %v417 = vunpack.c.l.s4 1966171168
        %v418 = vunpack.c.0.s8 %v417
        %v419 = vlaneseq
        %v420 = vshrl.u32 %v419, 7
        %v421 = vsub.s32 %v418, %v420
        %v422 = vrot.slane %v406, %v421
        %v424 = vunpack.c.l.s4 1966171168
        %v425 = vunpack.c.0.s8 %v424
        %v426 = vlaneseq
        %v427 = vshrl.u32 %v426, 7
        %v428 = vsub.s32 %v425, %v427
        %v429 = vrot.slane %v413, %v428
        %v431 = vunpack.c.l.s4 1966171168
        %v432 = vunpack.c.0.s8 %v431
        %v433 = vlaneseq
        %v434 = vshrl.u32 %v433, 7
        %v435 = vsub.s32 %v432, %v434
        %v436 = vrot.slane %v414, %v435
        %v438 = vunpack.c.l.s4 1966171168
        %v439 = vunpack.c.0.s8 %v438
        %v440 = vlaneseq
        %v441 = vshrl.u32 %v440, 7
        %v442 = vsub.s32 %v439, %v441
        %v443 = vrot.slane %v415, %v442
        %v444 = vcombine.high %v422, %v422
        %v445 = vcombine.high %v429, %v429
        %v446 = vcombine.high %v436, %v436
        %v447 = vcombine.high %v443, %v443
        %v448 = vcombine.low %v365, %v366
        %v449 = vcombine.high %v365, %v366
        %v451 = vunpack.c.l.s4 1966171168
        %v452 = vunpack.c.0.s8 %v451
        %v453 = vlaneseq
        %v454 = vshrl.u32 %v453, 7
        %v455 = vsub.s32 %v452, %v454
        %v456 = vrot.slane %v448, %v455
        %v458 = vunpack.c.l.s4 1966171168
        %v459 = vunpack.c.0.s8 %v458
        %v460 = vlaneseq
        %v461 = vshrl.u32 %v460, 7
        %v462 = vsub.s32 %v459, %v461
        %v463 = vrot.slane %v449, %v462
        %v464 = vcombine.high %v456, %v456
        %v465 = vcombine.high %v463, %v463
        %v467 = vunpack.c.l.s4 1966171168
        %v468 = vunpack.c.0.s8 %v467
        %v469 = vlaneseq
        %v470 = vshrl.u32 %v469, 7
        %v471 = vsub.s32 %v468, %v470
        %v472 = vrot.slane %v456, %v471
        %v474 = vunpack.c.l.s4 1966171168
        %v475 = vunpack.c.0.s8 %v474
        %v476 = vlaneseq
        %v477 = vshrl.u32 %v476, 7
        %v478 = vsub.s32 %v475, %v477
        %v479 = vrot.slane %v463, %v478
        %v481 = vunpack.c.l.s4 1966171168
        %v482 = vunpack.c.0.s8 %v481
        %v483 = vlaneseq
        %v484 = vshrl.u32 %v483, 7
        %v485 = vsub.s32 %v482, %v484
        %v486 = vrot.slane %v464, %v485
        %v488 = vunpack.c.l.s4 1966171168
        %v489 = vunpack.c.0.s8 %v488
        %v490 = vlaneseq
        %v491 = vshrl.u32 %v490, 7
        %v492 = vsub.s32 %v489, %v491
        %v493 = vrot.slane %v465, %v492
        %v494 = vcombine.high %v472, %v472
        %v495 = vcombine.high %v479, %v479
        %v496 = vcombine.high %v486, %v486
        %v497 = vcombine.high %v493, %v493
        %v498 = vlaneseq
        %v499 = vshrl.u32 %v498, 7
        %v500 = vsub.s32 0, %v499
        %v501 = vrot.slane %v422, %v500
        %v502 = vlaneseq
        %v503 = vshrl.u32 %v502, 7
        %v504 = vsub.s32 1, %v503
        %v505 = vrot.slane %v422, %v504
        %v506 = vlaneseq
        %v507 = vshrl.u32 %v506, 7
        %v508 = vsub.s32 0, %v507
        %v509 = vrot.slane %v436, %v508
        %v510 = vlaneseq
        %v511 = vshrl.u32 %v510, 7
        %v512 = vsub.s32 1, %v511
        %v513 = vrot.slane %v436, %v512
        %v514 = vlaneseq
        %v515 = vshrl.u32 %v514, 7
        %v516 = vsub.s32 0, %v515
        %v517 = vrot.slane %v444, %v516
        %v518 = vlaneseq
        %v519 = vshrl.u32 %v518, 7
        %v520 = vsub.s32 1, %v519
        %v521 = vrot.slane %v444, %v520
        %v522 = vlaneseq
        %v523 = vshrl.u32 %v522, 7
        %v524 = vsub.s32 0, %v523
        %v525 = vrot.slane %v446, %v524
        %v526 = vlaneseq
        %v527 = vshrl.u32 %v526, 7
        %v528 = vsub.s32 1, %v527
        %v529 = vrot.slane %v446, %v528
        %v530 = vlaneseq
        %v531 = vshrl.u32 %v530, 7
        %v532 = vsub.s32 0, %v531
        %v533 = vrot.slane %v429, %v532
        %v534 = vlaneseq
        %v535 = vshrl.u32 %v534, 7
        %v536 = vsub.s32 1, %v535
        %v537 = vrot.slane %v429, %v536
        %v538 = vlaneseq
        %v539 = vshrl.u32 %v538, 7
        %v540 = vsub.s32 0, %v539
        %v541 = vrot.slane %v443, %v540
        %v542 = vlaneseq
        %v543 = vshrl.u32 %v542, 7
        %v544 = vsub.s32 1, %v543
        %v545 = vrot.slane %v443, %v544
        %v546 = vlaneseq
        %v547 = vshrl.u32 %v546, 7
        %v548 = vsub.s32 0, %v547
        %v549 = vrot.slane %v445, %v548
        %v550 = vlaneseq
        %v551 = vshrl.u32 %v550, 7
        %v552 = vsub.s32 1, %v551
        %v553 = vrot.slane %v445, %v552
        %v554 = vlaneseq
        %v555 = vshrl.u32 %v554, 7
        %v556 = vsub.s32 0, %v555
        %v557 = vrot.slane %v447, %v556
        %v558 = vlaneseq
        %v559 = vshrl.u32 %v558, 7
        %v560 = vsub.s32 1, %v559
        %v561 = vrot.slane %v447, %v560
        %v562 = vlaneseq
        %v563 = vshrl.u32 %v562, 7
        %v564 = vsub.s32 0, %v563
        %v565 = vrot.slane %v472, %v564
        %v566 = vlaneseq
        %v567 = vshrl.u32 %v566, 7
        %v568 = vsub.s32 1, %v567
        %v569 = vrot.slane %v472, %v568
        %v570 = vlaneseq
        %v571 = vshrl.u32 %v570, 7
        %v572 = vsub.s32 0, %v571
        %v573 = vrot.slane %v486, %v572
        %v574 = vlaneseq
        %v575 = vshrl.u32 %v574, 7
        %v576 = vsub.s32 1, %v575
        %v577 = vrot.slane %v486, %v576
        %v578 = vlaneseq
        %v579 = vshrl.u32 %v578, 7
        %v580 = vsub.s32 0, %v579
        %v581 = vrot.slane %v494, %v580
        %v582 = vlaneseq
        %v583 = vshrl.u32 %v582, 7
        %v584 = vsub.s32 1, %v583
        %v585 = vrot.slane %v494, %v584
        %v586 = vlaneseq
        %v587 = vshrl.u32 %v586, 7
        %v588 = vsub.s32 0, %v587
        %v589 = vrot.slane %v496, %v588
        %v590 = vlaneseq
        %v591 = vshrl.u32 %v590, 7
        %v592 = vsub.s32 1, %v591
        %v593 = vrot.slane %v496, %v592
        %v594 = vlaneseq
        %v595 = vshrl.u32 %v594, 7
        %v596 = vsub.s32 0, %v595
        %v597 = vrot.slane %v479, %v596
        %v598 = vlaneseq
        %v599 = vshrl.u32 %v598, 7
        %v600 = vsub.s32 1, %v599
        %v601 = vrot.slane %v479, %v600
        %v602 = vlaneseq
        %v603 = vshrl.u32 %v602, 7
        %v604 = vsub.s32 0, %v603
        %v605 = vrot.slane %v493, %v604
        %v606 = vlaneseq
        %v607 = vshrl.u32 %v606, 7
        %v608 = vsub.s32 1, %v607
        %v609 = vrot.slane %v493, %v608
        %v610 = vlaneseq
        %v611 = vshrl.u32 %v610, 7
        %v612 = vsub.s32 0, %v611
        %v613 = vrot.slane %v495, %v612
        %v614 = vlaneseq
        %v615 = vshrl.u32 %v614, 7
        %v616 = vsub.s32 1, %v615
        %v617 = vrot.slane %v495, %v616
        %v618 = vlaneseq
        %v619 = vshrl.u32 %v618, 7
        %v620 = vsub.s32 0, %v619
        %v621 = vrot.slane %v497, %v620
        %v622 = vlaneseq
        %v623 = vshrl.u32 %v622, 7
        %v624 = vsub.s32 1, %v623
        %v625 = vrot.slane %v497, %v624
        %v658 = vmul.f32 %v501, %v390
        %v659 = vmul.f32 %v505, %v391
        %v660 = vmul.f32 %v501, %v392
        %v661 = vmul.f32 %v505, %v393
        %v662 = vmul.f32 %v509, %v390
        %v663 = vmul.f32 %v513, %v391
        %v664 = vmul.f32 %v509, %v392
        %v665 = vmul.f32 %v513, %v393
        %v666 = vmul.f32 %v517, %v390
        %v667 = vmul.f32 %v521, %v391
        %v668 = vmul.f32 %v517, %v392
        %v669 = vmul.f32 %v521, %v393
        %v670 = vmul.f32 %v525, %v390
        %v671 = vmul.f32 %v529, %v391
        %v672 = vmul.f32 %v525, %v392
        %v673 = vmul.f32 %v529, %v393
        %v674 = vmul.f32 %v533, %v390
        %v675 = vmul.f32 %v537, %v391
        %v676 = vmul.f32 %v533, %v392
        %v677 = vmul.f32 %v537, %v393
        %v678 = vmul.f32 %v541, %v390
        %v679 = vmul.f32 %v545, %v391
        %v680 = vmul.f32 %v541, %v392
        %v681 = vmul.f32 %v545, %v393
        %v682 = vmul.f32 %v549, %v390
        %v683 = vmul.f32 %v553, %v391
        %v684 = vmul.f32 %v549, %v392
        %v685 = vmul.f32 %v553, %v393
        %v686 = vmul.f32 %v557, %v390
        %v687 = vmul.f32 %v561, %v391
        %v688 = vmul.f32 %v557, %v392
        %v689 = vmul.f32 %v561, %v393
        %v690 = vmul.f32 %v565, %v390
        %v691 = vmul.f32 %v569, %v391
        %v692 = vmul.f32 %v565, %v392
        %v693 = vmul.f32 %v569, %v393
        %v694 = vmul.f32 %v573, %v390
        %v695 = vmul.f32 %v577, %v391
        %v696 = vmul.f32 %v573, %v392
        %v697 = vmul.f32 %v577, %v393
        %v698 = vmul.f32 %v581, %v390
        %v699 = vmul.f32 %v585, %v391
        %v700 = vmul.f32 %v581, %v392
        %v701 = vmul.f32 %v585, %v393
        %v702 = vmul.f32 %v589, %v390
        %v703 = vmul.f32 %v593, %v391
        %v704 = vmul.f32 %v589, %v392
        %v705 = vmul.f32 %v593, %v393
        %v706 = vmul.f32 %v597, %v390
        %v707 = vmul.f32 %v601, %v391
        %v708 = vmul.f32 %v597, %v392
        %v709 = vmul.f32 %v601, %v393
        %v710 = vmul.f32 %v605, %v390
        %v711 = vmul.f32 %v609, %v391
        %v712 = vmul.f32 %v605, %v392
        %v713 = vmul.f32 %v609, %v393
        %v714 = vmul.f32 %v613, %v390
        %v715 = vmul.f32 %v617, %v391
        %v716 = vmul.f32 %v613, %v392
        %v717 = vmul.f32 %v617, %v393
        %v718 = vmul.f32 %v621, %v390
        %v719 = vmul.f32 %v625, %v391
        %v720 = vmul.f32 %v621, %v392
        %v721 = vmul.f32 %v625, %v393
        %v722 = vpack.c.bf16 %v660, %v658
        %v723 = vpack.c.bf16 %v661, %v659
        %v724 = vpack.c.bf16 %v664, %v662
        %v725 = vpack.c.bf16 %v665, %v663
        %v726 = vpack.c.bf16 %v668, %v666
        %v727 = vpack.c.bf16 %v669, %v667
        %v728 = vpack.c.bf16 %v672, %v670
        %v729 = vpack.c.bf16 %v673, %v671
        %v730 = vpack.c.bf16 %v676, %v674
        %v731 = vpack.c.bf16 %v677, %v675
        %v732 = vpack.c.bf16 %v680, %v678
        %v733 = vpack.c.bf16 %v681, %v679
        %v734 = vpack.c.bf16 %v684, %v682
        %v735 = vpack.c.bf16 %v685, %v683
        %v736 = vpack.c.bf16 %v688, %v686
        %v737 = vpack.c.bf16 %v689, %v687
        %v738 = vpack.c.bf16 %v692, %v690
        %v739 = vpack.c.bf16 %v693, %v691
        %v740 = vpack.c.bf16 %v696, %v694
        %v741 = vpack.c.bf16 %v697, %v695
        %v742 = vpack.c.bf16 %v700, %v698
        %v743 = vpack.c.bf16 %v701, %v699
        %v744 = vpack.c.bf16 %v704, %v702
        %v745 = vpack.c.bf16 %v705, %v703
        %v746 = vpack.c.bf16 %v708, %v706
        %v747 = vpack.c.bf16 %v709, %v707
        %v748 = vpack.c.bf16 %v712, %v710
        %v749 = vpack.c.bf16 %v713, %v711
        %v750 = vpack.c.bf16 %v716, %v714
        %v751 = vpack.c.bf16 %v717, %v715
        %v752 = vpack.c.bf16 %v720, %v718
        %v753 = vpack.c.bf16 %v721, %v719
        %754 = vst [vmem:[#allocation2] sm:$0xff] %v722
        %755 = vst [vmem:[#allocation2 + $0x8] sm:$0xff] %v723
        %756 = vst [vmem:[#allocation2 + $0x90] sm:$0xff] %v724
        %757 = vst [vmem:[#allocation2 + $0x98] sm:$0xff] %v725
        %758 = vst [vmem:[#allocation2 + $0x120] sm:$0xff] %v726
        %759 = vst [vmem:[#allocation2 + $0x128] sm:$0xff] %v727
        %760 = vst [vmem:[#allocation2 + $0x1b0] sm:$0xff] %v728
        %761 = vst [vmem:[#allocation2 + $0x1b8] sm:$0xff] %v729
        %762 = vst [vmem:[#allocation2 + $0x240] sm:$0xff] %v730
        %763 = vst [vmem:[#allocation2 + $0x248] sm:$0xff] %v731
        %764 = vst [vmem:[#allocation2 + $0x2d0] sm:$0xff] %v732
        %765 = vst [vmem:[#allocation2 + $0x2d8] sm:$0xff] %v733
        %766 = vst [vmem:[#allocation2 + $0x360] sm:$0xff] %v734
        %767 = vst [vmem:[#allocation2 + $0x368] sm:$0xff] %v735
        %768 = vst [vmem:[#allocation2 + $0x3f0] sm:$0xff] %v736
        %769 = vst [vmem:[#allocation2 + $0x3f8] sm:$0xff] %v737
        %770 = vst [vmem:[#allocation2 + $0x480] sm:$0xff] %v738
        %771 = vst [vmem:[#allocation2 + $0x488] sm:$0xff] %v739
        %772 = vst [vmem:[#allocation2 + $0x510] sm:$0xff] %v740
        %773 = vst [vmem:[#allocation2 + $0x518] sm:$0xff] %v741
        %774 = vst [vmem:[#allocation2 + $0x5a0] sm:$0xff] %v742
        %775 = vst [vmem:[#allocation2 + $0x5a8] sm:$0xff] %v743
        %776 = vst [vmem:[#allocation2 + $0x630] sm:$0xff] %v744
        %777 = vst [vmem:[#allocation2 + $0x638] sm:$0xff] %v745
        %778 = vst [vmem:[#allocation2 + $0x6c0] sm:$0xff] %v746
        %779 = vst [vmem:[#allocation2 + $0x6c8] sm:$0xff] %v747
        %780 = vst [vmem:[#allocation2 + $0x750] sm:$0xff] %v748
        %781 = vst [vmem:[#allocation2 + $0x758] sm:$0xff] %v749
        %782 = vst [vmem:[#allocation2 + $0x7e0] sm:$0xff] %v750
        %783 = vst [vmem:[#allocation2 + $0x7e8] sm:$0xff] %v751
        %784 = vst [vmem:[#allocation2 + $0x870] sm:$0xff] %v752
        %785 = vst [vmem:[#allocation2 + $0x878] sm:$0xff] %v753
        %s786 = scalar_lea.vmem %s309, 2
        %v787 = vld [vmem:[%s786] ss:$8 sm:$0x3]
        %s788 = scalar_lea.vmem %s309, 3
        %v789 = vld [vmem:[%s788] ss:$8 sm:$0x3]
        %v790 = vadd.f32 %v336, %v787
        %v791 = vadd.f32 %v327, 0.0
        %v792 = vadd.f32 %v791, %v789
        %v794 = vlaneseq
        %v795 = vshrl.u32 %v794, 7
        %v796 = vsub.s32 0, %v795
        %v797 = vrot.slane %v790, %v796
        %v798 = vlaneseq
        %v799 = vshrl.u32 %v798, 7
        %v800 = vsub.s32 1, %v799
        %v801 = vrot.slane %v790, %v800
        %v804 = vsub.f32 %v331, %v797
        %v805 = vsub.f32 %v331, %v801
        %v806 = vsub.f32 %v332, %v797
        %v807 = vsub.f32 %v332, %v801
        %v808 = vand.u32 2147483647, %v804
        %v809 = vand.u32 2147483647, %v805
        %v810 = vand.u32 2147483647, %v806
        %v811 = vand.u32 2147483647, %v807
        %v812 = vsub.f32 1.0, %v808
        %v813 = vsub.f32 1.0, %v809
        %v814 = vsub.f32 1.0, %v810
        %v815 = vsub.f32 1.0, %v811
        %v816 = vmax.f32 %v812, 0.0
        %v817 = vmax.f32 %v813, 0.0
        %v818 = vmax.f32 %v814, 0.0
        %v819 = vmax.f32 %v815, 0.0
        %v821 = vlaneseq
        %v822 = vshrl.u32 %v821, 7
        %v823 = vsub.s32 0, %v822
        %v824 = vrot.slane %v792, %v823
        %v825 = vlaneseq
        %v826 = vshrl.u32 %v825, 7
        %v827 = vsub.s32 1, %v826
        %v828 = vrot.slane %v792, %v827
        %v831 = vsub.f32 %v331, %v824
        %v832 = vsub.f32 %v331, %v828
        %v833 = vsub.f32 %v332, %v824
        %v834 = vsub.f32 %v332, %v828
        %v835 = vand.u32 2147483647, %v831
        %v836 = vand.u32 2147483647, %v832
        %v837 = vand.u32 2147483647, %v833
        %v838 = vand.u32 2147483647, %v834
        %v839 = vsub.f32 1.0, %v835
        %v840 = vsub.f32 1.0, %v836
        %v841 = vsub.f32 1.0, %v837
        %v842 = vsub.f32 1.0, %v838
        %v843 = vmax.f32 %v839, 0.0
        %v844 = vmax.f32 %v840, 0.0
        %v845 = vmax.f32 %v841, 0.0
        %v846 = vmax.f32 %v842, 0.0
        %v851 = vcombine.low %v816, %v817
        %v852 = vcombine.high %v816, %v817
        %v854 = vunpack.c.l.s4 1966171168
        %v855 = vunpack.c.0.s8 %v854
        %v856 = vlaneseq
        %v857 = vshrl.u32 %v856, 7
        %v858 = vsub.s32 %v855, %v857
        %v859 = vrot.slane %v851, %v858
        %v861 = vunpack.c.l.s4 1966171168
        %v862 = vunpack.c.0.s8 %v861
        %v863 = vlaneseq
        %v864 = vshrl.u32 %v863, 7
        %v865 = vsub.s32 %v862, %v864
        %v866 = vrot.slane %v852, %v865
        %v867 = vcombine.high %v859, %v859
        %v868 = vcombine.high %v866, %v866
        %v870 = vunpack.c.l.s4 1966171168
        %v871 = vunpack.c.0.s8 %v870
        %v872 = vlaneseq
        %v873 = vshrl.u32 %v872, 7
        %v874 = vsub.s32 %v871, %v873
        %v875 = vrot.slane %v859, %v874
        %v877 = vunpack.c.l.s4 1966171168
        %v878 = vunpack.c.0.s8 %v877
        %v879 = vlaneseq
        %v880 = vshrl.u32 %v879, 7
        %v881 = vsub.s32 %v878, %v880
        %v882 = vrot.slane %v866, %v881
        %v884 = vunpack.c.l.s4 1966171168
        %v885 = vunpack.c.0.s8 %v884
        %v886 = vlaneseq
        %v887 = vshrl.u32 %v886, 7
        %v888 = vsub.s32 %v885, %v887
        %v889 = vrot.slane %v867, %v888
        %v891 = vunpack.c.l.s4 1966171168
        %v892 = vunpack.c.0.s8 %v891
        %v893 = vlaneseq
        %v894 = vshrl.u32 %v893, 7
        %v895 = vsub.s32 %v892, %v894
        %v896 = vrot.slane %v868, %v895
        %v897 = vcombine.high %v875, %v875
        %v898 = vcombine.high %v882, %v882
        %v899 = vcombine.high %v889, %v889
        %v900 = vcombine.high %v896, %v896
        %v901 = vcombine.low %v818, %v819
        %v902 = vcombine.high %v818, %v819
        %v904 = vunpack.c.l.s4 1966171168
        %v905 = vunpack.c.0.s8 %v904
        %v906 = vlaneseq
        %v907 = vshrl.u32 %v906, 7
        %v908 = vsub.s32 %v905, %v907
        %v909 = vrot.slane %v901, %v908
        %v911 = vunpack.c.l.s4 1966171168
        %v912 = vunpack.c.0.s8 %v911
        %v913 = vlaneseq
        %v914 = vshrl.u32 %v913, 7
        %v915 = vsub.s32 %v912, %v914
        %v916 = vrot.slane %v902, %v915
        %v917 = vcombine.high %v909, %v909
        %v918 = vcombine.high %v916, %v916
        %v920 = vunpack.c.l.s4 1966171168
        %v921 = vunpack.c.0.s8 %v920
        %v922 = vlaneseq
        %v923 = vshrl.u32 %v922, 7
        %v924 = vsub.s32 %v921, %v923
        %v925 = vrot.slane %v909, %v924
        %v927 = vunpack.c.l.s4 1966171168
        %v928 = vunpack.c.0.s8 %v927
        %v929 = vlaneseq
        %v930 = vshrl.u32 %v929, 7
        %v931 = vsub.s32 %v928, %v930
        %v932 = vrot.slane %v916, %v931
        %v934 = vunpack.c.l.s4 1966171168
        %v935 = vunpack.c.0.s8 %v934
        %v936 = vlaneseq
        %v937 = vshrl.u32 %v936, 7
        %v938 = vsub.s32 %v935, %v937
        %v939 = vrot.slane %v917, %v938
        %v941 = vunpack.c.l.s4 1966171168
        %v942 = vunpack.c.0.s8 %v941
        %v943 = vlaneseq
        %v944 = vshrl.u32 %v943, 7
        %v945 = vsub.s32 %v942, %v944
        %v946 = vrot.slane %v918, %v945
        %v947 = vcombine.high %v925, %v925
        %v948 = vcombine.high %v932, %v932
        %v949 = vcombine.high %v939, %v939
        %v950 = vcombine.high %v946, %v946
        %v951 = vlaneseq
        %v952 = vshrl.u32 %v951, 7
        %v953 = vsub.s32 0, %v952
        %v954 = vrot.slane %v875, %v953
        %v955 = vlaneseq
        %v956 = vshrl.u32 %v955, 7
        %v957 = vsub.s32 1, %v956
        %v958 = vrot.slane %v875, %v957
        %v959 = vlaneseq
        %v960 = vshrl.u32 %v959, 7
        %v961 = vsub.s32 0, %v960
        %v962 = vrot.slane %v889, %v961
        %v963 = vlaneseq
        %v964 = vshrl.u32 %v963, 7
        %v965 = vsub.s32 1, %v964
        %v966 = vrot.slane %v889, %v965
        %v967 = vlaneseq
        %v968 = vshrl.u32 %v967, 7
        %v969 = vsub.s32 0, %v968
        %v970 = vrot.slane %v897, %v969
        %v971 = vlaneseq
        %v972 = vshrl.u32 %v971, 7
        %v973 = vsub.s32 1, %v972
        %v974 = vrot.slane %v897, %v973
        %v975 = vlaneseq
        %v976 = vshrl.u32 %v975, 7
        %v977 = vsub.s32 0, %v976
        %v978 = vrot.slane %v899, %v977
        %v979 = vlaneseq
        %v980 = vshrl.u32 %v979, 7
        %v981 = vsub.s32 1, %v980
        %v982 = vrot.slane %v899, %v981
        %v983 = vlaneseq
        %v984 = vshrl.u32 %v983, 7
        %v985 = vsub.s32 0, %v984
        %v986 = vrot.slane %v882, %v985
        %v987 = vlaneseq
        %v988 = vshrl.u32 %v987, 7
        %v989 = vsub.s32 1, %v988
        %v990 = vrot.slane %v882, %v989
        %v991 = vlaneseq
        %v992 = vshrl.u32 %v991, 7
        %v993 = vsub.s32 0, %v992
        %v994 = vrot.slane %v896, %v993
        %v995 = vlaneseq
        %v996 = vshrl.u32 %v995, 7
        %v997 = vsub.s32 1, %v996
        %v998 = vrot.slane %v896, %v997
        %v999 = vlaneseq
        %v1000 = vshrl.u32 %v999, 7
        %v1001 = vsub.s32 0, %v1000
        %v1002 = vrot.slane %v898, %v1001
        %v1003 = vlaneseq
        %v1004 = vshrl.u32 %v1003, 7
        %v1005 = vsub.s32 1, %v1004
        %v1006 = vrot.slane %v898, %v1005
        %v1007 = vlaneseq
        %v1008 = vshrl.u32 %v1007, 7
        %v1009 = vsub.s32 0, %v1008
        %v1010 = vrot.slane %v900, %v1009
        %v1011 = vlaneseq
        %v1012 = vshrl.u32 %v1011, 7
        %v1013 = vsub.s32 1, %v1012
        %v1014 = vrot.slane %v900, %v1013
        %v1015 = vlaneseq
        %v1016 = vshrl.u32 %v1015, 7
        %v1017 = vsub.s32 0, %v1016
        %v1018 = vrot.slane %v925, %v1017
        %v1019 = vlaneseq
        %v1020 = vshrl.u32 %v1019, 7
        %v1021 = vsub.s32 1, %v1020
        %v1022 = vrot.slane %v925, %v1021
        %v1023 = vlaneseq
        %v1024 = vshrl.u32 %v1023, 7
        %v1025 = vsub.s32 0, %v1024
        %v1026 = vrot.slane %v939, %v1025
        %v1027 = vlaneseq
        %v1028 = vshrl.u32 %v1027, 7
        %v1029 = vsub.s32 1, %v1028
        %v1030 = vrot.slane %v939, %v1029
        %v1031 = vlaneseq
        %v1032 = vshrl.u32 %v1031, 7
        %v1033 = vsub.s32 0, %v1032
        %v1034 = vrot.slane %v947, %v1033
        %v1035 = vlaneseq
        %v1036 = vshrl.u32 %v1035, 7
        %v1037 = vsub.s32 1, %v1036
        %v1038 = vrot.slane %v947, %v1037
        %v1039 = vlaneseq
        %v1040 = vshrl.u32 %v1039, 7
        %v1041 = vsub.s32 0, %v1040
        %v1042 = vrot.slane %v949, %v1041
        %v1043 = vlaneseq
        %v1044 = vshrl.u32 %v1043, 7
        %v1045 = vsub.s32 1, %v1044
        %v1046 = vrot.slane %v949, %v1045
        %v1047 = vlaneseq
        %v1048 = vshrl.u32 %v1047, 7
        %v1049 = vsub.s32 0, %v1048
        %v1050 = vrot.slane %v932, %v1049
        %v1051 = vlaneseq
        %v1052 = vshrl.u32 %v1051, 7
        %v1053 = vsub.s32 1, %v1052
        %v1054 = vrot.slane %v932, %v1053
        %v1055 = vlaneseq
        %v1056 = vshrl.u32 %v1055, 7
        %v1057 = vsub.s32 0, %v1056
        %v1058 = vrot.slane %v946, %v1057
        %v1059 = vlaneseq
        %v1060 = vshrl.u32 %v1059, 7
        %v1061 = vsub.s32 1, %v1060
        %v1062 = vrot.slane %v946, %v1061
        %v1063 = vlaneseq
        %v1064 = vshrl.u32 %v1063, 7
        %v1065 = vsub.s32 0, %v1064
        %v1066 = vrot.slane %v948, %v1065
        %v1067 = vlaneseq
        %v1068 = vshrl.u32 %v1067, 7
        %v1069 = vsub.s32 1, %v1068
        %v1070 = vrot.slane %v948, %v1069
        %v1071 = vlaneseq
        %v1072 = vshrl.u32 %v1071, 7
        %v1073 = vsub.s32 0, %v1072
        %v1074 = vrot.slane %v950, %v1073
        %v1075 = vlaneseq
        %v1076 = vshrl.u32 %v1075, 7
        %v1077 = vsub.s32 1, %v1076
        %v1078 = vrot.slane %v950, %v1077
        %v1111 = vmul.f32 %v954, %v843
        %v1112 = vmul.f32 %v958, %v844
        %v1113 = vmul.f32 %v954, %v845
        %v1114 = vmul.f32 %v958, %v846
        %v1115 = vmul.f32 %v962, %v843
        %v1116 = vmul.f32 %v966, %v844
        %v1117 = vmul.f32 %v962, %v845
        %v1118 = vmul.f32 %v966, %v846
        %v1119 = vmul.f32 %v970, %v843
        %v1120 = vmul.f32 %v974, %v844
        %v1121 = vmul.f32 %v970, %v845
        %v1122 = vmul.f32 %v974, %v846
        %v1123 = vmul.f32 %v978, %v843
        %v1124 = vmul.f32 %v982, %v844
        %v1125 = vmul.f32 %v978, %v845
        %v1126 = vmul.f32 %v982, %v846
        %v1127 = vmul.f32 %v986, %v843
        %v1128 = vmul.f32 %v990, %v844
        %v1129 = vmul.f32 %v986, %v845
        %v1130 = vmul.f32 %v990, %v846
        %v1131 = vmul.f32 %v994, %v843
        %v1132 = vmul.f32 %v998, %v844
        %v1133 = vmul.f32 %v994, %v845
        %v1134 = vmul.f32 %v998, %v846
        %v1135 = vmul.f32 %v1002, %v843
        %v1136 = vmul.f32 %v1006, %v844
        %v1137 = vmul.f32 %v1002, %v845
        %v1138 = vmul.f32 %v1006, %v846
        %v1139 = vmul.f32 %v1010, %v843
        %v1140 = vmul.f32 %v1014, %v844
        %v1141 = vmul.f32 %v1010, %v845
        %v1142 = vmul.f32 %v1014, %v846
        %v1143 = vmul.f32 %v1018, %v843
        %v1144 = vmul.f32 %v1022, %v844
        %v1145 = vmul.f32 %v1018, %v845
        %v1146 = vmul.f32 %v1022, %v846
        %v1147 = vmul.f32 %v1026, %v843
        %v1148 = vmul.f32 %v1030, %v844
        %v1149 = vmul.f32 %v1026, %v845
        %v1150 = vmul.f32 %v1030, %v846
        %v1151 = vmul.f32 %v1034, %v843
        %v1152 = vmul.f32 %v1038, %v844
        %v1153 = vmul.f32 %v1034, %v845
        %v1154 = vmul.f32 %v1038, %v846
        %v1155 = vmul.f32 %v1042, %v843
        %v1156 = vmul.f32 %v1046, %v844
        %v1157 = vmul.f32 %v1042, %v845
        %v1158 = vmul.f32 %v1046, %v846
        %v1159 = vmul.f32 %v1050, %v843
        %v1160 = vmul.f32 %v1054, %v844
        %v1161 = vmul.f32 %v1050, %v845
        %v1162 = vmul.f32 %v1054, %v846
        %v1163 = vmul.f32 %v1058, %v843
        %v1164 = vmul.f32 %v1062, %v844
        %v1165 = vmul.f32 %v1058, %v845
        %v1166 = vmul.f32 %v1062, %v846
        %v1167 = vmul.f32 %v1066, %v843
        %v1168 = vmul.f32 %v1070, %v844
        %v1169 = vmul.f32 %v1066, %v845
        %v1170 = vmul.f32 %v1070, %v846
        %v1171 = vmul.f32 %v1074, %v843
        %v1172 = vmul.f32 %v1078, %v844
        %v1173 = vmul.f32 %v1074, %v845
        %v1174 = vmul.f32 %v1078, %v846
        %v1175 = vpack.c.bf16 %v1113, %v1111
        %v1176 = vpack.c.bf16 %v1114, %v1112
        %v1177 = vpack.c.bf16 %v1117, %v1115
        %v1178 = vpack.c.bf16 %v1118, %v1116
        %v1179 = vpack.c.bf16 %v1121, %v1119
        %v1180 = vpack.c.bf16 %v1122, %v1120
        %v1181 = vpack.c.bf16 %v1125, %v1123
        %v1182 = vpack.c.bf16 %v1126, %v1124
        %v1183 = vpack.c.bf16 %v1129, %v1127
        %v1184 = vpack.c.bf16 %v1130, %v1128
        %v1185 = vpack.c.bf16 %v1133, %v1131
        %v1186 = vpack.c.bf16 %v1134, %v1132
        %v1187 = vpack.c.bf16 %v1137, %v1135
        %v1188 = vpack.c.bf16 %v1138, %v1136
        %v1189 = vpack.c.bf16 %v1141, %v1139
        %v1190 = vpack.c.bf16 %v1142, %v1140
        %v1191 = vpack.c.bf16 %v1145, %v1143
        %v1192 = vpack.c.bf16 %v1146, %v1144
        %v1193 = vpack.c.bf16 %v1149, %v1147
        %v1194 = vpack.c.bf16 %v1150, %v1148
        %v1195 = vpack.c.bf16 %v1153, %v1151
        %v1196 = vpack.c.bf16 %v1154, %v1152
        %v1197 = vpack.c.bf16 %v1157, %v1155
        %v1198 = vpack.c.bf16 %v1158, %v1156
        %v1199 = vpack.c.bf16 %v1161, %v1159
        %v1200 = vpack.c.bf16 %v1162, %v1160
        %v1201 = vpack.c.bf16 %v1165, %v1163
        %v1202 = vpack.c.bf16 %v1166, %v1164
        %v1203 = vpack.c.bf16 %v1169, %v1167
        %v1204 = vpack.c.bf16 %v1170, %v1168
        %v1205 = vpack.c.bf16 %v1173, %v1171
        %v1206 = vpack.c.bf16 %v1174, %v1172
        %1207 = vst [vmem:[#allocation2 + $0x10] sm:$0xff] %v1175
        %1208 = vst [vmem:[#allocation2 + $0x18] sm:$0xff] %v1176
        %1209 = vst [vmem:[#allocation2 + $0xa0] sm:$0xff] %v1177
        %1210 = vst [vmem:[#allocation2 + $0xa8] sm:$0xff] %v1178
        %1211 = vst [vmem:[#allocation2 + $0x130] sm:$0xff] %v1179
        %1212 = vst [vmem:[#allocation2 + $0x138] sm:$0xff] %v1180
        %1213 = vst [vmem:[#allocation2 + $0x1c0] sm:$0xff] %v1181
        %1214 = vst [vmem:[#allocation2 + $0x1c8] sm:$0xff] %v1182
        %1215 = vst [vmem:[#allocation2 + $0x250] sm:$0xff] %v1183
        %1216 = vst [vmem:[#allocation2 + $0x258] sm:$0xff] %v1184
        %1217 = vst [vmem:[#allocation2 + $0x2e0] sm:$0xff] %v1185
        %1218 = vst [vmem:[#allocation2 + $0x2e8] sm:$0xff] %v1186
        %1219 = vst [vmem:[#allocation2 + $0x370] sm:$0xff] %v1187
        %1220 = vst [vmem:[#allocation2 + $0x378] sm:$0xff] %v1188
        %1221 = vst [vmem:[#allocation2 + $0x400] sm:$0xff] %v1189
        %1222 = vst [vmem:[#allocation2 + $0x408] sm:$0xff] %v1190
        %1223 = vst [vmem:[#allocation2 + $0x490] sm:$0xff] %v1191
        %1224 = vst [vmem:[#allocation2 + $0x498] sm:$0xff] %v1192
        %1225 = vst [vmem:[#allocation2 + $0x520] sm:$0xff] %v1193
        %1226 = vst [vmem:[#allocation2 + $0x528] sm:$0xff] %v1194
        %1227 = vst [vmem:[#allocation2 + $0x5b0] sm:$0xff] %v1195
        %1228 = vst [vmem:[#allocation2 + $0x5b8] sm:$0xff] %v1196
        %1229 = vst [vmem:[#allocation2 + $0x640] sm:$0xff] %v1197
        %1230 = vst [vmem:[#allocation2 + $0x648] sm:$0xff] %v1198
        %1231 = vst [vmem:[#allocation2 + $0x6d0] sm:$0xff] %v1199
        %1232 = vst [vmem:[#allocation2 + $0x6d8] sm:$0xff] %v1200
        %1233 = vst [vmem:[#allocation2 + $0x760] sm:$0xff] %v1201
        %1234 = vst [vmem:[#allocation2 + $0x768] sm:$0xff] %v1202
        %1235 = vst [vmem:[#allocation2 + $0x7f0] sm:$0xff] %v1203
        %1236 = vst [vmem:[#allocation2 + $0x7f8] sm:$0xff] %v1204
        %1237 = vst [vmem:[#allocation2 + $0x880] sm:$0xff] %v1205
        %1238 = vst [vmem:[#allocation2 + $0x888] sm:$0xff] %v1206
        %s1239 = scalar_lea.vmem %s309, 4
        %v1240 = vld [vmem:[%s1239] ss:$8 sm:$0x3]
        %s1241 = scalar_lea.vmem %s309, 5
        %v1242 = vld [vmem:[%s1241] ss:$8 sm:$0x3]
        %v1243 = vadd.f32 %v336, %v1240
        %v1244 = vadd.f32 %v327, 1.0
        %v1245 = vadd.f32 %v1244, %v1242
        %v1247 = vlaneseq
        %v1248 = vshrl.u32 %v1247, 7
        %v1249 = vsub.s32 0, %v1248
        %v1250 = vrot.slane %v1243, %v1249
        %v1251 = vlaneseq
        %v1252 = vshrl.u32 %v1251, 7
        %v1253 = vsub.s32 1, %v1252
        %v1254 = vrot.slane %v1243, %v1253
        %v1257 = vsub.f32 %v331, %v1250
        %v1258 = vsub.f32 %v331, %v1254
        %v1259 = vsub.f32 %v332, %v1250
        %v1260 = vsub.f32 %v332, %v1254
        %v1261 = vand.u32 2147483647, %v1257
        %v1262 = vand.u32 2147483647, %v1258
        %v1263 = vand.u32 2147483647, %v1259
        %v1264 = vand.u32 2147483647, %v1260
        %v1265 = vsub.f32 1.0, %v1261
        %v1266 = vsub.f32 1.0, %v1262
        %v1267 = vsub.f32 1.0, %v1263
        %v1268 = vsub.f32 1.0, %v1264
        %v1269 = vmax.f32 %v1265, 0.0
        %v1270 = vmax.f32 %v1266, 0.0
        %v1271 = vmax.f32 %v1267, 0.0
        %v1272 = vmax.f32 %v1268, 0.0
        %v1274 = vlaneseq
        %v1275 = vshrl.u32 %v1274, 7
        %v1276 = vsub.s32 0, %v1275
        %v1277 = vrot.slane %v1245, %v1276
        %v1278 = vlaneseq
        %v1279 = vshrl.u32 %v1278, 7
        %v1280 = vsub.s32 1, %v1279
        %v1281 = vrot.slane %v1245, %v1280
        %v1284 = vsub.f32 %v331, %v1277
        %v1285 = vsub.f32 %v331, %v1281
        %v1286 = vsub.f32 %v332, %v1277
        %v1287 = vsub.f32 %v332, %v1281
        %v1288 = vand.u32 2147483647, %v1284
        %v1289 = vand.u32 2147483647, %v1285
        %v1290 = vand.u32 2147483647, %v1286
        %v1291 = vand.u32 2147483647, %v1287
        %v1292 = vsub.f32 1.0, %v1288
        %v1293 = vsub.f32 1.0, %v1289
        %v1294 = vsub.f32 1.0, %v1290
        %v1295 = vsub.f32 1.0, %v1291
        %v1296 = vmax.f32 %v1292, 0.0
        %v1297 = vmax.f32 %v1293, 0.0
        %v1298 = vmax.f32 %v1294, 0.0
        %v1299 = vmax.f32 %v1295, 0.0
        %v1304 = vcombine.low %v1269, %v1270
        %v1305 = vcombine.high %v1269, %v1270
        %v1307 = vunpack.c.l.s4 1966171168
        %v1308 = vunpack.c.0.s8 %v1307
        %v1309 = vlaneseq
        %v1310 = vshrl.u32 %v1309, 7
        %v1311 = vsub.s32 %v1308, %v1310
        %v1312 = vrot.slane %v1304, %v1311
        %v1314 = vunpack.c.l.s4 1966171168
        %v1315 = vunpack.c.0.s8 %v1314
        %v1316 = vlaneseq
        %v1317 = vshrl.u32 %v1316, 7
        %v1318 = vsub.s32 %v1315, %v1317
        %v1319 = vrot.slane %v1305, %v1318
        %v1320 = vcombine.high %v1312, %v1312
        %v1321 = vcombine.high %v1319, %v1319
        %v1323 = vunpack.c.l.s4 1966171168
        %v1324 = vunpack.c.0.s8 %v1323
        %v1325 = vlaneseq
        %v1326 = vshrl.u32 %v1325, 7
        %v1327 = vsub.s32 %v1324, %v1326
        %v1328 = vrot.slane %v1312, %v1327
        %v1330 = vunpack.c.l.s4 1966171168
        %v1331 = vunpack.c.0.s8 %v1330
        %v1332 = vlaneseq
        %v1333 = vshrl.u32 %v1332, 7
        %v1334 = vsub.s32 %v1331, %v1333
        %v1335 = vrot.slane %v1319, %v1334
        %v1337 = vunpack.c.l.s4 1966171168
        %v1338 = vunpack.c.0.s8 %v1337
        %v1339 = vlaneseq
        %v1340 = vshrl.u32 %v1339, 7
        %v1341 = vsub.s32 %v1338, %v1340
        %v1342 = vrot.slane %v1320, %v1341
        %v1344 = vunpack.c.l.s4 1966171168
        %v1345 = vunpack.c.0.s8 %v1344
        %v1346 = vlaneseq
        %v1347 = vshrl.u32 %v1346, 7
        %v1348 = vsub.s32 %v1345, %v1347
        %v1349 = vrot.slane %v1321, %v1348
        %v1350 = vcombine.high %v1328, %v1328
        %v1351 = vcombine.high %v1335, %v1335
        %v1352 = vcombine.high %v1342, %v1342
        %v1353 = vcombine.high %v1349, %v1349
        %v1354 = vcombine.low %v1271, %v1272
        %v1355 = vcombine.high %v1271, %v1272
        %v1357 = vunpack.c.l.s4 1966171168
        %v1358 = vunpack.c.0.s8 %v1357
        %v1359 = vlaneseq
        %v1360 = vshrl.u32 %v1359, 7
        %v1361 = vsub.s32 %v1358, %v1360
        %v1362 = vrot.slane %v1354, %v1361
        %v1364 = vunpack.c.l.s4 1966171168
        %v1365 = vunpack.c.0.s8 %v1364
        %v1366 = vlaneseq
        %v1367 = vshrl.u32 %v1366, 7
        %v1368 = vsub.s32 %v1365, %v1367
        %v1369 = vrot.slane %v1355, %v1368
        %v1370 = vcombine.high %v1362, %v1362
        %v1371 = vcombine.high %v1369, %v1369
        %v1373 = vunpack.c.l.s4 1966171168
        %v1374 = vunpack.c.0.s8 %v1373
        %v1375 = vlaneseq
        %v1376 = vshrl.u32 %v1375, 7
        %v1377 = vsub.s32 %v1374, %v1376
        %v1378 = vrot.slane %v1362, %v1377
        %v1380 = vunpack.c.l.s4 1966171168
        %v1381 = vunpack.c.0.s8 %v1380
        %v1382 = vlaneseq
        %v1383 = vshrl.u32 %v1382, 7
        %v1384 = vsub.s32 %v1381, %v1383
        %v1385 = vrot.slane %v1369, %v1384
        %v1387 = vunpack.c.l.s4 1966171168
        %v1388 = vunpack.c.0.s8 %v1387
        %v1389 = vlaneseq
        %v1390 = vshrl.u32 %v1389, 7
        %v1391 = vsub.s32 %v1388, %v1390
        %v1392 = vrot.slane %v1370, %v1391
        %v1394 = vunpack.c.l.s4 1966171168
        %v1395 = vunpack.c.0.s8 %v1394
        %v1396 = vlaneseq
        %v1397 = vshrl.u32 %v1396, 7
        %v1398 = vsub.s32 %v1395, %v1397
        %v1399 = vrot.slane %v1371, %v1398
        %v1400 = vcombine.high %v1378, %v1378
        %v1401 = vcombine.high %v1385, %v1385
        %v1402 = vcombine.high %v1392, %v1392
        %v1403 = vcombine.high %v1399, %v1399
        %v1404 = vlaneseq
        %v1405 = vshrl.u32 %v1404, 7
        %v1406 = vsub.s32 0, %v1405
        %v1407 = vrot.slane %v1328, %v1406
        %v1408 = vlaneseq
        %v1409 = vshrl.u32 %v1408, 7
        %v1410 = vsub.s32 1, %v1409
        %v1411 = vrot.slane %v1328, %v1410
        %v1412 = vlaneseq
        %v1413 = vshrl.u32 %v1412, 7
        %v1414 = vsub.s32 0, %v1413
        %v1415 = vrot.slane %v1342, %v1414
        %v1416 = vlaneseq
        %v1417 = vshrl.u32 %v1416, 7
        %v1418 = vsub.s32 1, %v1417
        %v1419 = vrot.slane %v1342, %v1418
        %v1420 = vlaneseq
        %v1421 = vshrl.u32 %v1420, 7
        %v1422 = vsub.s32 0, %v1421
        %v1423 = vrot.slane %v1350, %v1422
        %v1424 = vlaneseq
        %v1425 = vshrl.u32 %v1424, 7
        %v1426 = vsub.s32 1, %v1425
        %v1427 = vrot.slane %v1350, %v1426
        %v1428 = vlaneseq
        %v1429 = vshrl.u32 %v1428, 7
        %v1430 = vsub.s32 0, %v1429
        %v1431 = vrot.slane %v1352, %v1430
        %v1432 = vlaneseq
        %v1433 = vshrl.u32 %v1432, 7
        %v1434 = vsub.s32 1, %v1433
        %v1435 = vrot.slane %v1352, %v1434
        %v1436 = vlaneseq
        %v1437 = vshrl.u32 %v1436, 7
        %v1438 = vsub.s32 0, %v1437
        %v1439 = vrot.slane %v1335, %v1438
        %v1440 = vlaneseq
        %v1441 = vshrl.u32 %v1440, 7
        %v1442 = vsub.s32 1, %v1441
        %v1443 = vrot.slane %v1335, %v1442
        %v1444 = vlaneseq
        %v1445 = vshrl.u32 %v1444, 7
        %v1446 = vsub.s32 0, %v1445
        %v1447 = vrot.slane %v1349, %v1446
        %v1448 = vlaneseq
        %v1449 = vshrl.u32 %v1448, 7
        %v1450 = vsub.s32 1, %v1449
        %v1451 = vrot.slane %v1349, %v1450
        %v1452 = vlaneseq
        %v1453 = vshrl.u32 %v1452, 7
        %v1454 = vsub.s32 0, %v1453
        %v1455 = vrot.slane %v1351, %v1454
        %v1456 = vlaneseq
        %v1457 = vshrl.u32 %v1456, 7
        %v1458 = vsub.s32 1, %v1457
        %v1459 = vrot.slane %v1351, %v1458
        %v1460 = vlaneseq
        %v1461 = vshrl.u32 %v1460, 7
        %v1462 = vsub.s32 0, %v1461
        %v1463 = vrot.slane %v1353, %v1462
        %v1464 = vlaneseq
        %v1465 = vshrl.u32 %v1464, 7
        %v1466 = vsub.s32 1, %v1465
        %v1467 = vrot.slane %v1353, %v1466
        %v1468 = vlaneseq
        %v1469 = vshrl.u32 %v1468, 7
        %v1470 = vsub.s32 0, %v1469
        %v1471 = vrot.slane %v1378, %v1470
        %v1472 = vlaneseq
        %v1473 = vshrl.u32 %v1472, 7
        %v1474 = vsub.s32 1, %v1473
        %v1475 = vrot.slane %v1378, %v1474
        %v1476 = vlaneseq
        %v1477 = vshrl.u32 %v1476, 7
        %v1478 = vsub.s32 0, %v1477
        %v1479 = vrot.slane %v1392, %v1478
        %v1480 = vlaneseq
        %v1481 = vshrl.u32 %v1480, 7
        %v1482 = vsub.s32 1, %v1481
        %v1483 = vrot.slane %v1392, %v1482
        %v1484 = vlaneseq
        %v1485 = vshrl.u32 %v1484, 7
        %v1486 = vsub.s32 0, %v1485
        %v1487 = vrot.slane %v1400, %v1486
        %v1488 = vlaneseq
        %v1489 = vshrl.u32 %v1488, 7
        %v1490 = vsub.s32 1, %v1489
        %v1491 = vrot.slane %v1400, %v1490
        %v1492 = vlaneseq
        %v1493 = vshrl.u32 %v1492, 7
        %v1494 = vsub.s32 0, %v1493
        %v1495 = vrot.slane %v1402, %v1494
        %v1496 = vlaneseq
        %v1497 = vshrl.u32 %v1496, 7
        %v1498 = vsub.s32 1, %v1497
        %v1499 = vrot.slane %v1402, %v1498
        %v1500 = vlaneseq
        %v1501 = vshrl.u32 %v1500, 7
        %v1502 = vsub.s32 0, %v1501
        %v1503 = vrot.slane %v1385, %v1502
        %v1504 = vlaneseq
        %v1505 = vshrl.u32 %v1504, 7
        %v1506 = vsub.s32 1, %v1505
        %v1507 = vrot.slane %v1385, %v1506
        %v1508 = vlaneseq
        %v1509 = vshrl.u32 %v1508, 7
        %v1510 = vsub.s32 0, %v1509
        %v1511 = vrot.slane %v1399, %v1510
        %v1512 = vlaneseq
        %v1513 = vshrl.u32 %v1512, 7
        %v1514 = vsub.s32 1, %v1513
        %v1515 = vrot.slane %v1399, %v1514
        %v1516 = vlaneseq
        %v1517 = vshrl.u32 %v1516, 7
        %v1518 = vsub.s32 0, %v1517
        %v1519 = vrot.slane %v1401, %v1518
        %v1520 = vlaneseq
        %v1521 = vshrl.u32 %v1520, 7
        %v1522 = vsub.s32 1, %v1521
        %v1523 = vrot.slane %v1401, %v1522
        %v1524 = vlaneseq
        %v1525 = vshrl.u32 %v1524, 7
        %v1526 = vsub.s32 0, %v1525
        %v1527 = vrot.slane %v1403, %v1526
        %v1528 = vlaneseq
        %v1529 = vshrl.u32 %v1528, 7
        %v1530 = vsub.s32 1, %v1529
        %v1531 = vrot.slane %v1403, %v1530
        %v1564 = vmul.f32 %v1407, %v1296
        %v1565 = vmul.f32 %v1411, %v1297
        %v1566 = vmul.f32 %v1407, %v1298
        %v1567 = vmul.f32 %v1411, %v1299
        %v1568 = vmul.f32 %v1415, %v1296
        %v1569 = vmul.f32 %v1419, %v1297
        %v1570 = vmul.f32 %v1415, %v1298
        %v1571 = vmul.f32 %v1419, %v1299
        %v1572 = vmul.f32 %v1423, %v1296
        %v1573 = vmul.f32 %v1427, %v1297
        %v1574 = vmul.f32 %v1423, %v1298
        %v1575 = vmul.f32 %v1427, %v1299
        %v1576 = vmul.f32 %v1431, %v1296
        %v1577 = vmul.f32 %v1435, %v1297
        %v1578 = vmul.f32 %v1431, %v1298
        %v1579 = vmul.f32 %v1435, %v1299
        %v1580 = vmul.f32 %v1439, %v1296
        %v1581 = vmul.f32 %v1443, %v1297
        %v1582 = vmul.f32 %v1439, %v1298
        %v1583 = vmul.f32 %v1443, %v1299
        %v1584 = vmul.f32 %v1447, %v1296
        %v1585 = vmul.f32 %v1451, %v1297
        %v1586 = vmul.f32 %v1447, %v1298
        %v1587 = vmul.f32 %v1451, %v1299
        %v1588 = vmul.f32 %v1455, %v1296
        %v1589 = vmul.f32 %v1459, %v1297
        %v1590 = vmul.f32 %v1455, %v1298
        %v1591 = vmul.f32 %v1459, %v1299
        %v1592 = vmul.f32 %v1463, %v1296
        %v1593 = vmul.f32 %v1467, %v1297
        %v1594 = vmul.f32 %v1463, %v1298
        %v1595 = vmul.f32 %v1467, %v1299
        %v1596 = vmul.f32 %v1471, %v1296
        %v1597 = vmul.f32 %v1475, %v1297
        %v1598 = vmul.f32 %v1471, %v1298
        %v1599 = vmul.f32 %v1475, %v1299
        %v1600 = vmul.f32 %v1479, %v1296
        %v1601 = vmul.f32 %v1483, %v1297
        %v1602 = vmul.f32 %v1479, %v1298
        %v1603 = vmul.f32 %v1483, %v1299
        %v1604 = vmul.f32 %v1487, %v1296
        %v1605 = vmul.f32 %v1491, %v1297
        %v1606 = vmul.f32 %v1487, %v1298
        %v1607 = vmul.f32 %v1491, %v1299
        %v1608 = vmul.f32 %v1495, %v1296
        %v1609 = vmul.f32 %v1499, %v1297
        %v1610 = vmul.f32 %v1495, %v1298
        %v1611 = vmul.f32 %v1499, %v1299
        %v1612 = vmul.f32 %v1503, %v1296
        %v1613 = vmul.f32 %v1507, %v1297
        %v1614 = vmul.f32 %v1503, %v1298
        %v1615 = vmul.f32 %v1507, %v1299
        %v1616 = vmul.f32 %v1511, %v1296
        %v1617 = vmul.f32 %v1515, %v1297
        %v1618 = vmul.f32 %v1511, %v1298
        %v1619 = vmul.f32 %v1515, %v1299
        %v1620 = vmul.f32 %v1519, %v1296
        %v1621 = vmul.f32 %v1523, %v1297
        %v1622 = vmul.f32 %v1519, %v1298
        %v1623 = vmul.f32 %v1523, %v1299
        %v1624 = vmul.f32 %v1527, %v1296
        %v1625 = vmul.f32 %v1531, %v1297
        %v1626 = vmul.f32 %v1527, %v1298
        %v1627 = vmul.f32 %v1531, %v1299
        %v1628 = vpack.c.bf16 %v1566, %v1564
        %v1629 = vpack.c.bf16 %v1567, %v1565
        %v1630 = vpack.c.bf16 %v1570, %v1568
        %v1631 = vpack.c.bf16 %v1571, %v1569
        %v1632 = vpack.c.bf16 %v1574, %v1572
        %v1633 = vpack.c.bf16 %v1575, %v1573
        %v1634 = vpack.c.bf16 %v1578, %v1576
        %v1635 = vpack.c.bf16 %v1579, %v1577
        %v1636 = vpack.c.bf16 %v1582, %v1580
        %v1637 = vpack.c.bf16 %v1583, %v1581
        %v1638 = vpack.c.bf16 %v1586, %v1584
        %v1639 = vpack.c.bf16 %v1587, %v1585
        %v1640 = vpack.c.bf16 %v1590, %v1588
        %v1641 = vpack.c.bf16 %v1591, %v1589
        %v1642 = vpack.c.bf16 %v1594, %v1592
        %v1643 = vpack.c.bf16 %v1595, %v1593
        %v1644 = vpack.c.bf16 %v1598, %v1596
        %v1645 = vpack.c.bf16 %v1599, %v1597
        %v1646 = vpack.c.bf16 %v1602, %v1600
        %v1647 = vpack.c.bf16 %v1603, %v1601
        %v1648 = vpack.c.bf16 %v1606, %v1604
        %v1649 = vpack.c.bf16 %v1607, %v1605
        %v1650 = vpack.c.bf16 %v1610, %v1608
        %v1651 = vpack.c.bf16 %v1611, %v1609
        %v1652 = vpack.c.bf16 %v1614, %v1612
        %v1653 = vpack.c.bf16 %v1615, %v1613
        %v1654 = vpack.c.bf16 %v1618, %v1616
        %v1655 = vpack.c.bf16 %v1619, %v1617
        %v1656 = vpack.c.bf16 %v1622, %v1620
        %v1657 = vpack.c.bf16 %v1623, %v1621
        %v1658 = vpack.c.bf16 %v1626, %v1624
        %v1659 = vpack.c.bf16 %v1627, %v1625
        %1660 = vst [vmem:[#allocation2 + $0x20] sm:$0xff] %v1628
        %1661 = vst [vmem:[#allocation2 + $0x28] sm:$0xff] %v1629
        %1662 = vst [vmem:[#allocation2 + $0xb0] sm:$0xff] %v1630
        %1663 = vst [vmem:[#allocation2 + $0xb8] sm:$0xff] %v1631
        %1664 = vst [vmem:[#allocation2 + $0x140] sm:$0xff] %v1632
        %1665 = vst [vmem:[#allocation2 + $0x148] sm:$0xff] %v1633
        %1666 = vst [vmem:[#allocation2 + $0x1d0] sm:$0xff] %v1634
        %1667 = vst [vmem:[#allocation2 + $0x1d8] sm:$0xff] %v1635
        %1668 = vst [vmem:[#allocation2 + $0x260] sm:$0xff] %v1636
        %1669 = vst [vmem:[#allocation2 + $0x268] sm:$0xff] %v1637
        %1670 = vst [vmem:[#allocation2 + $0x2f0] sm:$0xff] %v1638
        %1671 = vst [vmem:[#allocation2 + $0x2f8] sm:$0xff] %v1639
        %1672 = vst [vmem:[#allocation2 + $0x380] sm:$0xff] %v1640
        %1673 = vst [vmem:[#allocation2 + $0x388] sm:$0xff] %v1641
        %1674 = vst [vmem:[#allocation2 + $0x410] sm:$0xff] %v1642
        %1675 = vst [vmem:[#allocation2 + $0x418] sm:$0xff] %v1643
        %1676 = vst [vmem:[#allocation2 + $0x4a0] sm:$0xff] %v1644
        %1677 = vst [vmem:[#allocation2 + $0x4a8] sm:$0xff] %v1645
        %1678 = vst [vmem:[#allocation2 + $0x530] sm:$0xff] %v1646
        %1679 = vst [vmem:[#allocation2 + $0x538] sm:$0xff] %v1647
        %1680 = vst [vmem:[#allocation2 + $0x5c0] sm:$0xff] %v1648
        %1681 = vst [vmem:[#allocation2 + $0x5c8] sm:$0xff] %v1649
        %1682 = vst [vmem:[#allocation2 + $0x650] sm:$0xff] %v1650
        %1683 = vst [vmem:[#allocation2 + $0x658] sm:$0xff] %v1651
        %1684 = vst [vmem:[#allocation2 + $0x6e0] sm:$0xff] %v1652
        %1685 = vst [vmem:[#allocation2 + $0x6e8] sm:$0xff] %v1653
        %1686 = vst [vmem:[#allocation2 + $0x770] sm:$0xff] %v1654
        %1687 = vst [vmem:[#allocation2 + $0x778] sm:$0xff] %v1655
        %1688 = vst [vmem:[#allocation2 + $0x800] sm:$0xff] %v1656
        %1689 = vst [vmem:[#allocation2 + $0x808] sm:$0xff] %v1657
        %1690 = vst [vmem:[#allocation2 + $0x890] sm:$0xff] %v1658
        %1691 = vst [vmem:[#allocation2 + $0x898] sm:$0xff] %v1659
        %s1692 = scalar_lea.vmem %s309, 6
        %v1693 = vld [vmem:[%s1692] ss:$8 sm:$0x3]
        %s1694 = scalar_lea.vmem %s309, 7
        %v1695 = vld [vmem:[%s1694] ss:$8 sm:$0x3]
        %v1696 = vadd.f32 %v325, 0.0
        %v1697 = vadd.f32 %v1696, %v1693
        %v1698 = vadd.f32 %v338, %v1695
        %v1700 = vlaneseq
        %v1701 = vshrl.u32 %v1700, 7
        %v1702 = vsub.s32 0, %v1701
        %v1703 = vrot.slane %v1697, %v1702
        %v1704 = vlaneseq
        %v1705 = vshrl.u32 %v1704, 7
        %v1706 = vsub.s32 1, %v1705
        %v1707 = vrot.slane %v1697, %v1706
        %v1710 = vsub.f32 %v331, %v1703
        %v1711 = vsub.f32 %v331, %v1707
        %v1712 = vsub.f32 %v332, %v1703
        %v1713 = vsub.f32 %v332, %v1707
        %v1714 = vand.u32 2147483647, %v1710
        %v1715 = vand.u32 2147483647, %v1711
        %v1716 = vand.u32 2147483647, %v1712
        %v1717 = vand.u32 2147483647, %v1713
        %v1718 = vsub.f32 1.0, %v1714
        %v1719 = vsub.f32 1.0, %v1715
        %v1720 = vsub.f32 1.0, %v1716
        %v1721 = vsub.f32 1.0, %v1717
        %v1722 = vmax.f32 %v1718, 0.0
        %v1723 = vmax.f32 %v1719, 0.0
        %v1724 = vmax.f32 %v1720, 0.0
        %v1725 = vmax.f32 %v1721, 0.0
        %v1727 = vlaneseq
        %v1728 = vshrl.u32 %v1727, 7
        %v1729 = vsub.s32 0, %v1728
        %v1730 = vrot.slane %v1698, %v1729
        %v1731 = vlaneseq
        %v1732 = vshrl.u32 %v1731, 7
        %v1733 = vsub.s32 1, %v1732
        %v1734 = vrot.slane %v1698, %v1733
        %v1737 = vsub.f32 %v331, %v1730
        %v1738 = vsub.f32 %v331, %v1734
        %v1739 = vsub.f32 %v332, %v1730
        %v1740 = vsub.f32 %v332, %v1734
        %v1741 = vand.u32 2147483647, %v1737
        %v1742 = vand.u32 2147483647, %v1738
        %v1743 = vand.u32 2147483647, %v1739
        %v1744 = vand.u32 2147483647, %v1740
        %v1745 = vsub.f32 1.0, %v1741
        %v1746 = vsub.f32 1.0, %v1742
        %v1747 = vsub.f32 1.0, %v1743
        %v1748 = vsub.f32 1.0, %v1744
        %v1749 = vmax.f32 %v1745, 0.0
        %v1750 = vmax.f32 %v1746, 0.0
        %v1751 = vmax.f32 %v1747, 0.0
        %v1752 = vmax.f32 %v1748, 0.0
        %v1757 = vcombine.low %v1722, %v1723
        %v1758 = vcombine.high %v1722, %v1723
        %v1760 = vunpack.c.l.s4 1966171168
        %v1761 = vunpack.c.0.s8 %v1760
        %v1762 = vlaneseq
        %v1763 = vshrl.u32 %v1762, 7
        %v1764 = vsub.s32 %v1761, %v1763
        %v1765 = vrot.slane %v1757, %v1764
        %v1767 = vunpack.c.l.s4 1966171168
        %v1768 = vunpack.c.0.s8 %v1767
        %v1769 = vlaneseq
        %v1770 = vshrl.u32 %v1769, 7
        %v1771 = vsub.s32 %v1768, %v1770
        %v1772 = vrot.slane %v1758, %v1771
        %v1773 = vcombine.high %v1765, %v1765
        %v1774 = vcombine.high %v1772, %v1772
        %v1776 = vunpack.c.l.s4 1966171168
        %v1777 = vunpack.c.0.s8 %v1776
        %v1778 = vlaneseq
        %v1779 = vshrl.u32 %v1778, 7
        %v1780 = vsub.s32 %v1777, %v1779
        %v1781 = vrot.slane %v1765, %v1780
        %v1783 = vunpack.c.l.s4 1966171168
        %v1784 = vunpack.c.0.s8 %v1783
        %v1785 = vlaneseq
        %v1786 = vshrl.u32 %v1785, 7
        %v1787 = vsub.s32 %v1784, %v1786
        %v1788 = vrot.slane %v1772, %v1787
        %v1790 = vunpack.c.l.s4 1966171168
        %v1791 = vunpack.c.0.s8 %v1790
        %v1792 = vlaneseq
        %v1793 = vshrl.u32 %v1792, 7
        %v1794 = vsub.s32 %v1791, %v1793
        %v1795 = vrot.slane %v1773, %v1794
        %v1797 = vunpack.c.l.s4 1966171168
        %v1798 = vunpack.c.0.s8 %v1797
        %v1799 = vlaneseq
        %v1800 = vshrl.u32 %v1799, 7
        %v1801 = vsub.s32 %v1798, %v1800
        %v1802 = vrot.slane %v1774, %v1801
        %v1803 = vcombine.high %v1781, %v1781
        %v1804 = vcombine.high %v1788, %v1788
        %v1805 = vcombine.high %v1795, %v1795
        %v1806 = vcombine.high %v1802, %v1802
        %v1807 = vcombine.low %v1724, %v1725
        %v1808 = vcombine.high %v1724, %v1725
        %v1810 = vunpack.c.l.s4 1966171168
        %v1811 = vunpack.c.0.s8 %v1810
        %v1812 = vlaneseq
        %v1813 = vshrl.u32 %v1812, 7
        %v1814 = vsub.s32 %v1811, %v1813
        %v1815 = vrot.slane %v1807, %v1814
        %v1817 = vunpack.c.l.s4 1966171168
        %v1818 = vunpack.c.0.s8 %v1817
        %v1819 = vlaneseq
        %v1820 = vshrl.u32 %v1819, 7
        %v1821 = vsub.s32 %v1818, %v1820
        %v1822 = vrot.slane %v1808, %v1821
        %v1823 = vcombine.high %v1815, %v1815
        %v1824 = vcombine.high %v1822, %v1822
        %v1826 = vunpack.c.l.s4 1966171168
        %v1827 = vunpack.c.0.s8 %v1826
        %v1828 = vlaneseq
        %v1829 = vshrl.u32 %v1828, 7
        %v1830 = vsub.s32 %v1827, %v1829
        %v1831 = vrot.slane %v1815, %v1830
        %v1833 = vunpack.c.l.s4 1966171168
        %v1834 = vunpack.c.0.s8 %v1833
        %v1835 = vlaneseq
        %v1836 = vshrl.u32 %v1835, 7
        %v1837 = vsub.s32 %v1834, %v1836
        %v1838 = vrot.slane %v1822, %v1837
        %v1840 = vunpack.c.l.s4 1966171168
        %v1841 = vunpack.c.0.s8 %v1840
        %v1842 = vlaneseq
        %v1843 = vshrl.u32 %v1842, 7
        %v1844 = vsub.s32 %v1841, %v1843
        %v1845 = vrot.slane %v1823, %v1844
        %v1847 = vunpack.c.l.s4 1966171168
        %v1848 = vunpack.c.0.s8 %v1847
        %v1849 = vlaneseq
        %v1850 = vshrl.u32 %v1849, 7
        %v1851 = vsub.s32 %v1848, %v1850
        %v1852 = vrot.slane %v1824, %v1851
        %v1853 = vcombine.high %v1831, %v1831
        %v1854 = vcombine.high %v1838, %v1838
        %v1855 = vcombine.high %v1845, %v1845
        %v1856 = vcombine.high %v1852, %v1852
        %v1857 = vlaneseq
        %v1858 = vshrl.u32 %v1857, 7
        %v1859 = vsub.s32 0, %v1858
        %v1860 = vrot.slane %v1781, %v1859
        %v1861 = vlaneseq
        %v1862 = vshrl.u32 %v1861, 7
        %v1863 = vsub.s32 1, %v1862
        %v1864 = vrot.slane %v1781, %v1863
        %v1865 = vlaneseq
        %v1866 = vshrl.u32 %v1865, 7
        %v1867 = vsub.s32 0, %v1866
        %v1868 = vrot.slane %v1795, %v1867
        %v1869 = vlaneseq
        %v1870 = vshrl.u32 %v1869, 7
        %v1871 = vsub.s32 1, %v1870
        %v1872 = vrot.slane %v1795, %v1871
        %v1873 = vlaneseq
        %v1874 = vshrl.u32 %v1873, 7
        %v1875 = vsub.s32 0, %v1874
        %v1876 = vrot.slane %v1803, %v1875
        %v1877 = vlaneseq
        %v1878 = vshrl.u32 %v1877, 7
        %v1879 = vsub.s32 1, %v1878
        %v1880 = vrot.slane %v1803, %v1879
        %v1881 = vlaneseq
        %v1882 = vshrl.u32 %v1881, 7
        %v1883 = vsub.s32 0, %v1882
        %v1884 = vrot.slane %v1805, %v1883
        %v1885 = vlaneseq
        %v1886 = vshrl.u32 %v1885, 7
        %v1887 = vsub.s32 1, %v1886
        %v1888 = vrot.slane %v1805, %v1887
        %v1889 = vlaneseq
        %v1890 = vshrl.u32 %v1889, 7
        %v1891 = vsub.s32 0, %v1890
        %v1892 = vrot.slane %v1788, %v1891
        %v1893 = vlaneseq
        %v1894 = vshrl.u32 %v1893, 7
        %v1895 = vsub.s32 1, %v1894
        %v1896 = vrot.slane %v1788, %v1895
        %v1897 = vlaneseq
        %v1898 = vshrl.u32 %v1897, 7
        %v1899 = vsub.s32 0, %v1898
        %v1900 = vrot.slane %v1802, %v1899
        %v1901 = vlaneseq
        %v1902 = vshrl.u32 %v1901, 7
        %v1903 = vsub.s32 1, %v1902
        %v1904 = vrot.slane %v1802, %v1903
        %v1905 = vlaneseq
        %v1906 = vshrl.u32 %v1905, 7
        %v1907 = vsub.s32 0, %v1906
        %v1908 = vrot.slane %v1804, %v1907
        %v1909 = vlaneseq
        %v1910 = vshrl.u32 %v1909, 7
        %v1911 = vsub.s32 1, %v1910
        %v1912 = vrot.slane %v1804, %v1911
        %v1913 = vlaneseq
        %v1914 = vshrl.u32 %v1913, 7
        %v1915 = vsub.s32 0, %v1914
        %v1916 = vrot.slane %v1806, %v1915
        %v1917 = vlaneseq
        %v1918 = vshrl.u32 %v1917, 7
        %v1919 = vsub.s32 1, %v1918
        %v1920 = vrot.slane %v1806, %v1919
        %v1921 = vlaneseq
        %v1922 = vshrl.u32 %v1921, 7
        %v1923 = vsub.s32 0, %v1922
        %v1924 = vrot.slane %v1831, %v1923
        %v1925 = vlaneseq
        %v1926 = vshrl.u32 %v1925, 7
        %v1927 = vsub.s32 1, %v1926
        %v1928 = vrot.slane %v1831, %v1927
        %v1929 = vlaneseq
        %v1930 = vshrl.u32 %v1929, 7
        %v1931 = vsub.s32 0, %v1930
        %v1932 = vrot.slane %v1845, %v1931
        %v1933 = vlaneseq
        %v1934 = vshrl.u32 %v1933, 7
        %v1935 = vsub.s32 1, %v1934
        %v1936 = vrot.slane %v1845, %v1935
        %v1937 = vlaneseq
        %v1938 = vshrl.u32 %v1937, 7
        %v1939 = vsub.s32 0, %v1938
        %v1940 = vrot.slane %v1853, %v1939
        %v1941 = vlaneseq
        %v1942 = vshrl.u32 %v1941, 7
        %v1943 = vsub.s32 1, %v1942
        %v1944 = vrot.slane %v1853, %v1943
        %v1945 = vlaneseq
        %v1946 = vshrl.u32 %v1945, 7
        %v1947 = vsub.s32 0, %v1946
        %v1948 = vrot.slane %v1855, %v1947
        %v1949 = vlaneseq
        %v1950 = vshrl.u32 %v1949, 7
        %v1951 = vsub.s32 1, %v1950
        %v1952 = vrot.slane %v1855, %v1951
        %v1953 = vlaneseq
        %v1954 = vshrl.u32 %v1953, 7
        %v1955 = vsub.s32 0, %v1954
        %v1956 = vrot.slane %v1838, %v1955
        %v1957 = vlaneseq
        %v1958 = vshrl.u32 %v1957, 7
        %v1959 = vsub.s32 1, %v1958
        %v1960 = vrot.slane %v1838, %v1959
        %v1961 = vlaneseq
        %v1962 = vshrl.u32 %v1961, 7
        %v1963 = vsub.s32 0, %v1962
        %v1964 = vrot.slane %v1852, %v1963
        %v1965 = vlaneseq
        %v1966 = vshrl.u32 %v1965, 7
        %v1967 = vsub.s32 1, %v1966
        %v1968 = vrot.slane %v1852, %v1967
        %v1969 = vlaneseq
        %v1970 = vshrl.u32 %v1969, 7
        %v1971 = vsub.s32 0, %v1970
        %v1972 = vrot.slane %v1854, %v1971
        %v1973 = vlaneseq
        %v1974 = vshrl.u32 %v1973, 7
        %v1975 = vsub.s32 1, %v1974
        %v1976 = vrot.slane %v1854, %v1975
        %v1977 = vlaneseq
        %v1978 = vshrl.u32 %v1977, 7
        %v1979 = vsub.s32 0, %v1978
        %v1980 = vrot.slane %v1856, %v1979
        %v1981 = vlaneseq
        %v1982 = vshrl.u32 %v1981, 7
        %v1983 = vsub.s32 1, %v1982
        %v1984 = vrot.slane %v1856, %v1983
        %v2017 = vmul.f32 %v1860, %v1749
        %v2018 = vmul.f32 %v1864, %v1750
        %v2019 = vmul.f32 %v1860, %v1751
        %v2020 = vmul.f32 %v1864, %v1752
        %v2021 = vmul.f32 %v1868, %v1749
        %v2022 = vmul.f32 %v1872, %v1750
        %v2023 = vmul.f32 %v1868, %v1751
        %v2024 = vmul.f32 %v1872, %v1752
        %v2025 = vmul.f32 %v1876, %v1749
        %v2026 = vmul.f32 %v1880, %v1750
        %v2027 = vmul.f32 %v1876, %v1751
        %v2028 = vmul.f32 %v1880, %v1752
        %v2029 = vmul.f32 %v1884, %v1749
        %v2030 = vmul.f32 %v1888, %v1750
        %v2031 = vmul.f32 %v1884, %v1751
        %v2032 = vmul.f32 %v1888, %v1752
        %v2033 = vmul.f32 %v1892, %v1749
        %v2034 = vmul.f32 %v1896, %v1750
        %v2035 = vmul.f32 %v1892, %v1751
        %v2036 = vmul.f32 %v1896, %v1752
        %v2037 = vmul.f32 %v1900, %v1749
        %v2038 = vmul.f32 %v1904, %v1750
        %v2039 = vmul.f32 %v1900, %v1751
        %v2040 = vmul.f32 %v1904, %v1752
        %v2041 = vmul.f32 %v1908, %v1749
        %v2042 = vmul.f32 %v1912, %v1750
        %v2043 = vmul.f32 %v1908, %v1751
        %v2044 = vmul.f32 %v1912, %v1752
        %v2045 = vmul.f32 %v1916, %v1749
        %v2046 = vmul.f32 %v1920, %v1750
        %v2047 = vmul.f32 %v1916, %v1751
        %v2048 = vmul.f32 %v1920, %v1752
        %v2049 = vmul.f32 %v1924, %v1749
        %v2050 = vmul.f32 %v1928, %v1750
        %v2051 = vmul.f32 %v1924, %v1751
        %v2052 = vmul.f32 %v1928, %v1752
        %v2053 = vmul.f32 %v1932, %v1749
        %v2054 = vmul.f32 %v1936, %v1750
        %v2055 = vmul.f32 %v1932, %v1751
        %v2056 = vmul.f32 %v1936, %v1752
        %v2057 = vmul.f32 %v1940, %v1749
        %v2058 = vmul.f32 %v1944, %v1750
        %v2059 = vmul.f32 %v1940, %v1751
        %v2060 = vmul.f32 %v1944, %v1752
        %v2061 = vmul.f32 %v1948, %v1749
        %v2062 = vmul.f32 %v1952, %v1750
        %v2063 = vmul.f32 %v1948, %v1751
        %v2064 = vmul.f32 %v1952, %v1752
        %v2065 = vmul.f32 %v1956, %v1749
        %v2066 = vmul.f32 %v1960, %v1750
        %v2067 = vmul.f32 %v1956, %v1751
        %v2068 = vmul.f32 %v1960, %v1752
        %v2069 = vmul.f32 %v1964, %v1749
        %v2070 = vmul.f32 %v1968, %v1750
        %v2071 = vmul.f32 %v1964, %v1751
        %v2072 = vmul.f32 %v1968, %v1752
        %v2073 = vmul.f32 %v1972, %v1749
        %v2074 = vmul.f32 %v1976, %v1750
        %v2075 = vmul.f32 %v1972, %v1751
        %v2076 = vmul.f32 %v1976, %v1752
        %v2077 = vmul.f32 %v1980, %v1749
        %v2078 = vmul.f32 %v1984, %v1750
        %v2079 = vmul.f32 %v1980, %v1751
        %v2080 = vmul.f32 %v1984, %v1752
        %v2081 = vpack.c.bf16 %v2019, %v2017
        %v2082 = vpack.c.bf16 %v2020, %v2018
        %v2083 = vpack.c.bf16 %v2023, %v2021
        %v2084 = vpack.c.bf16 %v2024, %v2022
        %v2085 = vpack.c.bf16 %v2027, %v2025
        %v2086 = vpack.c.bf16 %v2028, %v2026
        %v2087 = vpack.c.bf16 %v2031, %v2029
        %v2088 = vpack.c.bf16 %v2032, %v2030
        %v2089 = vpack.c.bf16 %v2035, %v2033
        %v2090 = vpack.c.bf16 %v2036, %v2034
        %v2091 = vpack.c.bf16 %v2039, %v2037
        %v2092 = vpack.c.bf16 %v2040, %v2038
        %v2093 = vpack.c.bf16 %v2043, %v2041
        %v2094 = vpack.c.bf16 %v2044, %v2042
        %v2095 = vpack.c.bf16 %v2047, %v2045
        %v2096 = vpack.c.bf16 %v2048, %v2046
        %v2097 = vpack.c.bf16 %v2051, %v2049
        %v2098 = vpack.c.bf16 %v2052, %v2050
        %v2099 = vpack.c.bf16 %v2055, %v2053
        %v2100 = vpack.c.bf16 %v2056, %v2054
        %v2101 = vpack.c.bf16 %v2059, %v2057
        %v2102 = vpack.c.bf16 %v2060, %v2058
        %v2103 = vpack.c.bf16 %v2063, %v2061
        %v2104 = vpack.c.bf16 %v2064, %v2062
        %v2105 = vpack.c.bf16 %v2067, %v2065
        %v2106 = vpack.c.bf16 %v2068, %v2066
        %v2107 = vpack.c.bf16 %v2071, %v2069
        %v2108 = vpack.c.bf16 %v2072, %v2070
        %v2109 = vpack.c.bf16 %v2075, %v2073
        %v2110 = vpack.c.bf16 %v2076, %v2074
        %v2111 = vpack.c.bf16 %v2079, %v2077
        %v2112 = vpack.c.bf16 %v2080, %v2078
        %2113 = vst [vmem:[#allocation2 + $0x30] sm:$0xff] %v2081
        %2114 = vst [vmem:[#allocation2 + $0x38] sm:$0xff] %v2082
        %2115 = vst [vmem:[#allocation2 + $0xc0] sm:$0xff] %v2083
        %2116 = vst [vmem:[#allocation2 + $0xc8] sm:$0xff] %v2084
        %2117 = vst [vmem:[#allocation2 + $0x150] sm:$0xff] %v2085
        %2118 = vst [vmem:[#allocation2 + $0x158] sm:$0xff] %v2086
        %2119 = vst [vmem:[#allocation2 + $0x1e0] sm:$0xff] %v2087
        %2120 = vst [vmem:[#allocation2 + $0x1e8] sm:$0xff] %v2088
        %2121 = vst [vmem:[#allocation2 + $0x270] sm:$0xff] %v2089
        %2122 = vst [vmem:[#allocation2 + $0x278] sm:$0xff] %v2090
        %2123 = vst [vmem:[#allocation2 + $0x300] sm:$0xff] %v2091
        %2124 = vst [vmem:[#allocation2 + $0x308] sm:$0xff] %v2092
        %2125 = vst [vmem:[#allocation2 + $0x390] sm:$0xff] %v2093
        %2126 = vst [vmem:[#allocation2 + $0x398] sm:$0xff] %v2094
        %2127 = vst [vmem:[#allocation2 + $0x420] sm:$0xff] %v2095
        %2128 = vst [vmem:[#allocation2 + $0x428] sm:$0xff] %v2096
        %2129 = vst [vmem:[#allocation2 + $0x4b0] sm:$0xff] %v2097
        %2130 = vst [vmem:[#allocation2 + $0x4b8] sm:$0xff] %v2098
        %2131 = vst [vmem:[#allocation2 + $0x540] sm:$0xff] %v2099
        %2132 = vst [vmem:[#allocation2 + $0x548] sm:$0xff] %v2100
        %2133 = vst [vmem:[#allocation2 + $0x5d0] sm:$0xff] %v2101
        %2134 = vst [vmem:[#allocation2 + $0x5d8] sm:$0xff] %v2102
        %2135 = vst [vmem:[#allocation2 + $0x660] sm:$0xff] %v2103
        %2136 = vst [vmem:[#allocation2 + $0x668] sm:$0xff] %v2104
        %2137 = vst [vmem:[#allocation2 + $0x6f0] sm:$0xff] %v2105
        %2138 = vst [vmem:[#allocation2 + $0x6f8] sm:$0xff] %v2106
        %2139 = vst [vmem:[#allocation2 + $0x780] sm:$0xff] %v2107
        %2140 = vst [vmem:[#allocation2 + $0x788] sm:$0xff] %v2108
        %2141 = vst [vmem:[#allocation2 + $0x810] sm:$0xff] %v2109
        %2142 = vst [vmem:[#allocation2 + $0x818] sm:$0xff] %v2110
        %2143 = vst [vmem:[#allocation2 + $0x8a0] sm:$0xff] %v2111
        %2144 = vst [vmem:[#allocation2 + $0x8a8] sm:$0xff] %v2112
        %s2145 = scalar_lea.vmem %s309, 16
        %v2146 = vld [vmem:[%s2145] ss:$8 sm:$0x3]
        %s2147 = scalar_lea.vmem %s309, 17
        %v2148 = vld [vmem:[%s2147] ss:$8 sm:$0x3]
        %v2149 = vadd.f32 %v1696, %v2146
        %v2150 = vadd.f32 %v791, %v2148
        %v2152 = vlaneseq
        %v2153 = vshrl.u32 %v2152, 7
        %v2154 = vsub.s32 0, %v2153
        %v2155 = vrot.slane %v2149, %v2154
        %v2156 = vlaneseq
        %v2157 = vshrl.u32 %v2156, 7
        %v2158 = vsub.s32 1, %v2157
        %v2159 = vrot.slane %v2149, %v2158
        %v2162 = vsub.f32 %v331, %v2155
        %v2163 = vsub.f32 %v331, %v2159
        %v2164 = vsub.f32 %v332, %v2155
        %v2165 = vsub.f32 %v332, %v2159
        %v2166 = vand.u32 2147483647, %v2162
        %v2167 = vand.u32 2147483647, %v2163
        %v2168 = vand.u32 2147483647, %v2164
        %v2169 = vand.u32 2147483647, %v2165
        %v2170 = vsub.f32 1.0, %v2166
        %v2171 = vsub.f32 1.0, %v2167
        %v2172 = vsub.f32 1.0, %v2168
        %v2173 = vsub.f32 1.0, %v2169
        %v2174 = vmax.f32 %v2170, 0.0
        %v2175 = vmax.f32 %v2171, 0.0
        %v2176 = vmax.f32 %v2172, 0.0
        %v2177 = vmax.f32 %v2173, 0.0
        %v2179 = vlaneseq
        %v2180 = vshrl.u32 %v2179, 7
        %v2181 = vsub.s32 0, %v2180
        %v2182 = vrot.slane %v2150, %v2181
        %v2183 = vlaneseq
        %v2184 = vshrl.u32 %v2183, 7
        %v2185 = vsub.s32 1, %v2184
        %v2186 = vrot.slane %v2150, %v2185
        %v2189 = vsub.f32 %v331, %v2182
        %v2190 = vsub.f32 %v331, %v2186
        %v2191 = vsub.f32 %v332, %v2182
        %v2192 = vsub.f32 %v332, %v2186
        %v2193 = vand.u32 2147483647, %v2189
        %v2194 = vand.u32 2147483647, %v2190
        %v2195 = vand.u32 2147483647, %v2191
        %v2196 = vand.u32 2147483647, %v2192
        %v2197 = vsub.f32 1.0, %v2193
        %v2198 = vsub.f32 1.0, %v2194
        %v2199 = vsub.f32 1.0, %v2195
        %v2200 = vsub.f32 1.0, %v2196
        %v2201 = vmax.f32 %v2197, 0.0
        %v2202 = vmax.f32 %v2198, 0.0
        %v2203 = vmax.f32 %v2199, 0.0
        %v2204 = vmax.f32 %v2200, 0.0
        %v2209 = vcombine.low %v2174, %v2175
        %v2210 = vcombine.high %v2174, %v2175
        %v2212 = vunpack.c.l.s4 1966171168
        %v2213 = vunpack.c.0.s8 %v2212
        %v2214 = vlaneseq
        %v2215 = vshrl.u32 %v2214, 7
        %v2216 = vsub.s32 %v2213, %v2215
        %v2217 = vrot.slane %v2209, %v2216
        %v2219 = vunpack.c.l.s4 1966171168
        %v2220 = vunpack.c.0.s8 %v2219
        %v2221 = vlaneseq
        %v2222 = vshrl.u32 %v2221, 7
        %v2223 = vsub.s32 %v2220, %v2222
        %v2224 = vrot.slane %v2210, %v2223
        %v2225 = vcombine.high %v2217, %v2217
        %v2226 = vcombine.high %v2224, %v2224
        %v2228 = vunpack.c.l.s4 1966171168
        %v2229 = vunpack.c.0.s8 %v2228
        %v2230 = vlaneseq
        %v2231 = vshrl.u32 %v2230, 7
        %v2232 = vsub.s32 %v2229, %v2231
        %v2233 = vrot.slane %v2217, %v2232
        %v2235 = vunpack.c.l.s4 1966171168
        %v2236 = vunpack.c.0.s8 %v2235
        %v2237 = vlaneseq
        %v2238 = vshrl.u32 %v2237, 7
        %v2239 = vsub.s32 %v2236, %v2238
        %v2240 = vrot.slane %v2224, %v2239
        %v2242 = vunpack.c.l.s4 1966171168
        %v2243 = vunpack.c.0.s8 %v2242
        %v2244 = vlaneseq
        %v2245 = vshrl.u32 %v2244, 7
        %v2246 = vsub.s32 %v2243, %v2245
        %v2247 = vrot.slane %v2225, %v2246
        %v2249 = vunpack.c.l.s4 1966171168
        %v2250 = vunpack.c.0.s8 %v2249
        %v2251 = vlaneseq
        %v2252 = vshrl.u32 %v2251, 7
        %v2253 = vsub.s32 %v2250, %v2252
        %v2254 = vrot.slane %v2226, %v2253
        %v2255 = vcombine.high %v2233, %v2233
        %v2256 = vcombine.high %v2240, %v2240
        %v2257 = vcombine.high %v2247, %v2247
        %v2258 = vcombine.high %v2254, %v2254
        %v2259 = vcombine.low %v2176, %v2177
        %v2260 = vcombine.high %v2176, %v2177
        %v2262 = vunpack.c.l.s4 1966171168
        %v2263 = vunpack.c.0.s8 %v2262
        %v2264 = vlaneseq
        %v2265 = vshrl.u32 %v2264, 7
        %v2266 = vsub.s32 %v2263, %v2265
        %v2267 = vrot.slane %v2259, %v2266
        %v2269 = vunpack.c.l.s4 1966171168
        %v2270 = vunpack.c.0.s8 %v2269
        %v2271 = vlaneseq
        %v2272 = vshrl.u32 %v2271, 7
        %v2273 = vsub.s32 %v2270, %v2272
        %v2274 = vrot.slane %v2260, %v2273
        %v2275 = vcombine.high %v2267, %v2267
        %v2276 = vcombine.high %v2274, %v2274
        %v2278 = vunpack.c.l.s4 1966171168
        %v2279 = vunpack.c.0.s8 %v2278
        %v2280 = vlaneseq
        %v2281 = vshrl.u32 %v2280, 7
        %v2282 = vsub.s32 %v2279, %v2281
        %v2283 = vrot.slane %v2267, %v2282
        %v2285 = vunpack.c.l.s4 1966171168
        %v2286 = vunpack.c.0.s8 %v2285
        %v2287 = vlaneseq
        %v2288 = vshrl.u32 %v2287, 7
        %v2289 = vsub.s32 %v2286, %v2288
        %v2290 = vrot.slane %v2274, %v2289
        %v2292 = vunpack.c.l.s4 1966171168
        %v2293 = vunpack.c.0.s8 %v2292
        %v2294 = vlaneseq
        %v2295 = vshrl.u32 %v2294, 7
        %v2296 = vsub.s32 %v2293, %v2295
        %v2297 = vrot.slane %v2275, %v2296
        %v2299 = vunpack.c.l.s4 1966171168
        %v2300 = vunpack.c.0.s8 %v2299
        %v2301 = vlaneseq
        %v2302 = vshrl.u32 %v2301, 7
        %v2303 = vsub.s32 %v2300, %v2302
        %v2304 = vrot.slane %v2276, %v2303
        %v2305 = vcombine.high %v2283, %v2283
        %v2306 = vcombine.high %v2290, %v2290
        %v2307 = vcombine.high %v2297, %v2297
        %v2308 = vcombine.high %v2304, %v2304
        %v2309 = vlaneseq
        %v2310 = vshrl.u32 %v2309, 7
        %v2311 = vsub.s32 0, %v2310
        %v2312 = vrot.slane %v2233, %v2311
        %v2313 = vlaneseq
        %v2314 = vshrl.u32 %v2313, 7
        %v2315 = vsub.s32 1, %v2314
        %v2316 = vrot.slane %v2233, %v2315
        %v2317 = vlaneseq
        %v2318 = vshrl.u32 %v2317, 7
        %v2319 = vsub.s32 0, %v2318
        %v2320 = vrot.slane %v2247, %v2319
        %v2321 = vlaneseq
        %v2322 = vshrl.u32 %v2321, 7
        %v2323 = vsub.s32 1, %v2322
        %v2324 = vrot.slane %v2247, %v2323
        %v2325 = vlaneseq
        %v2326 = vshrl.u32 %v2325, 7
        %v2327 = vsub.s32 0, %v2326
        %v2328 = vrot.slane %v2255, %v2327
        %v2329 = vlaneseq
        %v2330 = vshrl.u32 %v2329, 7
        %v2331 = vsub.s32 1, %v2330
        %v2332 = vrot.slane %v2255, %v2331
        %v2333 = vlaneseq
        %v2334 = vshrl.u32 %v2333, 7
        %v2335 = vsub.s32 0, %v2334
        %v2336 = vrot.slane %v2257, %v2335
        %v2337 = vlaneseq
        %v2338 = vshrl.u32 %v2337, 7
        %v2339 = vsub.s32 1, %v2338
        %v2340 = vrot.slane %v2257, %v2339
        %v2341 = vlaneseq
        %v2342 = vshrl.u32 %v2341, 7
        %v2343 = vsub.s32 0, %v2342
        %v2344 = vrot.slane %v2240, %v2343
        %v2345 = vlaneseq
        %v2346 = vshrl.u32 %v2345, 7
        %v2347 = vsub.s32 1, %v2346
        %v2348 = vrot.slane %v2240, %v2347
        %v2349 = vlaneseq
        %v2350 = vshrl.u32 %v2349, 7
        %v2351 = vsub.s32 0, %v2350
        %v2352 = vrot.slane %v2254, %v2351
        %v2353 = vlaneseq
        %v2354 = vshrl.u32 %v2353, 7
        %v2355 = vsub.s32 1, %v2354
        %v2356 = vrot.slane %v2254, %v2355
        %v2357 = vlaneseq
        %v2358 = vshrl.u32 %v2357, 7
        %v2359 = vsub.s32 0, %v2358
        %v2360 = vrot.slane %v2256, %v2359
        %v2361 = vlaneseq
        %v2362 = vshrl.u32 %v2361, 7
        %v2363 = vsub.s32 1, %v2362
        %v2364 = vrot.slane %v2256, %v2363
        %v2365 = vlaneseq
        %v2366 = vshrl.u32 %v2365, 7
        %v2367 = vsub.s32 0, %v2366
        %v2368 = vrot.slane %v2258, %v2367
        %v2369 = vlaneseq
        %v2370 = vshrl.u32 %v2369, 7
        %v2371 = vsub.s32 1, %v2370
        %v2372 = vrot.slane %v2258, %v2371
        %v2373 = vlaneseq
        %v2374 = vshrl.u32 %v2373, 7
        %v2375 = vsub.s32 0, %v2374
        %v2376 = vrot.slane %v2283, %v2375
        %v2377 = vlaneseq
        %v2378 = vshrl.u32 %v2377, 7
        %v2379 = vsub.s32 1, %v2378
        %v2380 = vrot.slane %v2283, %v2379
        %v2381 = vlaneseq
        %v2382 = vshrl.u32 %v2381, 7
        %v2383 = vsub.s32 0, %v2382
        %v2384 = vrot.slane %v2297, %v2383
        %v2385 = vlaneseq
        %v2386 = vshrl.u32 %v2385, 7
        %v2387 = vsub.s32 1, %v2386
        %v2388 = vrot.slane %v2297, %v2387
        %v2389 = vlaneseq
        %v2390 = vshrl.u32 %v2389, 7
        %v2391 = vsub.s32 0, %v2390
        %v2392 = vrot.slane %v2305, %v2391
        %v2393 = vlaneseq
        %v2394 = vshrl.u32 %v2393, 7
        %v2395 = vsub.s32 1, %v2394
        %v2396 = vrot.slane %v2305, %v2395
        %v2397 = vlaneseq
        %v2398 = vshrl.u32 %v2397, 7
        %v2399 = vsub.s32 0, %v2398
        %v2400 = vrot.slane %v2307, %v2399
        %v2401 = vlaneseq
        %v2402 = vshrl.u32 %v2401, 7
        %v2403 = vsub.s32 1, %v2402
        %v2404 = vrot.slane %v2307, %v2403
        %v2405 = vlaneseq
        %v2406 = vshrl.u32 %v2405, 7
        %v2407 = vsub.s32 0, %v2406
        %v2408 = vrot.slane %v2290, %v2407
        %v2409 = vlaneseq
        %v2410 = vshrl.u32 %v2409, 7
        %v2411 = vsub.s32 1, %v2410
        %v2412 = vrot.slane %v2290, %v2411
        %v2413 = vlaneseq
        %v2414 = vshrl.u32 %v2413, 7
        %v2415 = vsub.s32 0, %v2414
        %v2416 = vrot.slane %v2304, %v2415
        %v2417 = vlaneseq
        %v2418 = vshrl.u32 %v2417, 7
        %v2419 = vsub.s32 1, %v2418
        %v2420 = vrot.slane %v2304, %v2419
        %v2421 = vlaneseq
        %v2422 = vshrl.u32 %v2421, 7
        %v2423 = vsub.s32 0, %v2422
        %v2424 = vrot.slane %v2306, %v2423
        %v2425 = vlaneseq
        %v2426 = vshrl.u32 %v2425, 7
        %v2427 = vsub.s32 1, %v2426
        %v2428 = vrot.slane %v2306, %v2427
        %v2429 = vlaneseq
        %v2430 = vshrl.u32 %v2429, 7
        %v2431 = vsub.s32 0, %v2430
        %v2432 = vrot.slane %v2308, %v2431
        %v2433 = vlaneseq
        %v2434 = vshrl.u32 %v2433, 7
        %v2435 = vsub.s32 1, %v2434
        %v2436 = vrot.slane %v2308, %v2435
        %v2469 = vmul.f32 %v2312, %v2201
        %v2470 = vmul.f32 %v2316, %v2202
        %v2471 = vmul.f32 %v2312, %v2203
        %v2472 = vmul.f32 %v2316, %v2204
        %v2473 = vmul.f32 %v2320, %v2201
        %v2474 = vmul.f32 %v2324, %v2202
        %v2475 = vmul.f32 %v2320, %v2203
        %v2476 = vmul.f32 %v2324, %v2204
        %v2477 = vmul.f32 %v2328, %v2201
        %v2478 = vmul.f32 %v2332, %v2202
        %v2479 = vmul.f32 %v2328, %v2203
        %v2480 = vmul.f32 %v2332, %v2204
        %v2481 = vmul.f32 %v2336, %v2201
        %v2482 = vmul.f32 %v2340, %v2202
        %v2483 = vmul.f32 %v2336, %v2203
        %v2484 = vmul.f32 %v2340, %v2204
        %v2485 = vmul.f32 %v2344, %v2201
        %v2486 = vmul.f32 %v2348, %v2202
        %v2487 = vmul.f32 %v2344, %v2203
        %v2488 = vmul.f32 %v2348, %v2204
        %v2489 = vmul.f32 %v2352, %v2201
        %v2490 = vmul.f32 %v2356, %v2202
        %v2491 = vmul.f32 %v2352, %v2203
        %v2492 = vmul.f32 %v2356, %v2204
        %v2493 = vmul.f32 %v2360, %v2201
        %v2494 = vmul.f32 %v2364, %v2202
        %v2495 = vmul.f32 %v2360, %v2203
        %v2496 = vmul.f32 %v2364, %v2204
        %v2497 = vmul.f32 %v2368, %v2201
        %v2498 = vmul.f32 %v2372, %v2202
        %v2499 = vmul.f32 %v2368, %v2203
        %v2500 = vmul.f32 %v2372, %v2204
        %v2501 = vmul.f32 %v2376, %v2201
        %v2502 = vmul.f32 %v2380, %v2202
        %v2503 = vmul.f32 %v2376, %v2203
        %v2504 = vmul.f32 %v2380, %v2204
        %v2505 = vmul.f32 %v2384, %v2201
        %v2506 = vmul.f32 %v2388, %v2202
        %v2507 = vmul.f32 %v2384, %v2203
        %v2508 = vmul.f32 %v2388, %v2204
        %v2509 = vmul.f32 %v2392, %v2201
        %v2510 = vmul.f32 %v2396, %v2202
        %v2511 = vmul.f32 %v2392, %v2203
        %v2512 = vmul.f32 %v2396, %v2204
        %v2513 = vmul.f32 %v2400, %v2201
        %v2514 = vmul.f32 %v2404, %v2202
        %v2515 = vmul.f32 %v2400, %v2203
        %v2516 = vmul.f32 %v2404, %v2204
        %v2517 = vmul.f32 %v2408, %v2201
        %v2518 = vmul.f32 %v2412, %v2202
        %v2519 = vmul.f32 %v2408, %v2203
        %v2520 = vmul.f32 %v2412, %v2204
        %v2521 = vmul.f32 %v2416, %v2201
        %v2522 = vmul.f32 %v2420, %v2202
        %v2523 = vmul.f32 %v2416, %v2203
        %v2524 = vmul.f32 %v2420, %v2204
        %v2525 = vmul.f32 %v2424, %v2201
        %v2526 = vmul.f32 %v2428, %v2202
        %v2527 = vmul.f32 %v2424, %v2203
        %v2528 = vmul.f32 %v2428, %v2204
        %v2529 = vmul.f32 %v2432, %v2201
        %v2530 = vmul.f32 %v2436, %v2202
        %v2531 = vmul.f32 %v2432, %v2203
        %v2532 = vmul.f32 %v2436, %v2204
        %v2533 = vpack.c.bf16 %v2471, %v2469
        %v2534 = vpack.c.bf16 %v2472, %v2470
        %v2535 = vpack.c.bf16 %v2475, %v2473
        %v2536 = vpack.c.bf16 %v2476, %v2474
        %v2537 = vpack.c.bf16 %v2479, %v2477
        %v2538 = vpack.c.bf16 %v2480, %v2478
        %v2539 = vpack.c.bf16 %v2483, %v2481
        %v2540 = vpack.c.bf16 %v2484, %v2482
        %v2541 = vpack.c.bf16 %v2487, %v2485
        %v2542 = vpack.c.bf16 %v2488, %v2486
        %v2543 = vpack.c.bf16 %v2491, %v2489
        %v2544 = vpack.c.bf16 %v2492, %v2490
        %v2545 = vpack.c.bf16 %v2495, %v2493
        %v2546 = vpack.c.bf16 %v2496, %v2494
        %v2547 = vpack.c.bf16 %v2499, %v2497
        %v2548 = vpack.c.bf16 %v2500, %v2498
        %v2549 = vpack.c.bf16 %v2503, %v2501
        %v2550 = vpack.c.bf16 %v2504, %v2502
        %v2551 = vpack.c.bf16 %v2507, %v2505
        %v2552 = vpack.c.bf16 %v2508, %v2506
        %v2553 = vpack.c.bf16 %v2511, %v2509
        %v2554 = vpack.c.bf16 %v2512, %v2510
        %v2555 = vpack.c.bf16 %v2515, %v2513
        %v2556 = vpack.c.bf16 %v2516, %v2514
        %v2557 = vpack.c.bf16 %v2519, %v2517
        %v2558 = vpack.c.bf16 %v2520, %v2518
        %v2559 = vpack.c.bf16 %v2523, %v2521
        %v2560 = vpack.c.bf16 %v2524, %v2522
        %v2561 = vpack.c.bf16 %v2527, %v2525
        %v2562 = vpack.c.bf16 %v2528, %v2526
        %v2563 = vpack.c.bf16 %v2531, %v2529
        %v2564 = vpack.c.bf16 %v2532, %v2530
        %2565 = vst [vmem:[#allocation2 + $0x40] sm:$0xff] %v2533
        %2566 = vst [vmem:[#allocation2 + $0x48] sm:$0xff] %v2534
        %2567 = vst [vmem:[#allocation2 + $0xd0] sm:$0xff] %v2535
        %2568 = vst [vmem:[#allocation2 + $0xd8] sm:$0xff] %v2536
        %2569 = vst [vmem:[#allocation2 + $0x160] sm:$0xff] %v2537
        %2570 = vst [vmem:[#allocation2 + $0x168] sm:$0xff] %v2538
        %2571 = vst [vmem:[#allocation2 + $0x1f0] sm:$0xff] %v2539
        %2572 = vst [vmem:[#allocation2 + $0x1f8] sm:$0xff] %v2540
        %2573 = vst [vmem:[#allocation2 + $0x280] sm:$0xff] %v2541
        %2574 = vst [vmem:[#allocation2 + $0x288] sm:$0xff] %v2542
        %2575 = vst [vmem:[#allocation2 + $0x310] sm:$0xff] %v2543
        %2576 = vst [vmem:[#allocation2 + $0x318] sm:$0xff] %v2544
        %2577 = vst [vmem:[#allocation2 + $0x3a0] sm:$0xff] %v2545
        %2578 = vst [vmem:[#allocation2 + $0x3a8] sm:$0xff] %v2546
        %2579 = vst [vmem:[#allocation2 + $0x430] sm:$0xff] %v2547
        %2580 = vst [vmem:[#allocation2 + $0x438] sm:$0xff] %v2548
        %2581 = vst [vmem:[#allocation2 + $0x4c0] sm:$0xff] %v2549
        %2582 = vst [vmem:[#allocation2 + $0x4c8] sm:$0xff] %v2550
        %2583 = vst [vmem:[#allocation2 + $0x550] sm:$0xff] %v2551
        %2584 = vst [vmem:[#allocation2 + $0x558] sm:$0xff] %v2552
        %2585 = vst [vmem:[#allocation2 + $0x5e0] sm:$0xff] %v2553
        %2586 = vst [vmem:[#allocation2 + $0x5e8] sm:$0xff] %v2554
        %2587 = vst [vmem:[#allocation2 + $0x670] sm:$0xff] %v2555
        %2588 = vst [vmem:[#allocation2 + $0x678] sm:$0xff] %v2556
        %2589 = vst [vmem:[#allocation2 + $0x700] sm:$0xff] %v2557
        %2590 = vst [vmem:[#allocation2 + $0x708] sm:$0xff] %v2558
        %2591 = vst [vmem:[#allocation2 + $0x790] sm:$0xff] %v2559
        %2592 = vst [vmem:[#allocation2 + $0x798] sm:$0xff] %v2560
        %2593 = vst [vmem:[#allocation2 + $0x820] sm:$0xff] %v2561
        %2594 = vst [vmem:[#allocation2 + $0x828] sm:$0xff] %v2562
        %2595 = vst [vmem:[#allocation2 + $0x8b0] sm:$0xff] %v2563
        %2596 = vst [vmem:[#allocation2 + $0x8b8] sm:$0xff] %v2564
        %s2597 = scalar_lea.vmem %s309, 18
        %v2598 = vld [vmem:[%s2597] ss:$8 sm:$0x3]
        %s2599 = scalar_lea.vmem %s309, 19
        %v2600 = vld [vmem:[%s2599] ss:$8 sm:$0x3]
        %v2601 = vadd.f32 %v1696, %v2598
        %v2602 = vadd.f32 %v1244, %v2600
        %v2604 = vlaneseq
        %v2605 = vshrl.u32 %v2604, 7
        %v2606 = vsub.s32 0, %v2605
        %v2607 = vrot.slane %v2601, %v2606
        %v2608 = vlaneseq
        %v2609 = vshrl.u32 %v2608, 7
        %v2610 = vsub.s32 1, %v2609
        %v2611 = vrot.slane %v2601, %v2610
        %v2614 = vsub.f32 %v331, %v2607
        %v2615 = vsub.f32 %v331, %v2611
        %v2616 = vsub.f32 %v332, %v2607
        %v2617 = vsub.f32 %v332, %v2611
        %v2618 = vand.u32 2147483647, %v2614
        %v2619 = vand.u32 2147483647, %v2615
        %v2620 = vand.u32 2147483647, %v2616
        %v2621 = vand.u32 2147483647, %v2617
        %v2622 = vsub.f32 1.0, %v2618
        %v2623 = vsub.f32 1.0, %v2619
        %v2624 = vsub.f32 1.0, %v2620
        %v2625 = vsub.f32 1.0, %v2621
        %v2626 = vmax.f32 %v2622, 0.0
        %v2627 = vmax.f32 %v2623, 0.0
        %v2628 = vmax.f32 %v2624, 0.0
        %v2629 = vmax.f32 %v2625, 0.0
        %v2631 = vlaneseq
        %v2632 = vshrl.u32 %v2631, 7
        %v2633 = vsub.s32 0, %v2632
        %v2634 = vrot.slane %v2602, %v2633
        %v2635 = vlaneseq
        %v2636 = vshrl.u32 %v2635, 7
        %v2637 = vsub.s32 1, %v2636
        %v2638 = vrot.slane %v2602, %v2637
        %v2641 = vsub.f32 %v331, %v2634
        %v2642 = vsub.f32 %v331, %v2638
        %v2643 = vsub.f32 %v332, %v2634
        %v2644 = vsub.f32 %v332, %v2638
        %v2645 = vand.u32 2147483647, %v2641
        %v2646 = vand.u32 2147483647, %v2642
        %v2647 = vand.u32 2147483647, %v2643
        %v2648 = vand.u32 2147483647, %v2644
        %v2649 = vsub.f32 1.0, %v2645
        %v2650 = vsub.f32 1.0, %v2646
        %v2651 = vsub.f32 1.0, %v2647
        %v2652 = vsub.f32 1.0, %v2648
        %v2653 = vmax.f32 %v2649, 0.0
        %v2654 = vmax.f32 %v2650, 0.0
        %v2655 = vmax.f32 %v2651, 0.0
        %v2656 = vmax.f32 %v2652, 0.0
        %v2661 = vcombine.low %v2626, %v2627
        %v2662 = vcombine.high %v2626, %v2627
        %v2664 = vunpack.c.l.s4 1966171168
        %v2665 = vunpack.c.0.s8 %v2664
        %v2666 = vlaneseq
        %v2667 = vshrl.u32 %v2666, 7
        %v2668 = vsub.s32 %v2665, %v2667
        %v2669 = vrot.slane %v2661, %v2668
        %v2671 = vunpack.c.l.s4 1966171168
        %v2672 = vunpack.c.0.s8 %v2671
        %v2673 = vlaneseq
        %v2674 = vshrl.u32 %v2673, 7
        %v2675 = vsub.s32 %v2672, %v2674
        %v2676 = vrot.slane %v2662, %v2675
        %v2677 = vcombine.high %v2669, %v2669
        %v2678 = vcombine.high %v2676, %v2676
        %v2680 = vunpack.c.l.s4 1966171168
        %v2681 = vunpack.c.0.s8 %v2680
        %v2682 = vlaneseq
        %v2683 = vshrl.u32 %v2682, 7
        %v2684 = vsub.s32 %v2681, %v2683
        %v2685 = vrot.slane %v2669, %v2684
        %v2687 = vunpack.c.l.s4 1966171168
        %v2688 = vunpack.c.0.s8 %v2687
        %v2689 = vlaneseq
        %v2690 = vshrl.u32 %v2689, 7
        %v2691 = vsub.s32 %v2688, %v2690
        %v2692 = vrot.slane %v2676, %v2691
        %v2694 = vunpack.c.l.s4 1966171168
        %v2695 = vunpack.c.0.s8 %v2694
        %v2696 = vlaneseq
        %v2697 = vshrl.u32 %v2696, 7
        %v2698 = vsub.s32 %v2695, %v2697
        %v2699 = vrot.slane %v2677, %v2698
        %v2701 = vunpack.c.l.s4 1966171168
        %v2702 = vunpack.c.0.s8 %v2701
        %v2703 = vlaneseq
        %v2704 = vshrl.u32 %v2703, 7
        %v2705 = vsub.s32 %v2702, %v2704
        %v2706 = vrot.slane %v2678, %v2705
        %v2707 = vcombine.high %v2685, %v2685
        %v2708 = vcombine.high %v2692, %v2692
        %v2709 = vcombine.high %v2699, %v2699
        %v2710 = vcombine.high %v2706, %v2706
        %v2711 = vcombine.low %v2628, %v2629
        %v2712 = vcombine.high %v2628, %v2629
        %v2714 = vunpack.c.l.s4 1966171168
        %v2715 = vunpack.c.0.s8 %v2714
        %v2716 = vlaneseq
        %v2717 = vshrl.u32 %v2716, 7
        %v2718 = vsub.s32 %v2715, %v2717
        %v2719 = vrot.slane %v2711, %v2718
        %v2721 = vunpack.c.l.s4 1966171168
        %v2722 = vunpack.c.0.s8 %v2721
        %v2723 = vlaneseq
        %v2724 = vshrl.u32 %v2723, 7
        %v2725 = vsub.s32 %v2722, %v2724
        %v2726 = vrot.slane %v2712, %v2725
        %v2727 = vcombine.high %v2719, %v2719
        %v2728 = vcombine.high %v2726, %v2726
        %v2730 = vunpack.c.l.s4 1966171168
        %v2731 = vunpack.c.0.s8 %v2730
        %v2732 = vlaneseq
        %v2733 = vshrl.u32 %v2732, 7
        %v2734 = vsub.s32 %v2731, %v2733
        %v2735 = vrot.slane %v2719, %v2734
        %v2737 = vunpack.c.l.s4 1966171168
        %v2738 = vunpack.c.0.s8 %v2737
        %v2739 = vlaneseq
        %v2740 = vshrl.u32 %v2739, 7
        %v2741 = vsub.s32 %v2738, %v2740
        %v2742 = vrot.slane %v2726, %v2741
        %v2744 = vunpack.c.l.s4 1966171168
        %v2745 = vunpack.c.0.s8 %v2744
        %v2746 = vlaneseq
        %v2747 = vshrl.u32 %v2746, 7
        %v2748 = vsub.s32 %v2745, %v2747
        %v2749 = vrot.slane %v2727, %v2748
        %v2751 = vunpack.c.l.s4 1966171168
        %v2752 = vunpack.c.0.s8 %v2751
        %v2753 = vlaneseq
        %v2754 = vshrl.u32 %v2753, 7
        %v2755 = vsub.s32 %v2752, %v2754
        %v2756 = vrot.slane %v2728, %v2755
        %v2757 = vcombine.high %v2735, %v2735
        %v2758 = vcombine.high %v2742, %v2742
        %v2759 = vcombine.high %v2749, %v2749
        %v2760 = vcombine.high %v2756, %v2756
        %v2761 = vlaneseq
        %v2762 = vshrl.u32 %v2761, 7
        %v2763 = vsub.s32 0, %v2762
        %v2764 = vrot.slane %v2685, %v2763
        %v2765 = vlaneseq
        %v2766 = vshrl.u32 %v2765, 7
        %v2767 = vsub.s32 1, %v2766
        %v2768 = vrot.slane %v2685, %v2767
        %v2769 = vlaneseq
        %v2770 = vshrl.u32 %v2769, 7
        %v2771 = vsub.s32 0, %v2770
        %v2772 = vrot.slane %v2699, %v2771
        %v2773 = vlaneseq
        %v2774 = vshrl.u32 %v2773, 7
        %v2775 = vsub.s32 1, %v2774
        %v2776 = vrot.slane %v2699, %v2775
        %v2777 = vlaneseq
        %v2778 = vshrl.u32 %v2777, 7
        %v2779 = vsub.s32 0, %v2778
        %v2780 = vrot.slane %v2707, %v2779
        %v2781 = vlaneseq
        %v2782 = vshrl.u32 %v2781, 7
        %v2783 = vsub.s32 1, %v2782
        %v2784 = vrot.slane %v2707, %v2783
        %v2785 = vlaneseq
        %v2786 = vshrl.u32 %v2785, 7
        %v2787 = vsub.s32 0, %v2786
        %v2788 = vrot.slane %v2709, %v2787
        %v2789 = vlaneseq
        %v2790 = vshrl.u32 %v2789, 7
        %v2791 = vsub.s32 1, %v2790
        %v2792 = vrot.slane %v2709, %v2791
        %v2793 = vlaneseq
        %v2794 = vshrl.u32 %v2793, 7
        %v2795 = vsub.s32 0, %v2794
        %v2796 = vrot.slane %v2692, %v2795
        %v2797 = vlaneseq
        %v2798 = vshrl.u32 %v2797, 7
        %v2799 = vsub.s32 1, %v2798
        %v2800 = vrot.slane %v2692, %v2799
        %v2801 = vlaneseq
        %v2802 = vshrl.u32 %v2801, 7
        %v2803 = vsub.s32 0, %v2802
        %v2804 = vrot.slane %v2706, %v2803
        %v2805 = vlaneseq
        %v2806 = vshrl.u32 %v2805, 7
        %v2807 = vsub.s32 1, %v2806
        %v2808 = vrot.slane %v2706, %v2807
        %v2809 = vlaneseq
        %v2810 = vshrl.u32 %v2809, 7
        %v2811 = vsub.s32 0, %v2810
        %v2812 = vrot.slane %v2708, %v2811
        %v2813 = vlaneseq
        %v2814 = vshrl.u32 %v2813, 7
        %v2815 = vsub.s32 1, %v2814
        %v2816 = vrot.slane %v2708, %v2815
        %v2817 = vlaneseq
        %v2818 = vshrl.u32 %v2817, 7
        %v2819 = vsub.s32 0, %v2818
        %v2820 = vrot.slane %v2710, %v2819
        %v2821 = vlaneseq
        %v2822 = vshrl.u32 %v2821, 7
        %v2823 = vsub.s32 1, %v2822
        %v2824 = vrot.slane %v2710, %v2823
        %v2825 = vlaneseq
        %v2826 = vshrl.u32 %v2825, 7
        %v2827 = vsub.s32 0, %v2826
        %v2828 = vrot.slane %v2735, %v2827
        %v2829 = vlaneseq
        %v2830 = vshrl.u32 %v2829, 7
        %v2831 = vsub.s32 1, %v2830
        %v2832 = vrot.slane %v2735, %v2831
        %v2833 = vlaneseq
        %v2834 = vshrl.u32 %v2833, 7
        %v2835 = vsub.s32 0, %v2834
        %v2836 = vrot.slane %v2749, %v2835
        %v2837 = vlaneseq
        %v2838 = vshrl.u32 %v2837, 7
        %v2839 = vsub.s32 1, %v2838
        %v2840 = vrot.slane %v2749, %v2839
        %v2841 = vlaneseq
        %v2842 = vshrl.u32 %v2841, 7
        %v2843 = vsub.s32 0, %v2842
        %v2844 = vrot.slane %v2757, %v2843
        %v2845 = vlaneseq
        %v2846 = vshrl.u32 %v2845, 7
        %v2847 = vsub.s32 1, %v2846
        %v2848 = vrot.slane %v2757, %v2847
        %v2849 = vlaneseq
        %v2850 = vshrl.u32 %v2849, 7
        %v2851 = vsub.s32 0, %v2850
        %v2852 = vrot.slane %v2759, %v2851
        %v2853 = vlaneseq
        %v2854 = vshrl.u32 %v2853, 7
        %v2855 = vsub.s32 1, %v2854
        %v2856 = vrot.slane %v2759, %v2855
        %v2857 = vlaneseq
        %v2858 = vshrl.u32 %v2857, 7
        %v2859 = vsub.s32 0, %v2858
        %v2860 = vrot.slane %v2742, %v2859
        %v2861 = vlaneseq
        %v2862 = vshrl.u32 %v2861, 7
        %v2863 = vsub.s32 1, %v2862
        %v2864 = vrot.slane %v2742, %v2863
        %v2865 = vlaneseq
        %v2866 = vshrl.u32 %v2865, 7
        %v2867 = vsub.s32 0, %v2866
        %v2868 = vrot.slane %v2756, %v2867
        %v2869 = vlaneseq
        %v2870 = vshrl.u32 %v2869, 7
        %v2871 = vsub.s32 1, %v2870
        %v2872 = vrot.slane %v2756, %v2871
        %v2873 = vlaneseq
        %v2874 = vshrl.u32 %v2873, 7
        %v2875 = vsub.s32 0, %v2874
        %v2876 = vrot.slane %v2758, %v2875
        %v2877 = vlaneseq
        %v2878 = vshrl.u32 %v2877, 7
        %v2879 = vsub.s32 1, %v2878
        %v2880 = vrot.slane %v2758, %v2879
        %v2881 = vlaneseq
        %v2882 = vshrl.u32 %v2881, 7
        %v2883 = vsub.s32 0, %v2882
        %v2884 = vrot.slane %v2760, %v2883
        %v2885 = vlaneseq
        %v2886 = vshrl.u32 %v2885, 7
        %v2887 = vsub.s32 1, %v2886
        %v2888 = vrot.slane %v2760, %v2887
        %v2921 = vmul.f32 %v2764, %v2653
        %v2922 = vmul.f32 %v2768, %v2654
        %v2923 = vmul.f32 %v2764, %v2655
        %v2924 = vmul.f32 %v2768, %v2656
        %v2925 = vmul.f32 %v2772, %v2653
        %v2926 = vmul.f32 %v2776, %v2654
        %v2927 = vmul.f32 %v2772, %v2655
        %v2928 = vmul.f32 %v2776, %v2656
        %v2929 = vmul.f32 %v2780, %v2653
        %v2930 = vmul.f32 %v2784, %v2654
        %v2931 = vmul.f32 %v2780, %v2655
        %v2932 = vmul.f32 %v2784, %v2656
        %v2933 = vmul.f32 %v2788, %v2653
        %v2934 = vmul.f32 %v2792, %v2654
        %v2935 = vmul.f32 %v2788, %v2655
        %v2936 = vmul.f32 %v2792, %v2656
        %v2937 = vmul.f32 %v2796, %v2653
        %v2938 = vmul.f32 %v2800, %v2654
        %v2939 = vmul.f32 %v2796, %v2655
        %v2940 = vmul.f32 %v2800, %v2656
        %v2941 = vmul.f32 %v2804, %v2653
        %v2942 = vmul.f32 %v2808, %v2654
        %v2943 = vmul.f32 %v2804, %v2655
        %v2944 = vmul.f32 %v2808, %v2656
        %v2945 = vmul.f32 %v2812, %v2653
        %v2946 = vmul.f32 %v2816, %v2654
        %v2947 = vmul.f32 %v2812, %v2655
        %v2948 = vmul.f32 %v2816, %v2656
        %v2949 = vmul.f32 %v2820, %v2653
        %v2950 = vmul.f32 %v2824, %v2654
        %v2951 = vmul.f32 %v2820, %v2655
        %v2952 = vmul.f32 %v2824, %v2656
        %v2953 = vmul.f32 %v2828, %v2653
        %v2954 = vmul.f32 %v2832, %v2654
        %v2955 = vmul.f32 %v2828, %v2655
        %v2956 = vmul.f32 %v2832, %v2656
        %v2957 = vmul.f32 %v2836, %v2653
        %v2958 = vmul.f32 %v2840, %v2654
        %v2959 = vmul.f32 %v2836, %v2655
        %v2960 = vmul.f32 %v2840, %v2656
        %v2961 = vmul.f32 %v2844, %v2653
        %v2962 = vmul.f32 %v2848, %v2654
        %v2963 = vmul.f32 %v2844, %v2655
        %v2964 = vmul.f32 %v2848, %v2656
        %v2965 = vmul.f32 %v2852, %v2653
        %v2966 = vmul.f32 %v2856, %v2654
        %v2967 = vmul.f32 %v2852, %v2655
        %v2968 = vmul.f32 %v2856, %v2656
        %v2969 = vmul.f32 %v2860, %v2653
        %v2970 = vmul.f32 %v2864, %v2654
        %v2971 = vmul.f32 %v2860, %v2655
        %v2972 = vmul.f32 %v2864, %v2656
        %v2973 = vmul.f32 %v2868, %v2653
        %v2974 = vmul.f32 %v2872, %v2654
        %v2975 = vmul.f32 %v2868, %v2655
        %v2976 = vmul.f32 %v2872, %v2656
        %v2977 = vmul.f32 %v2876, %v2653
        %v2978 = vmul.f32 %v2880, %v2654
        %v2979 = vmul.f32 %v2876, %v2655
        %v2980 = vmul.f32 %v2880, %v2656
        %v2981 = vmul.f32 %v2884, %v2653
        %v2982 = vmul.f32 %v2888, %v2654
        %v2983 = vmul.f32 %v2884, %v2655
        %v2984 = vmul.f32 %v2888, %v2656
        %v2985 = vpack.c.bf16 %v2923, %v2921
        %v2986 = vpack.c.bf16 %v2924, %v2922
        %v2987 = vpack.c.bf16 %v2927, %v2925
        %v2988 = vpack.c.bf16 %v2928, %v2926
        %v2989 = vpack.c.bf16 %v2931, %v2929
        %v2990 = vpack.c.bf16 %v2932, %v2930
        %v2991 = vpack.c.bf16 %v2935, %v2933
        %v2992 = vpack.c.bf16 %v2936, %v2934
        %v2993 = vpack.c.bf16 %v2939, %v2937
        %v2994 = vpack.c.bf16 %v2940, %v2938
        %v2995 = vpack.c.bf16 %v2943, %v2941
        %v2996 = vpack.c.bf16 %v2944, %v2942
        %v2997 = vpack.c.bf16 %v2947, %v2945
        %v2998 = vpack.c.bf16 %v2948, %v2946
        %v2999 = vpack.c.bf16 %v2951, %v2949
        %v3000 = vpack.c.bf16 %v2952, %v2950
        %v3001 = vpack.c.bf16 %v2955, %v2953
        %v3002 = vpack.c.bf16 %v2956, %v2954
        %v3003 = vpack.c.bf16 %v2959, %v2957
        %v3004 = vpack.c.bf16 %v2960, %v2958
        %v3005 = vpack.c.bf16 %v2963, %v2961
        %v3006 = vpack.c.bf16 %v2964, %v2962
        %v3007 = vpack.c.bf16 %v2967, %v2965
        %v3008 = vpack.c.bf16 %v2968, %v2966
        %v3009 = vpack.c.bf16 %v2971, %v2969
        %v3010 = vpack.c.bf16 %v2972, %v2970
        %v3011 = vpack.c.bf16 %v2975, %v2973
        %v3012 = vpack.c.bf16 %v2976, %v2974
        %v3013 = vpack.c.bf16 %v2979, %v2977
        %v3014 = vpack.c.bf16 %v2980, %v2978
        %v3015 = vpack.c.bf16 %v2983, %v2981
        %v3016 = vpack.c.bf16 %v2984, %v2982
        %3017 = vst [vmem:[#allocation2 + $0x50] sm:$0xff] %v2985
        %3018 = vst [vmem:[#allocation2 + $0x58] sm:$0xff] %v2986
        %3019 = vst [vmem:[#allocation2 + $0xe0] sm:$0xff] %v2987
        %3020 = vst [vmem:[#allocation2 + $0xe8] sm:$0xff] %v2988
        %3021 = vst [vmem:[#allocation2 + $0x170] sm:$0xff] %v2989
        %3022 = vst [vmem:[#allocation2 + $0x178] sm:$0xff] %v2990
        %3023 = vst [vmem:[#allocation2 + $0x200] sm:$0xff] %v2991
        %3024 = vst [vmem:[#allocation2 + $0x208] sm:$0xff] %v2992
        %3025 = vst [vmem:[#allocation2 + $0x290] sm:$0xff] %v2993
        %3026 = vst [vmem:[#allocation2 + $0x298] sm:$0xff] %v2994
        %3027 = vst [vmem:[#allocation2 + $0x320] sm:$0xff] %v2995
        %3028 = vst [vmem:[#allocation2 + $0x328] sm:$0xff] %v2996
        %3029 = vst [vmem:[#allocation2 + $0x3b0] sm:$0xff] %v2997
        %3030 = vst [vmem:[#allocation2 + $0x3b8] sm:$0xff] %v2998
        %3031 = vst [vmem:[#allocation2 + $0x440] sm:$0xff] %v2999
        %3032 = vst [vmem:[#allocation2 + $0x448] sm:$0xff] %v3000
        %3033 = vst [vmem:[#allocation2 + $0x4d0] sm:$0xff] %v3001
        %3034 = vst [vmem:[#allocation2 + $0x4d8] sm:$0xff] %v3002
        %3035 = vst [vmem:[#allocation2 + $0x560] sm:$0xff] %v3003
        %3036 = vst [vmem:[#allocation2 + $0x568] sm:$0xff] %v3004
        %3037 = vst [vmem:[#allocation2 + $0x5f0] sm:$0xff] %v3005
        %3038 = vst [vmem:[#allocation2 + $0x5f8] sm:$0xff] %v3006
        %3039 = vst [vmem:[#allocation2 + $0x680] sm:$0xff] %v3007
        %3040 = vst [vmem:[#allocation2 + $0x688] sm:$0xff] %v3008
        %3041 = vst [vmem:[#allocation2 + $0x710] sm:$0xff] %v3009
        %3042 = vst [vmem:[#allocation2 + $0x718] sm:$0xff] %v3010
        %3043 = vst [vmem:[#allocation2 + $0x7a0] sm:$0xff] %v3011
        %3044 = vst [vmem:[#allocation2 + $0x7a8] sm:$0xff] %v3012
        %3045 = vst [vmem:[#allocation2 + $0x830] sm:$0xff] %v3013
        %3046 = vst [vmem:[#allocation2 + $0x838] sm:$0xff] %v3014
        %3047 = vst [vmem:[#allocation2 + $0x8c0] sm:$0xff] %v3015
        %3048 = vst [vmem:[#allocation2 + $0x8c8] sm:$0xff] %v3016
        %s3049 = scalar_lea.vmem %s309, 20
        %v3050 = vld [vmem:[%s3049] ss:$8 sm:$0x3]
        %s3051 = scalar_lea.vmem %s309, 21
        %v3052 = vld [vmem:[%s3051] ss:$8 sm:$0x3]
        %v3053 = vadd.f32 %v325, 1.0
        %v3054 = vadd.f32 %v3053, %v3050
        %v3055 = vadd.f32 %v338, %v3052
        %v3057 = vlaneseq
        %v3058 = vshrl.u32 %v3057, 7
        %v3059 = vsub.s32 0, %v3058
        %v3060 = vrot.slane %v3054, %v3059
        %v3061 = vlaneseq
        %v3062 = vshrl.u32 %v3061, 7
        %v3063 = vsub.s32 1, %v3062
        %v3064 = vrot.slane %v3054, %v3063
        %v3067 = vsub.f32 %v331, %v3060
        %v3068 = vsub.f32 %v331, %v3064
        %v3069 = vsub.f32 %v332, %v3060
        %v3070 = vsub.f32 %v332, %v3064
        %v3071 = vand.u32 2147483647, %v3067
        %v3072 = vand.u32 2147483647, %v3068
        %v3073 = vand.u32 2147483647, %v3069
        %v3074 = vand.u32 2147483647, %v3070
        %v3075 = vsub.f32 1.0, %v3071
        %v3076 = vsub.f32 1.0, %v3072
        %v3077 = vsub.f32 1.0, %v3073
        %v3078 = vsub.f32 1.0, %v3074
        %v3079 = vmax.f32 %v3075, 0.0
        %v3080 = vmax.f32 %v3076, 0.0
        %v3081 = vmax.f32 %v3077, 0.0
        %v3082 = vmax.f32 %v3078, 0.0
        %v3084 = vlaneseq
        %v3085 = vshrl.u32 %v3084, 7
        %v3086 = vsub.s32 0, %v3085
        %v3087 = vrot.slane %v3055, %v3086
        %v3088 = vlaneseq
        %v3089 = vshrl.u32 %v3088, 7
        %v3090 = vsub.s32 1, %v3089
        %v3091 = vrot.slane %v3055, %v3090
        %v3094 = vsub.f32 %v331, %v3087
        %v3095 = vsub.f32 %v331, %v3091
        %v3096 = vsub.f32 %v332, %v3087
        %v3097 = vsub.f32 %v332, %v3091
        %v3098 = vand.u32 2147483647, %v3094
        %v3099 = vand.u32 2147483647, %v3095
        %v3100 = vand.u32 2147483647, %v3096
        %v3101 = vand.u32 2147483647, %v3097
        %v3102 = vsub.f32 1.0, %v3098
        %v3103 = vsub.f32 1.0, %v3099
        %v3104 = vsub.f32 1.0, %v3100
        %v3105 = vsub.f32 1.0, %v3101
        %v3106 = vmax.f32 %v3102, 0.0
        %v3107 = vmax.f32 %v3103, 0.0
        %v3108 = vmax.f32 %v3104, 0.0
        %v3109 = vmax.f32 %v3105, 0.0
        %v3114 = vcombine.low %v3079, %v3080
        %v3115 = vcombine.high %v3079, %v3080
        %v3117 = vunpack.c.l.s4 1966171168
        %v3118 = vunpack.c.0.s8 %v3117
        %v3119 = vlaneseq
        %v3120 = vshrl.u32 %v3119, 7
        %v3121 = vsub.s32 %v3118, %v3120
        %v3122 = vrot.slane %v3114, %v3121
        %v3124 = vunpack.c.l.s4 1966171168
        %v3125 = vunpack.c.0.s8 %v3124
        %v3126 = vlaneseq
        %v3127 = vshrl.u32 %v3126, 7
        %v3128 = vsub.s32 %v3125, %v3127
        %v3129 = vrot.slane %v3115, %v3128
        %v3130 = vcombine.high %v3122, %v3122
        %v3131 = vcombine.high %v3129, %v3129
        %v3133 = vunpack.c.l.s4 1966171168
        %v3134 = vunpack.c.0.s8 %v3133
        %v3135 = vlaneseq
        %v3136 = vshrl.u32 %v3135, 7
        %v3137 = vsub.s32 %v3134, %v3136
        %v3138 = vrot.slane %v3122, %v3137
        %v3140 = vunpack.c.l.s4 1966171168
        %v3141 = vunpack.c.0.s8 %v3140
        %v3142 = vlaneseq
        %v3143 = vshrl.u32 %v3142, 7
        %v3144 = vsub.s32 %v3141, %v3143
        %v3145 = vrot.slane %v3129, %v3144
        %v3147 = vunpack.c.l.s4 1966171168
        %v3148 = vunpack.c.0.s8 %v3147
        %v3149 = vlaneseq
        %v3150 = vshrl.u32 %v3149, 7
        %v3151 = vsub.s32 %v3148, %v3150
        %v3152 = vrot.slane %v3130, %v3151
        %v3154 = vunpack.c.l.s4 1966171168
        %v3155 = vunpack.c.0.s8 %v3154
        %v3156 = vlaneseq
        %v3157 = vshrl.u32 %v3156, 7
        %v3158 = vsub.s32 %v3155, %v3157
        %v3159 = vrot.slane %v3131, %v3158
        %v3160 = vcombine.high %v3138, %v3138
        %v3161 = vcombine.high %v3145, %v3145
        %v3162 = vcombine.high %v3152, %v3152
        %v3163 = vcombine.high %v3159, %v3159
        %v3164 = vcombine.low %v3081, %v3082
        %v3165 = vcombine.high %v3081, %v3082
        %v3167 = vunpack.c.l.s4 1966171168
        %v3168 = vunpack.c.0.s8 %v3167
        %v3169 = vlaneseq
        %v3170 = vshrl.u32 %v3169, 7
        %v3171 = vsub.s32 %v3168, %v3170
        %v3172 = vrot.slane %v3164, %v3171
        %v3174 = vunpack.c.l.s4 1966171168
        %v3175 = vunpack.c.0.s8 %v3174
        %v3176 = vlaneseq
        %v3177 = vshrl.u32 %v3176, 7
        %v3178 = vsub.s32 %v3175, %v3177
        %v3179 = vrot.slane %v3165, %v3178
        %v3180 = vcombine.high %v3172, %v3172
        %v3181 = vcombine.high %v3179, %v3179
        %v3183 = vunpack.c.l.s4 1966171168
        %v3184 = vunpack.c.0.s8 %v3183
        %v3185 = vlaneseq
        %v3186 = vshrl.u32 %v3185, 7
        %v3187 = vsub.s32 %v3184, %v3186
        %v3188 = vrot.slane %v3172, %v3187
        %v3190 = vunpack.c.l.s4 1966171168
        %v3191 = vunpack.c.0.s8 %v3190
        %v3192 = vlaneseq
        %v3193 = vshrl.u32 %v3192, 7
        %v3194 = vsub.s32 %v3191, %v3193
        %v3195 = vrot.slane %v3179, %v3194
        %v3197 = vunpack.c.l.s4 1966171168
        %v3198 = vunpack.c.0.s8 %v3197
        %v3199 = vlaneseq
        %v3200 = vshrl.u32 %v3199, 7
        %v3201 = vsub.s32 %v3198, %v3200
        %v3202 = vrot.slane %v3180, %v3201
        %v3204 = vunpack.c.l.s4 1966171168
        %v3205 = vunpack.c.0.s8 %v3204
        %v3206 = vlaneseq
        %v3207 = vshrl.u32 %v3206, 7
        %v3208 = vsub.s32 %v3205, %v3207
        %v3209 = vrot.slane %v3181, %v3208
        %v3210 = vcombine.high %v3188, %v3188
        %v3211 = vcombine.high %v3195, %v3195
        %v3212 = vcombine.high %v3202, %v3202
        %v3213 = vcombine.high %v3209, %v3209
        %v3214 = vlaneseq
        %v3215 = vshrl.u32 %v3214, 7
        %v3216 = vsub.s32 0, %v3215
        %v3217 = vrot.slane %v3138, %v3216
        %v3218 = vlaneseq
        %v3219 = vshrl.u32 %v3218, 7
        %v3220 = vsub.s32 1, %v3219
        %v3221 = vrot.slane %v3138, %v3220
        %v3222 = vlaneseq
        %v3223 = vshrl.u32 %v3222, 7
        %v3224 = vsub.s32 0, %v3223
        %v3225 = vrot.slane %v3152, %v3224
        %v3226 = vlaneseq
        %v3227 = vshrl.u32 %v3226, 7
        %v3228 = vsub.s32 1, %v3227
        %v3229 = vrot.slane %v3152, %v3228
        %v3230 = vlaneseq
        %v3231 = vshrl.u32 %v3230, 7
        %v3232 = vsub.s32 0, %v3231
        %v3233 = vrot.slane %v3160, %v3232
        %v3234 = vlaneseq
        %v3235 = vshrl.u32 %v3234, 7
        %v3236 = vsub.s32 1, %v3235
        %v3237 = vrot.slane %v3160, %v3236
        %v3238 = vlaneseq
        %v3239 = vshrl.u32 %v3238, 7
        %v3240 = vsub.s32 0, %v3239
        %v3241 = vrot.slane %v3162, %v3240
        %v3242 = vlaneseq
        %v3243 = vshrl.u32 %v3242, 7
        %v3244 = vsub.s32 1, %v3243
        %v3245 = vrot.slane %v3162, %v3244
        %v3246 = vlaneseq
        %v3247 = vshrl.u32 %v3246, 7
        %v3248 = vsub.s32 0, %v3247
        %v3249 = vrot.slane %v3145, %v3248
        %v3250 = vlaneseq
        %v3251 = vshrl.u32 %v3250, 7
        %v3252 = vsub.s32 1, %v3251
        %v3253 = vrot.slane %v3145, %v3252
        %v3254 = vlaneseq
        %v3255 = vshrl.u32 %v3254, 7
        %v3256 = vsub.s32 0, %v3255
        %v3257 = vrot.slane %v3159, %v3256
        %v3258 = vlaneseq
        %v3259 = vshrl.u32 %v3258, 7
        %v3260 = vsub.s32 1, %v3259
        %v3261 = vrot.slane %v3159, %v3260
        %v3262 = vlaneseq
        %v3263 = vshrl.u32 %v3262, 7
        %v3264 = vsub.s32 0, %v3263
        %v3265 = vrot.slane %v3161, %v3264
        %v3266 = vlaneseq
        %v3267 = vshrl.u32 %v3266, 7
        %v3268 = vsub.s32 1, %v3267
        %v3269 = vrot.slane %v3161, %v3268
        %v3270 = vlaneseq
        %v3271 = vshrl.u32 %v3270, 7
        %v3272 = vsub.s32 0, %v3271
        %v3273 = vrot.slane %v3163, %v3272
        %v3274 = vlaneseq
        %v3275 = vshrl.u32 %v3274, 7
        %v3276 = vsub.s32 1, %v3275
        %v3277 = vrot.slane %v3163, %v3276
        %v3278 = vlaneseq
        %v3279 = vshrl.u32 %v3278, 7
        %v3280 = vsub.s32 0, %v3279
        %v3281 = vrot.slane %v3188, %v3280
        %v3282 = vlaneseq
        %v3283 = vshrl.u32 %v3282, 7
        %v3284 = vsub.s32 1, %v3283
        %v3285 = vrot.slane %v3188, %v3284
        %v3286 = vlaneseq
        %v3287 = vshrl.u32 %v3286, 7
        %v3288 = vsub.s32 0, %v3287
        %v3289 = vrot.slane %v3202, %v3288
        %v3290 = vlaneseq
        %v3291 = vshrl.u32 %v3290, 7
        %v3292 = vsub.s32 1, %v3291
        %v3293 = vrot.slane %v3202, %v3292
        %v3294 = vlaneseq
        %v3295 = vshrl.u32 %v3294, 7
        %v3296 = vsub.s32 0, %v3295
        %v3297 = vrot.slane %v3210, %v3296
        %v3298 = vlaneseq
        %v3299 = vshrl.u32 %v3298, 7
        %v3300 = vsub.s32 1, %v3299
        %v3301 = vrot.slane %v3210, %v3300
        %v3302 = vlaneseq
        %v3303 = vshrl.u32 %v3302, 7
        %v3304 = vsub.s32 0, %v3303
        %v3305 = vrot.slane %v3212, %v3304
        %v3306 = vlaneseq
        %v3307 = vshrl.u32 %v3306, 7
        %v3308 = vsub.s32 1, %v3307
        %v3309 = vrot.slane %v3212, %v3308
        %v3310 = vlaneseq
        %v3311 = vshrl.u32 %v3310, 7
        %v3312 = vsub.s32 0, %v3311
        %v3313 = vrot.slane %v3195, %v3312
        %v3314 = vlaneseq
        %v3315 = vshrl.u32 %v3314, 7
        %v3316 = vsub.s32 1, %v3315
        %v3317 = vrot.slane %v3195, %v3316
        %v3318 = vlaneseq
        %v3319 = vshrl.u32 %v3318, 7
        %v3320 = vsub.s32 0, %v3319
        %v3321 = vrot.slane %v3209, %v3320
        %v3322 = vlaneseq
        %v3323 = vshrl.u32 %v3322, 7
        %v3324 = vsub.s32 1, %v3323
        %v3325 = vrot.slane %v3209, %v3324
        %v3326 = vlaneseq
        %v3327 = vshrl.u32 %v3326, 7
        %v3328 = vsub.s32 0, %v3327
        %v3329 = vrot.slane %v3211, %v3328
        %v3330 = vlaneseq
        %v3331 = vshrl.u32 %v3330, 7
        %v3332 = vsub.s32 1, %v3331
        %v3333 = vrot.slane %v3211, %v3332
        %v3334 = vlaneseq
        %v3335 = vshrl.u32 %v3334, 7
        %v3336 = vsub.s32 0, %v3335
        %v3337 = vrot.slane %v3213, %v3336
        %v3338 = vlaneseq
        %v3339 = vshrl.u32 %v3338, 7
        %v3340 = vsub.s32 1, %v3339
        %v3341 = vrot.slane %v3213, %v3340
        %v3374 = vmul.f32 %v3217, %v3106
        %v3375 = vmul.f32 %v3221, %v3107
        %v3376 = vmul.f32 %v3217, %v3108
        %v3377 = vmul.f32 %v3221, %v3109
        %v3378 = vmul.f32 %v3225, %v3106
        %v3379 = vmul.f32 %v3229, %v3107
        %v3380 = vmul.f32 %v3225, %v3108
        %v3381 = vmul.f32 %v3229, %v3109
        %v3382 = vmul.f32 %v3233, %v3106
        %v3383 = vmul.f32 %v3237, %v3107
        %v3384 = vmul.f32 %v3233, %v3108
        %v3385 = vmul.f32 %v3237, %v3109
        %v3386 = vmul.f32 %v3241, %v3106
        %v3387 = vmul.f32 %v3245, %v3107
        %v3388 = vmul.f32 %v3241, %v3108
        %v3389 = vmul.f32 %v3245, %v3109
        %v3390 = vmul.f32 %v3249, %v3106
        %v3391 = vmul.f32 %v3253, %v3107
        %v3392 = vmul.f32 %v3249, %v3108
        %v3393 = vmul.f32 %v3253, %v3109
        %v3394 = vmul.f32 %v3257, %v3106
        %v3395 = vmul.f32 %v3261, %v3107
        %v3396 = vmul.f32 %v3257, %v3108
        %v3397 = vmul.f32 %v3261, %v3109
        %v3398 = vmul.f32 %v3265, %v3106
        %v3399 = vmul.f32 %v3269, %v3107
        %v3400 = vmul.f32 %v3265, %v3108
        %v3401 = vmul.f32 %v3269, %v3109
        %v3402 = vmul.f32 %v3273, %v3106
        %v3403 = vmul.f32 %v3277, %v3107
        %v3404 = vmul.f32 %v3273, %v3108
        %v3405 = vmul.f32 %v3277, %v3109
        %v3406 = vmul.f32 %v3281, %v3106
        %v3407 = vmul.f32 %v3285, %v3107
        %v3408 = vmul.f32 %v3281, %v3108
        %v3409 = vmul.f32 %v3285, %v3109
        %v3410 = vmul.f32 %v3289, %v3106
        %v3411 = vmul.f32 %v3293, %v3107
        %v3412 = vmul.f32 %v3289, %v3108
        %v3413 = vmul.f32 %v3293, %v3109
        %v3414 = vmul.f32 %v3297, %v3106
        %v3415 = vmul.f32 %v3301, %v3107
        %v3416 = vmul.f32 %v3297, %v3108
        %v3417 = vmul.f32 %v3301, %v3109
        %v3418 = vmul.f32 %v3305, %v3106
        %v3419 = vmul.f32 %v3309, %v3107
        %v3420 = vmul.f32 %v3305, %v3108
        %v3421 = vmul.f32 %v3309, %v3109
        %v3422 = vmul.f32 %v3313, %v3106
        %v3423 = vmul.f32 %v3317, %v3107
        %v3424 = vmul.f32 %v3313, %v3108
        %v3425 = vmul.f32 %v3317, %v3109
        %v3426 = vmul.f32 %v3321, %v3106
        %v3427 = vmul.f32 %v3325, %v3107
        %v3428 = vmul.f32 %v3321, %v3108
        %v3429 = vmul.f32 %v3325, %v3109
        %v3430 = vmul.f32 %v3329, %v3106
        %v3431 = vmul.f32 %v3333, %v3107
        %v3432 = vmul.f32 %v3329, %v3108
        %v3433 = vmul.f32 %v3333, %v3109
        %v3434 = vmul.f32 %v3337, %v3106
        %v3435 = vmul.f32 %v3341, %v3107
        %v3436 = vmul.f32 %v3337, %v3108
        %v3437 = vmul.f32 %v3341, %v3109
        %v3438 = vpack.c.bf16 %v3376, %v3374
        %v3439 = vpack.c.bf16 %v3377, %v3375
        %v3440 = vpack.c.bf16 %v3380, %v3378
        %v3441 = vpack.c.bf16 %v3381, %v3379
        %v3442 = vpack.c.bf16 %v3384, %v3382
        %v3443 = vpack.c.bf16 %v3385, %v3383
        %v3444 = vpack.c.bf16 %v3388, %v3386
        %v3445 = vpack.c.bf16 %v3389, %v3387
        %v3446 = vpack.c.bf16 %v3392, %v3390
        %v3447 = vpack.c.bf16 %v3393, %v3391
        %v3448 = vpack.c.bf16 %v3396, %v3394
        %v3449 = vpack.c.bf16 %v3397, %v3395
        %v3450 = vpack.c.bf16 %v3400, %v3398
        %v3451 = vpack.c.bf16 %v3401, %v3399
        %v3452 = vpack.c.bf16 %v3404, %v3402
        %v3453 = vpack.c.bf16 %v3405, %v3403
        %v3454 = vpack.c.bf16 %v3408, %v3406
        %v3455 = vpack.c.bf16 %v3409, %v3407
        %v3456 = vpack.c.bf16 %v3412, %v3410
        %v3457 = vpack.c.bf16 %v3413, %v3411
        %v3458 = vpack.c.bf16 %v3416, %v3414
        %v3459 = vpack.c.bf16 %v3417, %v3415
        %v3460 = vpack.c.bf16 %v3420, %v3418
        %v3461 = vpack.c.bf16 %v3421, %v3419
        %v3462 = vpack.c.bf16 %v3424, %v3422
        %v3463 = vpack.c.bf16 %v3425, %v3423
        %v3464 = vpack.c.bf16 %v3428, %v3426
        %v3465 = vpack.c.bf16 %v3429, %v3427
        %v3466 = vpack.c.bf16 %v3432, %v3430
        %v3467 = vpack.c.bf16 %v3433, %v3431
        %v3468 = vpack.c.bf16 %v3436, %v3434
        %v3469 = vpack.c.bf16 %v3437, %v3435
        %3470 = vst [vmem:[#allocation2 + $0x60] sm:$0xff] %v3438
        %3471 = vst [vmem:[#allocation2 + $0x68] sm:$0xff] %v3439
        %3472 = vst [vmem:[#allocation2 + $0xf0] sm:$0xff] %v3440
        %3473 = vst [vmem:[#allocation2 + $0xf8] sm:$0xff] %v3441
        %3474 = vst [vmem:[#allocation2 + $0x180] sm:$0xff] %v3442
        %3475 = vst [vmem:[#allocation2 + $0x188] sm:$0xff] %v3443
        %3476 = vst [vmem:[#allocation2 + $0x210] sm:$0xff] %v3444
        %3477 = vst [vmem:[#allocation2 + $0x218] sm:$0xff] %v3445
        %3478 = vst [vmem:[#allocation2 + $0x2a0] sm:$0xff] %v3446
        %3479 = vst [vmem:[#allocation2 + $0x2a8] sm:$0xff] %v3447
        %3480 = vst [vmem:[#allocation2 + $0x330] sm:$0xff] %v3448
        %3481 = vst [vmem:[#allocation2 + $0x338] sm:$0xff] %v3449
        %3482 = vst [vmem:[#allocation2 + $0x3c0] sm:$0xff] %v3450
        %3483 = vst [vmem:[#allocation2 + $0x3c8] sm:$0xff] %v3451
        %3484 = vst [vmem:[#allocation2 + $0x450] sm:$0xff] %v3452
        %3485 = vst [vmem:[#allocation2 + $0x458] sm:$0xff] %v3453
        %3486 = vst [vmem:[#allocation2 + $0x4e0] sm:$0xff] %v3454
        %3487 = vst [vmem:[#allocation2 + $0x4e8] sm:$0xff] %v3455
        %3488 = vst [vmem:[#allocation2 + $0x570] sm:$0xff] %v3456
        %3489 = vst [vmem:[#allocation2 + $0x578] sm:$0xff] %v3457
        %3490 = vst [vmem:[#allocation2 + $0x600] sm:$0xff] %v3458
        %3491 = vst [vmem:[#allocation2 + $0x608] sm:$0xff] %v3459
        %3492 = vst [vmem:[#allocation2 + $0x690] sm:$0xff] %v3460
        %3493 = vst [vmem:[#allocation2 + $0x698] sm:$0xff] %v3461
        %3494 = vst [vmem:[#allocation2 + $0x720] sm:$0xff] %v3462
        %3495 = vst [vmem:[#allocation2 + $0x728] sm:$0xff] %v3463
        %3496 = vst [vmem:[#allocation2 + $0x7b0] sm:$0xff] %v3464
        %3497 = vst [vmem:[#allocation2 + $0x7b8] sm:$0xff] %v3465
        %3498 = vst [vmem:[#allocation2 + $0x840] sm:$0xff] %v3466
        %3499 = vst [vmem:[#allocation2 + $0x848] sm:$0xff] %v3467
        %3500 = vst [vmem:[#allocation2 + $0x8d0] sm:$0xff] %v3468
        %3501 = vst [vmem:[#allocation2 + $0x8d8] sm:$0xff] %v3469
        %s3502 = scalar_lea.vmem %s309, 22
        %v3503 = vld [vmem:[%s3502] ss:$8 sm:$0x3]
        %s3504 = scalar_lea.vmem %s309, 23
        %v3505 = vld [vmem:[%s3504] ss:$8 sm:$0x3]
        %v3506 = vadd.f32 %v3053, %v3503
        %v3507 = vadd.f32 %v791, %v3505
        %v3509 = vlaneseq
        %v3510 = vshrl.u32 %v3509, 7
        %v3511 = vsub.s32 0, %v3510
        %v3512 = vrot.slane %v3506, %v3511
        %v3513 = vlaneseq
        %v3514 = vshrl.u32 %v3513, 7
        %v3515 = vsub.s32 1, %v3514
        %v3516 = vrot.slane %v3506, %v3515
        %v3519 = vsub.f32 %v331, %v3512
        %v3520 = vsub.f32 %v331, %v3516
        %v3521 = vsub.f32 %v332, %v3512
        %v3522 = vsub.f32 %v332, %v3516
        %v3523 = vand.u32 2147483647, %v3519
        %v3524 = vand.u32 2147483647, %v3520
        %v3525 = vand.u32 2147483647, %v3521
        %v3526 = vand.u32 2147483647, %v3522
        %v3527 = vsub.f32 1.0, %v3523
        %v3528 = vsub.f32 1.0, %v3524
        %v3529 = vsub.f32 1.0, %v3525
        %v3530 = vsub.f32 1.0, %v3526
        %v3531 = vmax.f32 %v3527, 0.0
        %v3532 = vmax.f32 %v3528, 0.0
        %v3533 = vmax.f32 %v3529, 0.0
        %v3534 = vmax.f32 %v3530, 0.0
        %v3536 = vlaneseq
        %v3537 = vshrl.u32 %v3536, 7
        %v3538 = vsub.s32 0, %v3537
        %v3539 = vrot.slane %v3507, %v3538
        %v3540 = vlaneseq
        %v3541 = vshrl.u32 %v3540, 7
        %v3542 = vsub.s32 1, %v3541
        %v3543 = vrot.slane %v3507, %v3542
        %v3546 = vsub.f32 %v331, %v3539
        %v3547 = vsub.f32 %v331, %v3543
        %v3548 = vsub.f32 %v332, %v3539
        %v3549 = vsub.f32 %v332, %v3543
        %v3550 = vand.u32 2147483647, %v3546
        %v3551 = vand.u32 2147483647, %v3547
        %v3552 = vand.u32 2147483647, %v3548
        %v3553 = vand.u32 2147483647, %v3549
        %v3554 = vsub.f32 1.0, %v3550
        %v3555 = vsub.f32 1.0, %v3551
        %v3556 = vsub.f32 1.0, %v3552
        %v3557 = vsub.f32 1.0, %v3553
        %v3558 = vmax.f32 %v3554, 0.0
        %v3559 = vmax.f32 %v3555, 0.0
        %v3560 = vmax.f32 %v3556, 0.0
        %v3561 = vmax.f32 %v3557, 0.0
        %v3566 = vcombine.low %v3531, %v3532
        %v3567 = vcombine.high %v3531, %v3532
        %v3569 = vunpack.c.l.s4 1966171168
        %v3570 = vunpack.c.0.s8 %v3569
        %v3571 = vlaneseq
        %v3572 = vshrl.u32 %v3571, 7
        %v3573 = vsub.s32 %v3570, %v3572
        %v3574 = vrot.slane %v3566, %v3573
        %v3576 = vunpack.c.l.s4 1966171168
        %v3577 = vunpack.c.0.s8 %v3576
        %v3578 = vlaneseq
        %v3579 = vshrl.u32 %v3578, 7
        %v3580 = vsub.s32 %v3577, %v3579
        %v3581 = vrot.slane %v3567, %v3580
        %v3582 = vcombine.high %v3574, %v3574
        %v3583 = vcombine.high %v3581, %v3581
        %v3585 = vunpack.c.l.s4 1966171168
        %v3586 = vunpack.c.0.s8 %v3585
        %v3587 = vlaneseq
        %v3588 = vshrl.u32 %v3587, 7
        %v3589 = vsub.s32 %v3586, %v3588
        %v3590 = vrot.slane %v3574, %v3589
        %v3592 = vunpack.c.l.s4 1966171168
        %v3593 = vunpack.c.0.s8 %v3592
        %v3594 = vlaneseq
        %v3595 = vshrl.u32 %v3594, 7
        %v3596 = vsub.s32 %v3593, %v3595
        %v3597 = vrot.slane %v3581, %v3596
        %v3599 = vunpack.c.l.s4 1966171168
        %v3600 = vunpack.c.0.s8 %v3599
        %v3601 = vlaneseq
        %v3602 = vshrl.u32 %v3601, 7
        %v3603 = vsub.s32 %v3600, %v3602
        %v3604 = vrot.slane %v3582, %v3603
        %v3606 = vunpack.c.l.s4 1966171168
        %v3607 = vunpack.c.0.s8 %v3606
        %v3608 = vlaneseq
        %v3609 = vshrl.u32 %v3608, 7
        %v3610 = vsub.s32 %v3607, %v3609
        %v3611 = vrot.slane %v3583, %v3610
        %v3612 = vcombine.high %v3590, %v3590
        %v3613 = vcombine.high %v3597, %v3597
        %v3614 = vcombine.high %v3604, %v3604
        %v3615 = vcombine.high %v3611, %v3611
        %v3616 = vcombine.low %v3533, %v3534
        %v3617 = vcombine.high %v3533, %v3534
        %v3619 = vunpack.c.l.s4 1966171168
        %v3620 = vunpack.c.0.s8 %v3619
        %v3621 = vlaneseq
        %v3622 = vshrl.u32 %v3621, 7
        %v3623 = vsub.s32 %v3620, %v3622
        %v3624 = vrot.slane %v3616, %v3623
        %v3626 = vunpack.c.l.s4 1966171168
        %v3627 = vunpack.c.0.s8 %v3626
        %v3628 = vlaneseq
        %v3629 = vshrl.u32 %v3628, 7
        %v3630 = vsub.s32 %v3627, %v3629
        %v3631 = vrot.slane %v3617, %v3630
        %v3632 = vcombine.high %v3624, %v3624
        %v3633 = vcombine.high %v3631, %v3631
        %v3635 = vunpack.c.l.s4 1966171168
        %v3636 = vunpack.c.0.s8 %v3635
        %v3637 = vlaneseq
        %v3638 = vshrl.u32 %v3637, 7
        %v3639 = vsub.s32 %v3636, %v3638
        %v3640 = vrot.slane %v3624, %v3639
        %v3642 = vunpack.c.l.s4 1966171168
        %v3643 = vunpack.c.0.s8 %v3642
        %v3644 = vlaneseq
        %v3645 = vshrl.u32 %v3644, 7
        %v3646 = vsub.s32 %v3643, %v3645
        %v3647 = vrot.slane %v3631, %v3646
        %v3649 = vunpack.c.l.s4 1966171168
        %v3650 = vunpack.c.0.s8 %v3649
        %v3651 = vlaneseq
        %v3652 = vshrl.u32 %v3651, 7
        %v3653 = vsub.s32 %v3650, %v3652
        %v3654 = vrot.slane %v3632, %v3653
        %v3656 = vunpack.c.l.s4 1966171168
        %v3657 = vunpack.c.0.s8 %v3656
        %v3658 = vlaneseq
        %v3659 = vshrl.u32 %v3658, 7
        %v3660 = vsub.s32 %v3657, %v3659
        %v3661 = vrot.slane %v3633, %v3660
        %v3662 = vcombine.high %v3640, %v3640
        %v3663 = vcombine.high %v3647, %v3647
        %v3664 = vcombine.high %v3654, %v3654
        %v3665 = vcombine.high %v3661, %v3661
        %v3666 = vlaneseq
        %v3667 = vshrl.u32 %v3666, 7
        %v3668 = vsub.s32 0, %v3667
        %v3669 = vrot.slane %v3590, %v3668
        %v3670 = vlaneseq
        %v3671 = vshrl.u32 %v3670, 7
        %v3672 = vsub.s32 1, %v3671
        %v3673 = vrot.slane %v3590, %v3672
        %v3674 = vlaneseq
        %v3675 = vshrl.u32 %v3674, 7
        %v3676 = vsub.s32 0, %v3675
        %v3677 = vrot.slane %v3604, %v3676
        %v3678 = vlaneseq
        %v3679 = vshrl.u32 %v3678, 7
        %v3680 = vsub.s32 1, %v3679
        %v3681 = vrot.slane %v3604, %v3680
        %v3682 = vlaneseq
        %v3683 = vshrl.u32 %v3682, 7
        %v3684 = vsub.s32 0, %v3683
        %v3685 = vrot.slane %v3612, %v3684
        %v3686 = vlaneseq
        %v3687 = vshrl.u32 %v3686, 7
        %v3688 = vsub.s32 1, %v3687
        %v3689 = vrot.slane %v3612, %v3688
        %v3690 = vlaneseq
        %v3691 = vshrl.u32 %v3690, 7
        %v3692 = vsub.s32 0, %v3691
        %v3693 = vrot.slane %v3614, %v3692
        %v3694 = vlaneseq
        %v3695 = vshrl.u32 %v3694, 7
        %v3696 = vsub.s32 1, %v3695
        %v3697 = vrot.slane %v3614, %v3696
        %v3698 = vlaneseq
        %v3699 = vshrl.u32 %v3698, 7
        %v3700 = vsub.s32 0, %v3699
        %v3701 = vrot.slane %v3597, %v3700
        %v3702 = vlaneseq
        %v3703 = vshrl.u32 %v3702, 7
        %v3704 = vsub.s32 1, %v3703
        %v3705 = vrot.slane %v3597, %v3704
        %v3706 = vlaneseq
        %v3707 = vshrl.u32 %v3706, 7
        %v3708 = vsub.s32 0, %v3707
        %v3709 = vrot.slane %v3611, %v3708
        %v3710 = vlaneseq
        %v3711 = vshrl.u32 %v3710, 7
        %v3712 = vsub.s32 1, %v3711
        %v3713 = vrot.slane %v3611, %v3712
        %v3714 = vlaneseq
        %v3715 = vshrl.u32 %v3714, 7
        %v3716 = vsub.s32 0, %v3715
        %v3717 = vrot.slane %v3613, %v3716
        %v3718 = vlaneseq
        %v3719 = vshrl.u32 %v3718, 7
        %v3720 = vsub.s32 1, %v3719
        %v3721 = vrot.slane %v3613, %v3720
        %v3722 = vlaneseq
        %v3723 = vshrl.u32 %v3722, 7
        %v3724 = vsub.s32 0, %v3723
        %v3725 = vrot.slane %v3615, %v3724
        %v3726 = vlaneseq
        %v3727 = vshrl.u32 %v3726, 7
        %v3728 = vsub.s32 1, %v3727
        %v3729 = vrot.slane %v3615, %v3728
        %v3730 = vlaneseq
        %v3731 = vshrl.u32 %v3730, 7
        %v3732 = vsub.s32 0, %v3731
        %v3733 = vrot.slane %v3640, %v3732
        %v3734 = vlaneseq
        %v3735 = vshrl.u32 %v3734, 7
        %v3736 = vsub.s32 1, %v3735
        %v3737 = vrot.slane %v3640, %v3736
        %v3738 = vlaneseq
        %v3739 = vshrl.u32 %v3738, 7
        %v3740 = vsub.s32 0, %v3739
        %v3741 = vrot.slane %v3654, %v3740
        %v3742 = vlaneseq
        %v3743 = vshrl.u32 %v3742, 7
        %v3744 = vsub.s32 1, %v3743
        %v3745 = vrot.slane %v3654, %v3744
        %v3746 = vlaneseq
        %v3747 = vshrl.u32 %v3746, 7
        %v3748 = vsub.s32 0, %v3747
        %v3749 = vrot.slane %v3662, %v3748
        %v3750 = vlaneseq
        %v3751 = vshrl.u32 %v3750, 7
        %v3752 = vsub.s32 1, %v3751
        %v3753 = vrot.slane %v3662, %v3752
        %v3754 = vlaneseq
        %v3755 = vshrl.u32 %v3754, 7
        %v3756 = vsub.s32 0, %v3755
        %v3757 = vrot.slane %v3664, %v3756
        %v3758 = vlaneseq
        %v3759 = vshrl.u32 %v3758, 7
        %v3760 = vsub.s32 1, %v3759
        %v3761 = vrot.slane %v3664, %v3760
        %v3762 = vlaneseq
        %v3763 = vshrl.u32 %v3762, 7
        %v3764 = vsub.s32 0, %v3763
        %v3765 = vrot.slane %v3647, %v3764
        %v3766 = vlaneseq
        %v3767 = vshrl.u32 %v3766, 7
        %v3768 = vsub.s32 1, %v3767
        %v3769 = vrot.slane %v3647, %v3768
        %v3770 = vlaneseq
        %v3771 = vshrl.u32 %v3770, 7
        %v3772 = vsub.s32 0, %v3771
        %v3773 = vrot.slane %v3661, %v3772
        %v3774 = vlaneseq
        %v3775 = vshrl.u32 %v3774, 7
        %v3776 = vsub.s32 1, %v3775
        %v3777 = vrot.slane %v3661, %v3776
        %v3778 = vlaneseq
        %v3779 = vshrl.u32 %v3778, 7
        %v3780 = vsub.s32 0, %v3779
        %v3781 = vrot.slane %v3663, %v3780
        %v3782 = vlaneseq
        %v3783 = vshrl.u32 %v3782, 7
        %v3784 = vsub.s32 1, %v3783
        %v3785 = vrot.slane %v3663, %v3784
        %v3786 = vlaneseq
        %v3787 = vshrl.u32 %v3786, 7
        %v3788 = vsub.s32 0, %v3787
        %v3789 = vrot.slane %v3665, %v3788
        %v3790 = vlaneseq
        %v3791 = vshrl.u32 %v3790, 7
        %v3792 = vsub.s32 1, %v3791
        %v3793 = vrot.slane %v3665, %v3792
        %v3826 = vmul.f32 %v3669, %v3558
        %v3827 = vmul.f32 %v3673, %v3559
        %v3828 = vmul.f32 %v3669, %v3560
        %v3829 = vmul.f32 %v3673, %v3561
        %v3830 = vmul.f32 %v3677, %v3558
        %v3831 = vmul.f32 %v3681, %v3559
        %v3832 = vmul.f32 %v3677, %v3560
        %v3833 = vmul.f32 %v3681, %v3561
        %v3834 = vmul.f32 %v3685, %v3558
        %v3835 = vmul.f32 %v3689, %v3559
        %v3836 = vmul.f32 %v3685, %v3560
        %v3837 = vmul.f32 %v3689, %v3561
        %v3838 = vmul.f32 %v3693, %v3558
        %v3839 = vmul.f32 %v3697, %v3559
        %v3840 = vmul.f32 %v3693, %v3560
        %v3841 = vmul.f32 %v3697, %v3561
        %v3842 = vmul.f32 %v3701, %v3558
        %v3843 = vmul.f32 %v3705, %v3559
        %v3844 = vmul.f32 %v3701, %v3560
        %v3845 = vmul.f32 %v3705, %v3561
        %v3846 = vmul.f32 %v3709, %v3558
        %v3847 = vmul.f32 %v3713, %v3559
        %v3848 = vmul.f32 %v3709, %v3560
        %v3849 = vmul.f32 %v3713, %v3561
        %v3850 = vmul.f32 %v3717, %v3558
        %v3851 = vmul.f32 %v3721, %v3559
        %v3852 = vmul.f32 %v3717, %v3560
        %v3853 = vmul.f32 %v3721, %v3561
        %v3854 = vmul.f32 %v3725, %v3558
        %v3855 = vmul.f32 %v3729, %v3559
        %v3856 = vmul.f32 %v3725, %v3560
        %v3857 = vmul.f32 %v3729, %v3561
        %v3858 = vmul.f32 %v3733, %v3558
        %v3859 = vmul.f32 %v3737, %v3559
        %v3860 = vmul.f32 %v3733, %v3560
        %v3861 = vmul.f32 %v3737, %v3561
        %v3862 = vmul.f32 %v3741, %v3558
        %v3863 = vmul.f32 %v3745, %v3559
        %v3864 = vmul.f32 %v3741, %v3560
        %v3865 = vmul.f32 %v3745, %v3561
        %v3866 = vmul.f32 %v3749, %v3558
        %v3867 = vmul.f32 %v3753, %v3559
        %v3868 = vmul.f32 %v3749, %v3560
        %v3869 = vmul.f32 %v3753, %v3561
        %v3870 = vmul.f32 %v3757, %v3558
        %v3871 = vmul.f32 %v3761, %v3559
        %v3872 = vmul.f32 %v3757, %v3560
        %v3873 = vmul.f32 %v3761, %v3561
        %v3874 = vmul.f32 %v3765, %v3558
        %v3875 = vmul.f32 %v3769, %v3559
        %v3876 = vmul.f32 %v3765, %v3560
        %v3877 = vmul.f32 %v3769, %v3561
        %v3878 = vmul.f32 %v3773, %v3558
        %v3879 = vmul.f32 %v3777, %v3559
        %v3880 = vmul.f32 %v3773, %v3560
        %v3881 = vmul.f32 %v3777, %v3561
        %v3882 = vmul.f32 %v3781, %v3558
        %v3883 = vmul.f32 %v3785, %v3559
        %v3884 = vmul.f32 %v3781, %v3560
        %v3885 = vmul.f32 %v3785, %v3561
        %v3886 = vmul.f32 %v3789, %v3558
        %v3887 = vmul.f32 %v3793, %v3559
        %v3888 = vmul.f32 %v3789, %v3560
        %v3889 = vmul.f32 %v3793, %v3561
        %v3890 = vpack.c.bf16 %v3828, %v3826
        %v3891 = vpack.c.bf16 %v3829, %v3827
        %v3892 = vpack.c.bf16 %v3832, %v3830
        %v3893 = vpack.c.bf16 %v3833, %v3831
        %v3894 = vpack.c.bf16 %v3836, %v3834
        %v3895 = vpack.c.bf16 %v3837, %v3835
        %v3896 = vpack.c.bf16 %v3840, %v3838
        %v3897 = vpack.c.bf16 %v3841, %v3839
        %v3898 = vpack.c.bf16 %v3844, %v3842
        %v3899 = vpack.c.bf16 %v3845, %v3843
        %v3900 = vpack.c.bf16 %v3848, %v3846
        %v3901 = vpack.c.bf16 %v3849, %v3847
        %v3902 = vpack.c.bf16 %v3852, %v3850
        %v3903 = vpack.c.bf16 %v3853, %v3851
        %v3904 = vpack.c.bf16 %v3856, %v3854
        %v3905 = vpack.c.bf16 %v3857, %v3855
        %v3906 = vpack.c.bf16 %v3860, %v3858
        %v3907 = vpack.c.bf16 %v3861, %v3859
        %v3908 = vpack.c.bf16 %v3864, %v3862
        %v3909 = vpack.c.bf16 %v3865, %v3863
        %v3910 = vpack.c.bf16 %v3868, %v3866
        %v3911 = vpack.c.bf16 %v3869, %v3867
        %v3912 = vpack.c.bf16 %v3872, %v3870
        %v3913 = vpack.c.bf16 %v3873, %v3871
        %v3914 = vpack.c.bf16 %v3876, %v3874
        %v3915 = vpack.c.bf16 %v3877, %v3875
        %v3916 = vpack.c.bf16 %v3880, %v3878
        %v3917 = vpack.c.bf16 %v3881, %v3879
        %v3918 = vpack.c.bf16 %v3884, %v3882
        %v3919 = vpack.c.bf16 %v3885, %v3883
        %v3920 = vpack.c.bf16 %v3888, %v3886
        %v3921 = vpack.c.bf16 %v3889, %v3887
        %3922 = vst [vmem:[#allocation2 + $0x70] sm:$0xff] %v3890
        %3923 = vst [vmem:[#allocation2 + $0x78] sm:$0xff] %v3891
        %3924 = vst [vmem:[#allocation2 + $0x100] sm:$0xff] %v3892
        %3925 = vst [vmem:[#allocation2 + $0x108] sm:$0xff] %v3893
        %3926 = vst [vmem:[#allocation2 + $0x190] sm:$0xff] %v3894
        %3927 = vst [vmem:[#allocation2 + $0x198] sm:$0xff] %v3895
        %3928 = vst [vmem:[#allocation2 + $0x220] sm:$0xff] %v3896
        %3929 = vst [vmem:[#allocation2 + $0x228] sm:$0xff] %v3897
        %3930 = vst [vmem:[#allocation2 + $0x2b0] sm:$0xff] %v3898
        %3931 = vst [vmem:[#allocation2 + $0x2b8] sm:$0xff] %v3899
        %3932 = vst [vmem:[#allocation2 + $0x340] sm:$0xff] %v3900
        %3933 = vst [vmem:[#allocation2 + $0x348] sm:$0xff] %v3901
        %3934 = vst [vmem:[#allocation2 + $0x3d0] sm:$0xff] %v3902
        %3935 = vst [vmem:[#allocation2 + $0x3d8] sm:$0xff] %v3903
        %3936 = vst [vmem:[#allocation2 + $0x460] sm:$0xff] %v3904
        %3937 = vst [vmem:[#allocation2 + $0x468] sm:$0xff] %v3905
        %3938 = vst [vmem:[#allocation2 + $0x4f0] sm:$0xff] %v3906
        %3939 = vst [vmem:[#allocation2 + $0x4f8] sm:$0xff] %v3907
        %3940 = vst [vmem:[#allocation2 + $0x580] sm:$0xff] %v3908
        %3941 = vst [vmem:[#allocation2 + $0x588] sm:$0xff] %v3909
        %3942 = vst [vmem:[#allocation2 + $0x610] sm:$0xff] %v3910
        %3943 = vst [vmem:[#allocation2 + $0x618] sm:$0xff] %v3911
        %3944 = vst [vmem:[#allocation2 + $0x6a0] sm:$0xff] %v3912
        %3945 = vst [vmem:[#allocation2 + $0x6a8] sm:$0xff] %v3913
        %3946 = vst [vmem:[#allocation2 + $0x730] sm:$0xff] %v3914
        %3947 = vst [vmem:[#allocation2 + $0x738] sm:$0xff] %v3915
        %3948 = vst [vmem:[#allocation2 + $0x7c0] sm:$0xff] %v3916
        %3949 = vst [vmem:[#allocation2 + $0x7c8] sm:$0xff] %v3917
        %3950 = vst [vmem:[#allocation2 + $0x850] sm:$0xff] %v3918
        %3951 = vst [vmem:[#allocation2 + $0x858] sm:$0xff] %v3919
        %3952 = vst [vmem:[#allocation2 + $0x8e0] sm:$0xff] %v3920
        %3953 = vst [vmem:[#allocation2 + $0x8e8] sm:$0xff] %v3921
        %s3954 = scalar_lea.vmem %s309, 32
        %v3955 = vld [vmem:[%s3954] ss:$8 sm:$0x3]
        %s3956 = scalar_lea.vmem %s309, 33
        %v3957 = vld [vmem:[%s3956] ss:$8 sm:$0x3]
        %v3958 = vadd.f32 %v3053, %v3955
        %v3959 = vadd.f32 %v1244, %v3957
        %v3961 = vlaneseq
        %v3962 = vshrl.u32 %v3961, 7
        %v3963 = vsub.s32 0, %v3962
        %v3964 = vrot.slane %v3958, %v3963
        %v3965 = vlaneseq
        %v3966 = vshrl.u32 %v3965, 7
        %v3967 = vsub.s32 1, %v3966
        %v3968 = vrot.slane %v3958, %v3967
        %v3971 = vsub.f32 %v331, %v3964
        %v3972 = vsub.f32 %v331, %v3968
        %v3973 = vsub.f32 %v332, %v3964
        %v3974 = vsub.f32 %v332, %v3968
        %v3975 = vand.u32 2147483647, %v3971
        %v3976 = vand.u32 2147483647, %v3972
        %v3977 = vand.u32 2147483647, %v3973
        %v3978 = vand.u32 2147483647, %v3974
        %v3979 = vsub.f32 1.0, %v3975
        %v3980 = vsub.f32 1.0, %v3976
        %v3981 = vsub.f32 1.0, %v3977
        %v3982 = vsub.f32 1.0, %v3978
        %v3983 = vmax.f32 %v3979, 0.0
        %v3984 = vmax.f32 %v3980, 0.0
        %v3985 = vmax.f32 %v3981, 0.0
        %v3986 = vmax.f32 %v3982, 0.0
        %v3988 = vlaneseq
        %v3989 = vshrl.u32 %v3988, 7
        %v3990 = vsub.s32 0, %v3989
        %v3991 = vrot.slane %v3959, %v3990
        %v3992 = vlaneseq
        %v3993 = vshrl.u32 %v3992, 7
        %v3994 = vsub.s32 1, %v3993
        %v3995 = vrot.slane %v3959, %v3994
        %v3998 = vsub.f32 %v331, %v3991
        %v3999 = vsub.f32 %v331, %v3995
        %v4000 = vsub.f32 %v332, %v3991
        %v4001 = vsub.f32 %v332, %v3995
        %v4002 = vand.u32 2147483647, %v3998
        %v4003 = vand.u32 2147483647, %v3999
        %v4004 = vand.u32 2147483647, %v4000
        %v4005 = vand.u32 2147483647, %v4001
        %v4006 = vsub.f32 1.0, %v4002
        %v4007 = vsub.f32 1.0, %v4003
        %v4008 = vsub.f32 1.0, %v4004
        %v4009 = vsub.f32 1.0, %v4005
        %v4010 = vmax.f32 %v4006, 0.0
        %v4011 = vmax.f32 %v4007, 0.0
        %v4012 = vmax.f32 %v4008, 0.0
        %v4013 = vmax.f32 %v4009, 0.0
        %v4018 = vcombine.low %v3983, %v3984
        %v4019 = vcombine.high %v3983, %v3984
        %v4021 = vunpack.c.l.s4 1966171168
        %v4022 = vunpack.c.0.s8 %v4021
        %v4023 = vlaneseq
        %v4024 = vshrl.u32 %v4023, 7
        %v4025 = vsub.s32 %v4022, %v4024
        %v4026 = vrot.slane %v4018, %v4025
        %v4028 = vunpack.c.l.s4 1966171168
        %v4029 = vunpack.c.0.s8 %v4028
        %v4030 = vlaneseq
        %v4031 = vshrl.u32 %v4030, 7
        %v4032 = vsub.s32 %v4029, %v4031
        %v4033 = vrot.slane %v4019, %v4032
        %v4034 = vcombine.high %v4026, %v4026
        %v4035 = vcombine.high %v4033, %v4033
        %v4037 = vunpack.c.l.s4 1966171168
        %v4038 = vunpack.c.0.s8 %v4037
        %v4039 = vlaneseq
        %v4040 = vshrl.u32 %v4039, 7
        %v4041 = vsub.s32 %v4038, %v4040
        %v4042 = vrot.slane %v4026, %v4041
        %v4044 = vunpack.c.l.s4 1966171168
        %v4045 = vunpack.c.0.s8 %v4044
        %v4046 = vlaneseq
        %v4047 = vshrl.u32 %v4046, 7
        %v4048 = vsub.s32 %v4045, %v4047
        %v4049 = vrot.slane %v4033, %v4048
        %v4051 = vunpack.c.l.s4 1966171168
        %v4052 = vunpack.c.0.s8 %v4051
        %v4053 = vlaneseq
        %v4054 = vshrl.u32 %v4053, 7
        %v4055 = vsub.s32 %v4052, %v4054
        %v4056 = vrot.slane %v4034, %v4055
        %v4058 = vunpack.c.l.s4 1966171168
        %v4059 = vunpack.c.0.s8 %v4058
        %v4060 = vlaneseq
        %v4061 = vshrl.u32 %v4060, 7
        %v4062 = vsub.s32 %v4059, %v4061
        %v4063 = vrot.slane %v4035, %v4062
        %v4064 = vcombine.high %v4042, %v4042
        %v4065 = vcombine.high %v4049, %v4049
        %v4066 = vcombine.high %v4056, %v4056
        %v4067 = vcombine.high %v4063, %v4063
        %v4068 = vcombine.low %v3985, %v3986
        %v4069 = vcombine.high %v3985, %v3986
        %v4071 = vunpack.c.l.s4 1966171168
        %v4072 = vunpack.c.0.s8 %v4071
        %v4073 = vlaneseq
        %v4074 = vshrl.u32 %v4073, 7
        %v4075 = vsub.s32 %v4072, %v4074
        %v4076 = vrot.slane %v4068, %v4075
        %v4078 = vunpack.c.l.s4 1966171168
        %v4079 = vunpack.c.0.s8 %v4078
        %v4080 = vlaneseq
        %v4081 = vshrl.u32 %v4080, 7
        %v4082 = vsub.s32 %v4079, %v4081
        %v4083 = vrot.slane %v4069, %v4082
        %v4084 = vcombine.high %v4076, %v4076
        %v4085 = vcombine.high %v4083, %v4083
        %v4087 = vunpack.c.l.s4 1966171168
        %v4088 = vunpack.c.0.s8 %v4087
        %v4089 = vlaneseq
        %v4090 = vshrl.u32 %v4089, 7
        %v4091 = vsub.s32 %v4088, %v4090
        %v4092 = vrot.slane %v4076, %v4091
        %v4094 = vunpack.c.l.s4 1966171168
        %v4095 = vunpack.c.0.s8 %v4094
        %v4096 = vlaneseq
        %v4097 = vshrl.u32 %v4096, 7
        %v4098 = vsub.s32 %v4095, %v4097
        %v4099 = vrot.slane %v4083, %v4098
        %v4101 = vunpack.c.l.s4 1966171168
        %v4102 = vunpack.c.0.s8 %v4101
        %v4103 = vlaneseq
        %v4104 = vshrl.u32 %v4103, 7
        %v4105 = vsub.s32 %v4102, %v4104
        %v4106 = vrot.slane %v4084, %v4105
        %v4108 = vunpack.c.l.s4 1966171168
        %v4109 = vunpack.c.0.s8 %v4108
        %v4110 = vlaneseq
        %v4111 = vshrl.u32 %v4110, 7
        %v4112 = vsub.s32 %v4109, %v4111
        %v4113 = vrot.slane %v4085, %v4112
        %v4114 = vcombine.high %v4092, %v4092
        %v4115 = vcombine.high %v4099, %v4099
        %v4116 = vcombine.high %v4106, %v4106
        %v4117 = vcombine.high %v4113, %v4113
        %v4118 = vlaneseq
        %v4119 = vshrl.u32 %v4118, 7
        %v4120 = vsub.s32 0, %v4119
        %v4121 = vrot.slane %v4042, %v4120
        %v4122 = vlaneseq
        %v4123 = vshrl.u32 %v4122, 7
        %v4124 = vsub.s32 1, %v4123
        %v4125 = vrot.slane %v4042, %v4124
        %v4126 = vlaneseq
        %v4127 = vshrl.u32 %v4126, 7
        %v4128 = vsub.s32 0, %v4127
        %v4129 = vrot.slane %v4056, %v4128
        %v4130 = vlaneseq
        %v4131 = vshrl.u32 %v4130, 7
        %v4132 = vsub.s32 1, %v4131
        %v4133 = vrot.slane %v4056, %v4132
        %v4134 = vlaneseq
        %v4135 = vshrl.u32 %v4134, 7
        %v4136 = vsub.s32 0, %v4135
        %v4137 = vrot.slane %v4064, %v4136
        %v4138 = vlaneseq
        %v4139 = vshrl.u32 %v4138, 7
        %v4140 = vsub.s32 1, %v4139
        %v4141 = vrot.slane %v4064, %v4140
        %v4142 = vlaneseq
        %v4143 = vshrl.u32 %v4142, 7
        %v4144 = vsub.s32 0, %v4143
        %v4145 = vrot.slane %v4066, %v4144
        %v4146 = vlaneseq
        %v4147 = vshrl.u32 %v4146, 7
        %v4148 = vsub.s32 1, %v4147
        %v4149 = vrot.slane %v4066, %v4148
        %v4150 = vlaneseq
        %v4151 = vshrl.u32 %v4150, 7
        %v4152 = vsub.s32 0, %v4151
        %v4153 = vrot.slane %v4049, %v4152
        %v4154 = vlaneseq
        %v4155 = vshrl.u32 %v4154, 7
        %v4156 = vsub.s32 1, %v4155
        %v4157 = vrot.slane %v4049, %v4156
        %v4158 = vlaneseq
        %v4159 = vshrl.u32 %v4158, 7
        %v4160 = vsub.s32 0, %v4159
        %v4161 = vrot.slane %v4063, %v4160
        %v4162 = vlaneseq
        %v4163 = vshrl.u32 %v4162, 7
        %v4164 = vsub.s32 1, %v4163
        %v4165 = vrot.slane %v4063, %v4164
        %v4166 = vlaneseq
        %v4167 = vshrl.u32 %v4166, 7
        %v4168 = vsub.s32 0, %v4167
        %v4169 = vrot.slane %v4065, %v4168
        %v4170 = vlaneseq
        %v4171 = vshrl.u32 %v4170, 7
        %v4172 = vsub.s32 1, %v4171
        %v4173 = vrot.slane %v4065, %v4172
        %v4174 = vlaneseq
        %v4175 = vshrl.u32 %v4174, 7
        %v4176 = vsub.s32 0, %v4175
        %v4177 = vrot.slane %v4067, %v4176
        %v4178 = vlaneseq
        %v4179 = vshrl.u32 %v4178, 7
        %v4180 = vsub.s32 1, %v4179
        %v4181 = vrot.slane %v4067, %v4180
        %v4182 = vlaneseq
        %v4183 = vshrl.u32 %v4182, 7
        %v4184 = vsub.s32 0, %v4183
        %v4185 = vrot.slane %v4092, %v4184
        %v4186 = vlaneseq
        %v4187 = vshrl.u32 %v4186, 7
        %v4188 = vsub.s32 1, %v4187
        %v4189 = vrot.slane %v4092, %v4188
        %v4190 = vlaneseq
        %v4191 = vshrl.u32 %v4190, 7
        %v4192 = vsub.s32 0, %v4191
        %v4193 = vrot.slane %v4106, %v4192
        %v4194 = vlaneseq
        %v4195 = vshrl.u32 %v4194, 7
        %v4196 = vsub.s32 1, %v4195
        %v4197 = vrot.slane %v4106, %v4196
        %v4198 = vlaneseq
        %v4199 = vshrl.u32 %v4198, 7
        %v4200 = vsub.s32 0, %v4199
        %v4201 = vrot.slane %v4114, %v4200
        %v4202 = vlaneseq
        %v4203 = vshrl.u32 %v4202, 7
        %v4204 = vsub.s32 1, %v4203
        %v4205 = vrot.slane %v4114, %v4204
        %v4206 = vlaneseq
        %v4207 = vshrl.u32 %v4206, 7
        %v4208 = vsub.s32 0, %v4207
        %v4209 = vrot.slane %v4116, %v4208
        %v4210 = vlaneseq
        %v4211 = vshrl.u32 %v4210, 7
        %v4212 = vsub.s32 1, %v4211
        %v4213 = vrot.slane %v4116, %v4212
        %v4214 = vlaneseq
        %v4215 = vshrl.u32 %v4214, 7
        %v4216 = vsub.s32 0, %v4215
        %v4217 = vrot.slane %v4099, %v4216
        %v4218 = vlaneseq
        %v4219 = vshrl.u32 %v4218, 7
        %v4220 = vsub.s32 1, %v4219
        %v4221 = vrot.slane %v4099, %v4220
        %v4222 = vlaneseq
        %v4223 = vshrl.u32 %v4222, 7
        %v4224 = vsub.s32 0, %v4223
        %v4225 = vrot.slane %v4113, %v4224
        %v4226 = vlaneseq
        %v4227 = vshrl.u32 %v4226, 7
        %v4228 = vsub.s32 1, %v4227
        %v4229 = vrot.slane %v4113, %v4228
        %v4230 = vlaneseq
        %v4231 = vshrl.u32 %v4230, 7
        %v4232 = vsub.s32 0, %v4231
        %v4233 = vrot.slane %v4115, %v4232
        %v4234 = vlaneseq
        %v4235 = vshrl.u32 %v4234, 7
        %v4236 = vsub.s32 1, %v4235
        %v4237 = vrot.slane %v4115, %v4236
        %v4238 = vlaneseq
        %v4239 = vshrl.u32 %v4238, 7
        %v4240 = vsub.s32 0, %v4239
        %v4241 = vrot.slane %v4117, %v4240
        %v4242 = vlaneseq
        %v4243 = vshrl.u32 %v4242, 7
        %v4244 = vsub.s32 1, %v4243
        %v4245 = vrot.slane %v4117, %v4244
        %v4278 = vmul.f32 %v4121, %v4010
        %v4279 = vmul.f32 %v4125, %v4011
        %v4280 = vmul.f32 %v4121, %v4012
        %v4281 = vmul.f32 %v4125, %v4013
        %v4282 = vmul.f32 %v4129, %v4010
        %v4283 = vmul.f32 %v4133, %v4011
        %v4284 = vmul.f32 %v4129, %v4012
        %v4285 = vmul.f32 %v4133, %v4013
        %v4286 = vmul.f32 %v4137, %v4010
        %v4287 = vmul.f32 %v4141, %v4011
        %v4288 = vmul.f32 %v4137, %v4012
        %v4289 = vmul.f32 %v4141, %v4013
        %v4290 = vmul.f32 %v4145, %v4010
        %v4291 = vmul.f32 %v4149, %v4011
        %v4292 = vmul.f32 %v4145, %v4012
        %v4293 = vmul.f32 %v4149, %v4013
        %v4294 = vmul.f32 %v4153, %v4010
        %v4295 = vmul.f32 %v4157, %v4011
        %v4296 = vmul.f32 %v4153, %v4012
        %v4297 = vmul.f32 %v4157, %v4013
        %v4298 = vmul.f32 %v4161, %v4010
        %v4299 = vmul.f32 %v4165, %v4011
        %v4300 = vmul.f32 %v4161, %v4012
        %v4301 = vmul.f32 %v4165, %v4013
        %v4302 = vmul.f32 %v4169, %v4010
        %v4303 = vmul.f32 %v4173, %v4011
        %v4304 = vmul.f32 %v4169, %v4012
        %v4305 = vmul.f32 %v4173, %v4013
        %v4306 = vmul.f32 %v4177, %v4010
        %v4307 = vmul.f32 %v4181, %v4011
        %v4308 = vmul.f32 %v4177, %v4012
        %v4309 = vmul.f32 %v4181, %v4013
        %v4310 = vmul.f32 %v4185, %v4010
        %v4311 = vmul.f32 %v4189, %v4011
        %v4312 = vmul.f32 %v4185, %v4012
        %v4313 = vmul.f32 %v4189, %v4013
        %v4314 = vmul.f32 %v4193, %v4010
        %v4315 = vmul.f32 %v4197, %v4011
        %v4316 = vmul.f32 %v4193, %v4012
        %v4317 = vmul.f32 %v4197, %v4013
        %v4318 = vmul.f32 %v4201, %v4010
        %v4319 = vmul.f32 %v4205, %v4011
        %v4320 = vmul.f32 %v4201, %v4012
        %v4321 = vmul.f32 %v4205, %v4013
        %v4322 = vmul.f32 %v4209, %v4010
        %v4323 = vmul.f32 %v4213, %v4011
        %v4324 = vmul.f32 %v4209, %v4012
        %v4325 = vmul.f32 %v4213, %v4013
        %v4326 = vmul.f32 %v4217, %v4010
        %v4327 = vmul.f32 %v4221, %v4011
        %v4328 = vmul.f32 %v4217, %v4012
        %v4329 = vmul.f32 %v4221, %v4013
        %v4330 = vmul.f32 %v4225, %v4010
        %v4331 = vmul.f32 %v4229, %v4011
        %v4332 = vmul.f32 %v4225, %v4012
        %v4333 = vmul.f32 %v4229, %v4013
        %v4334 = vmul.f32 %v4233, %v4010
        %v4335 = vmul.f32 %v4237, %v4011
        %v4336 = vmul.f32 %v4233, %v4012
        %v4337 = vmul.f32 %v4237, %v4013
        %v4338 = vmul.f32 %v4241, %v4010
        %v4339 = vmul.f32 %v4245, %v4011
        %v4340 = vmul.f32 %v4241, %v4012
        %v4341 = vmul.f32 %v4245, %v4013
        %v4342 = vpack.c.bf16 %v4280, %v4278
        %v4343 = vpack.c.bf16 %v4281, %v4279
        %v4344 = vpack.c.bf16 %v4284, %v4282
        %v4345 = vpack.c.bf16 %v4285, %v4283
        %v4346 = vpack.c.bf16 %v4288, %v4286
        %v4347 = vpack.c.bf16 %v4289, %v4287
        %v4348 = vpack.c.bf16 %v4292, %v4290
        %v4349 = vpack.c.bf16 %v4293, %v4291
        %v4350 = vpack.c.bf16 %v4296, %v4294
        %v4351 = vpack.c.bf16 %v4297, %v4295
        %v4352 = vpack.c.bf16 %v4300, %v4298
        %v4353 = vpack.c.bf16 %v4301, %v4299
        %v4354 = vpack.c.bf16 %v4304, %v4302
        %v4355 = vpack.c.bf16 %v4305, %v4303
        %v4356 = vpack.c.bf16 %v4308, %v4306
        %v4357 = vpack.c.bf16 %v4309, %v4307
        %v4358 = vpack.c.bf16 %v4312, %v4310
        %v4359 = vpack.c.bf16 %v4313, %v4311
        %v4360 = vpack.c.bf16 %v4316, %v4314
        %v4361 = vpack.c.bf16 %v4317, %v4315
        %v4362 = vpack.c.bf16 %v4320, %v4318
        %v4363 = vpack.c.bf16 %v4321, %v4319
        %v4364 = vpack.c.bf16 %v4324, %v4322
        %v4365 = vpack.c.bf16 %v4325, %v4323
        %v4366 = vpack.c.bf16 %v4328, %v4326
        %v4367 = vpack.c.bf16 %v4329, %v4327
        %v4368 = vpack.c.bf16 %v4332, %v4330
        %v4369 = vpack.c.bf16 %v4333, %v4331
        %v4370 = vpack.c.bf16 %v4336, %v4334
        %v4371 = vpack.c.bf16 %v4337, %v4335
        %v4372 = vpack.c.bf16 %v4340, %v4338
        %v4373 = vpack.c.bf16 %v4341, %v4339
        %4374 = vst [vmem:[#allocation2 + $0x80] sm:$0xff] %v4342
        %4375 = vst [vmem:[#allocation2 + $0x88] sm:$0xff] %v4343
        %4376 = vst [vmem:[#allocation2 + $0x110] sm:$0xff] %v4344
        %4377 = vst [vmem:[#allocation2 + $0x118] sm:$0xff] %v4345
        %4378 = vst [vmem:[#allocation2 + $0x1a0] sm:$0xff] %v4346
        %4379 = vst [vmem:[#allocation2 + $0x1a8] sm:$0xff] %v4347
        %4380 = vst [vmem:[#allocation2 + $0x230] sm:$0xff] %v4348
        %4381 = vst [vmem:[#allocation2 + $0x238] sm:$0xff] %v4349
        %4382 = vst [vmem:[#allocation2 + $0x2c0] sm:$0xff] %v4350
        %4383 = vst [vmem:[#allocation2 + $0x2c8] sm:$0xff] %v4351
        %4384 = vst [vmem:[#allocation2 + $0x350] sm:$0xff] %v4352
        %4385 = vst [vmem:[#allocation2 + $0x358] sm:$0xff] %v4353
        %4386 = vst [vmem:[#allocation2 + $0x3e0] sm:$0xff] %v4354
        %4387 = vst [vmem:[#allocation2 + $0x3e8] sm:$0xff] %v4355
        %4388 = vst [vmem:[#allocation2 + $0x470] sm:$0xff] %v4356
        %4389 = vst [vmem:[#allocation2 + $0x478] sm:$0xff] %v4357
        %4390 = vst [vmem:[#allocation2 + $0x500] sm:$0xff] %v4358
        %4391 = vst [vmem:[#allocation2 + $0x508] sm:$0xff] %v4359
        %4392 = vst [vmem:[#allocation2 + $0x590] sm:$0xff] %v4360
        %4393 = vst [vmem:[#allocation2 + $0x598] sm:$0xff] %v4361
        %4394 = vst [vmem:[#allocation2 + $0x620] sm:$0xff] %v4362
        %4395 = vst [vmem:[#allocation2 + $0x628] sm:$0xff] %v4363
        %4396 = vst [vmem:[#allocation2 + $0x6b0] sm:$0xff] %v4364
        %4397 = vst [vmem:[#allocation2 + $0x6b8] sm:$0xff] %v4365
        %4398 = vst [vmem:[#allocation2 + $0x740] sm:$0xff] %v4366
        %4399 = vst [vmem:[#allocation2 + $0x748] sm:$0xff] %v4367
        %4400 = vst [vmem:[#allocation2 + $0x7d0] sm:$0xff] %v4368
        %4401 = vst [vmem:[#allocation2 + $0x7d8] sm:$0xff] %v4369
        %4402 = vst [vmem:[#allocation2 + $0x860] sm:$0xff] %v4370
        %4403 = vst [vmem:[#allocation2 + $0x868] sm:$0xff] %v4371
        %4404 = vst [vmem:[#allocation2 + $0x8f0] sm:$0xff] %v4372
        %4405 = vst [vmem:[#allocation2 + $0x8f8] sm:$0xff] %v4373
        %v4406 = vld [vmem:[#allocation2] sm:$0xff]
        %v4407 = vld [vmem:[#allocation2 + $0x8] sm:$0xff]
        %v4408 = vld [vmem:[#allocation2 + $0x10] sm:$0xff]
        %v4409 = vld [vmem:[#allocation2 + $0x18] sm:$0xff]
        %v4410 = vld [vmem:[#allocation2 + $0x20] sm:$0xff]
        %v4411 = vld [vmem:[#allocation2 + $0x28] sm:$0xff]
        %v4412 = vld [vmem:[#allocation2 + $0x30] sm:$0xff]
        %v4413 = vld [vmem:[#allocation2 + $0x38] sm:$0xff]
        %v4414 = vld [vmem:[#allocation2 + $0x40] sm:$0xff]
        %v4415 = vld [vmem:[#allocation2 + $0x48] sm:$0xff]
        %v4416 = vld [vmem:[#allocation2 + $0x50] sm:$0xff]
        %v4417 = vld [vmem:[#allocation2 + $0x58] sm:$0xff]
        %v4418 = vld [vmem:[#allocation2 + $0x60] sm:$0xff]
        %v4419 = vld [vmem:[#allocation2 + $0x68] sm:$0xff]
        %v4420 = vld [vmem:[#allocation2 + $0x70] sm:$0xff]
        %v4421 = vld [vmem:[#allocation2 + $0x78] sm:$0xff]
        %v4422 = vld [vmem:[#allocation2 + $0x80] sm:$0xff]
        %v4423 = vld [vmem:[#allocation2 + $0x88] sm:$0xff]
        %v4424 = vld [vmem:[#allocation2 + $0x90] sm:$0xff]
        %v4425 = vld [vmem:[#allocation2 + $0x98] sm:$0xff]
        %v4426 = vld [vmem:[#allocation2 + $0xa0] sm:$0xff]
        %v4427 = vld [vmem:[#allocation2 + $0xa8] sm:$0xff]
        %v4428 = vld [vmem:[#allocation2 + $0xb0] sm:$0xff]
        %v4429 = vld [vmem:[#allocation2 + $0xb8] sm:$0xff]
        %v4430 = vld [vmem:[#allocation2 + $0xc0] sm:$0xff]
        %v4431 = vld [vmem:[#allocation2 + $0xc8] sm:$0xff]
        %v4432 = vld [vmem:[#allocation2 + $0xd0] sm:$0xff]
        %v4433 = vld [vmem:[#allocation2 + $0xd8] sm:$0xff]
        %v4434 = vld [vmem:[#allocation2 + $0xe0] sm:$0xff]
        %v4435 = vld [vmem:[#allocation2 + $0xe8] sm:$0xff]
        %v4436 = vld [vmem:[#allocation2 + $0xf0] sm:$0xff]
        %v4437 = vld [vmem:[#allocation2 + $0xf8] sm:$0xff]
        %v4438 = vld [vmem:[#allocation2 + $0x100] sm:$0xff]
        %v4439 = vld [vmem:[#allocation2 + $0x108] sm:$0xff]
        %v4440 = vld [vmem:[#allocation2 + $0x110] sm:$0xff]
        %v4441 = vld [vmem:[#allocation2 + $0x118] sm:$0xff]
        %v4442 = vld [vmem:[#allocation2 + $0x120] sm:$0xff]
        %v4443 = vld [vmem:[#allocation2 + $0x128] sm:$0xff]
        %v4444 = vld [vmem:[#allocation2 + $0x130] sm:$0xff]
        %v4445 = vld [vmem:[#allocation2 + $0x138] sm:$0xff]
        %v4446 = vld [vmem:[#allocation2 + $0x140] sm:$0xff]
        %v4447 = vld [vmem:[#allocation2 + $0x148] sm:$0xff]
        %v4448 = vld [vmem:[#allocation2 + $0x150] sm:$0xff]
        %v4449 = vld [vmem:[#allocation2 + $0x158] sm:$0xff]
        %v4450 = vld [vmem:[#allocation2 + $0x160] sm:$0xff]
        %v4451 = vld [vmem:[#allocation2 + $0x168] sm:$0xff]
        %v4452 = vld [vmem:[#allocation2 + $0x170] sm:$0xff]
        %v4453 = vld [vmem:[#allocation2 + $0x178] sm:$0xff]
        %v4454 = vld [vmem:[#allocation2 + $0x180] sm:$0xff]
        %v4455 = vld [vmem:[#allocation2 + $0x188] sm:$0xff]
        %v4456 = vld [vmem:[#allocation2 + $0x190] sm:$0xff]
        %v4457 = vld [vmem:[#allocation2 + $0x198] sm:$0xff]
        %v4458 = vld [vmem:[#allocation2 + $0x1a0] sm:$0xff]
        %v4459 = vld [vmem:[#allocation2 + $0x1a8] sm:$0xff]
        %v4460 = vld [vmem:[#allocation2 + $0x1b0] sm:$0xff]
        %v4461 = vld [vmem:[#allocation2 + $0x1b8] sm:$0xff]
        %v4462 = vld [vmem:[#allocation2 + $0x1c0] sm:$0xff]
        %v4463 = vld [vmem:[#allocation2 + $0x1c8] sm:$0xff]
        %v4464 = vld [vmem:[#allocation2 + $0x1d0] sm:$0xff]
        %v4465 = vld [vmem:[#allocation2 + $0x1d8] sm:$0xff]
        %v4466 = vld [vmem:[#allocation2 + $0x1e0] sm:$0xff]
        %v4467 = vld [vmem:[#allocation2 + $0x1e8] sm:$0xff]
        %v4468 = vld [vmem:[#allocation2 + $0x1f0] sm:$0xff]
        %v4469 = vld [vmem:[#allocation2 + $0x1f8] sm:$0xff]
        %v4470 = vld [vmem:[#allocation2 + $0x200] sm:$0xff]
        %v4471 = vld [vmem:[#allocation2 + $0x208] sm:$0xff]
        %v4472 = vld [vmem:[#allocation2 + $0x210] sm:$0xff]
        %v4473 = vld [vmem:[#allocation2 + $0x218] sm:$0xff]
        %v4474 = vld [vmem:[#allocation2 + $0x220] sm:$0xff]
        %v4475 = vld [vmem:[#allocation2 + $0x228] sm:$0xff]
        %v4476 = vld [vmem:[#allocation2 + $0x230] sm:$0xff]
        %v4477 = vld [vmem:[#allocation2 + $0x238] sm:$0xff]
        %v4478 = vld [vmem:[#allocation2 + $0x240] sm:$0xff]
        %v4479 = vld [vmem:[#allocation2 + $0x248] sm:$0xff]
        %v4480 = vld [vmem:[#allocation2 + $0x250] sm:$0xff]
        %v4481 = vld [vmem:[#allocation2 + $0x258] sm:$0xff]
        %v4482 = vld [vmem:[#allocation2 + $0x260] sm:$0xff]
        %v4483 = vld [vmem:[#allocation2 + $0x268] sm:$0xff]
        %v4484 = vld [vmem:[#allocation2 + $0x270] sm:$0xff]
        %v4485 = vld [vmem:[#allocation2 + $0x278] sm:$0xff]
        %v4486 = vld [vmem:[#allocation2 + $0x280] sm:$0xff]
        %v4487 = vld [vmem:[#allocation2 + $0x288] sm:$0xff]
        %v4488 = vld [vmem:[#allocation2 + $0x290] sm:$0xff]
        %v4489 = vld [vmem:[#allocation2 + $0x298] sm:$0xff]
        %v4490 = vld [vmem:[#allocation2 + $0x2a0] sm:$0xff]
        %v4491 = vld [vmem:[#allocation2 + $0x2a8] sm:$0xff]
        %v4492 = vld [vmem:[#allocation2 + $0x2b0] sm:$0xff]
        %v4493 = vld [vmem:[#allocation2 + $0x2b8] sm:$0xff]
        %v4494 = vld [vmem:[#allocation2 + $0x2c0] sm:$0xff]
        %v4495 = vld [vmem:[#allocation2 + $0x2c8] sm:$0xff]
        %v4496 = vld [vmem:[#allocation2 + $0x2d0] sm:$0xff]
        %v4497 = vld [vmem:[#allocation2 + $0x2d8] sm:$0xff]
        %v4498 = vld [vmem:[#allocation2 + $0x2e0] sm:$0xff]
        %v4499 = vld [vmem:[#allocation2 + $0x2e8] sm:$0xff]
        %v4500 = vld [vmem:[#allocation2 + $0x2f0] sm:$0xff]
        %v4501 = vld [vmem:[#allocation2 + $0x2f8] sm:$0xff]
        %v4502 = vld [vmem:[#allocation2 + $0x300] sm:$0xff]
        %v4503 = vld [vmem:[#allocation2 + $0x308] sm:$0xff]
        %v4504 = vld [vmem:[#allocation2 + $0x310] sm:$0xff]
        %v4505 = vld [vmem:[#allocation2 + $0x318] sm:$0xff]
        %v4506 = vld [vmem:[#allocation2 + $0x320] sm:$0xff]
        %v4507 = vld [vmem:[#allocation2 + $0x328] sm:$0xff]
        %v4508 = vld [vmem:[#allocation2 + $0x330] sm:$0xff]
        %v4509 = vld [vmem:[#allocation2 + $0x338] sm:$0xff]
        %v4510 = vld [vmem:[#allocation2 + $0x340] sm:$0xff]
        %v4511 = vld [vmem:[#allocation2 + $0x348] sm:$0xff]
        %v4512 = vld [vmem:[#allocation2 + $0x350] sm:$0xff]
        %v4513 = vld [vmem:[#allocation2 + $0x358] sm:$0xff]
        %v4514 = vld [vmem:[#allocation2 + $0x360] sm:$0xff]
        %v4515 = vld [vmem:[#allocation2 + $0x368] sm:$0xff]
        %v4516 = vld [vmem:[#allocation2 + $0x370] sm:$0xff]
        %v4517 = vld [vmem:[#allocation2 + $0x378] sm:$0xff]
        %v4518 = vld [vmem:[#allocation2 + $0x380] sm:$0xff]
        %v4519 = vld [vmem:[#allocation2 + $0x388] sm:$0xff]
        %v4520 = vld [vmem:[#allocation2 + $0x390] sm:$0xff]
        %v4521 = vld [vmem:[#allocation2 + $0x398] sm:$0xff]
        %v4522 = vld [vmem:[#allocation2 + $0x3a0] sm:$0xff]
        %v4523 = vld [vmem:[#allocation2 + $0x3a8] sm:$0xff]
        %v4524 = vld [vmem:[#allocation2 + $0x3b0] sm:$0xff]
        %v4525 = vld [vmem:[#allocation2 + $0x3b8] sm:$0xff]
        %v4526 = vld [vmem:[#allocation2 + $0x3c0] sm:$0xff]
        %v4527 = vld [vmem:[#allocation2 + $0x3c8] sm:$0xff]
        %v4528 = vld [vmem:[#allocation2 + $0x3d0] sm:$0xff]
        %v4529 = vld [vmem:[#allocation2 + $0x3d8] sm:$0xff]
        %v4530 = vld [vmem:[#allocation2 + $0x3e0] sm:$0xff]
        %v4531 = vld [vmem:[#allocation2 + $0x3e8] sm:$0xff]
        %v4532 = vld [vmem:[#allocation2 + $0x3f0] sm:$0xff]
        %v4533 = vld [vmem:[#allocation2 + $0x3f8] sm:$0xff]
        %v4534 = vld [vmem:[#allocation2 + $0x400] sm:$0xff]
        %v4535 = vld [vmem:[#allocation2 + $0x408] sm:$0xff]
        %v4536 = vld [vmem:[#allocation2 + $0x410] sm:$0xff]
        %v4537 = vld [vmem:[#allocation2 + $0x418] sm:$0xff]
        %v4538 = vld [vmem:[#allocation2 + $0x420] sm:$0xff]
        %v4539 = vld [vmem:[#allocation2 + $0x428] sm:$0xff]
        %v4540 = vld [vmem:[#allocation2 + $0x430] sm:$0xff]
        %v4541 = vld [vmem:[#allocation2 + $0x438] sm:$0xff]
        %v4542 = vld [vmem:[#allocation2 + $0x440] sm:$0xff]
        %v4543 = vld [vmem:[#allocation2 + $0x448] sm:$0xff]
        %v4544 = vld [vmem:[#allocation2 + $0x450] sm:$0xff]
        %v4545 = vld [vmem:[#allocation2 + $0x458] sm:$0xff]
        %v4546 = vld [vmem:[#allocation2 + $0x460] sm:$0xff]
        %v4547 = vld [vmem:[#allocation2 + $0x468] sm:$0xff]
        %v4548 = vld [vmem:[#allocation2 + $0x470] sm:$0xff]
        %v4549 = vld [vmem:[#allocation2 + $0x478] sm:$0xff]
        %v4550 = vld [vmem:[#allocation2 + $0x480] sm:$0xff]
        %v4551 = vld [vmem:[#allocation2 + $0x488] sm:$0xff]
        %v4552 = vld [vmem:[#allocation2 + $0x490] sm:$0xff]
        %v4553 = vld [vmem:[#allocation2 + $0x498] sm:$0xff]
        %v4554 = vld [vmem:[#allocation2 + $0x4a0] sm:$0xff]
        %v4555 = vld [vmem:[#allocation2 + $0x4a8] sm:$0xff]
        %v4556 = vld [vmem:[#allocation2 + $0x4b0] sm:$0xff]
        %v4557 = vld [vmem:[#allocation2 + $0x4b8] sm:$0xff]
        %v4558 = vld [vmem:[#allocation2 + $0x4c0] sm:$0xff]
        %v4559 = vld [vmem:[#allocation2 + $0x4c8] sm:$0xff]
        %v4560 = vld [vmem:[#allocation2 + $0x4d0] sm:$0xff]
        %v4561 = vld [vmem:[#allocation2 + $0x4d8] sm:$0xff]
        %v4562 = vld [vmem:[#allocation2 + $0x4e0] sm:$0xff]
        %v4563 = vld [vmem:[#allocation2 + $0x4e8] sm:$0xff]
        %v4564 = vld [vmem:[#allocation2 + $0x4f0] sm:$0xff]
        %v4565 = vld [vmem:[#allocation2 + $0x4f8] sm:$0xff]
        %v4566 = vld [vmem:[#allocation2 + $0x500] sm:$0xff]
        %v4567 = vld [vmem:[#allocation2 + $0x508] sm:$0xff]
        %v4568 = vld [vmem:[#allocation2 + $0x510] sm:$0xff]
        %v4569 = vld [vmem:[#allocation2 + $0x518] sm:$0xff]
        %v4570 = vld [vmem:[#allocation2 + $0x520] sm:$0xff]
        %v4571 = vld [vmem:[#allocation2 + $0x528] sm:$0xff]
        %v4572 = vld [vmem:[#allocation2 + $0x530] sm:$0xff]
        %v4573 = vld [vmem:[#allocation2 + $0x538] sm:$0xff]
        %v4574 = vld [vmem:[#allocation2 + $0x540] sm:$0xff]
        %v4575 = vld [vmem:[#allocation2 + $0x548] sm:$0xff]
        %v4576 = vld [vmem:[#allocation2 + $0x550] sm:$0xff]
        %v4577 = vld [vmem:[#allocation2 + $0x558] sm:$0xff]
        %v4578 = vld [vmem:[#allocation2 + $0x560] sm:$0xff]
        %v4579 = vld [vmem:[#allocation2 + $0x568] sm:$0xff]
        %v4580 = vld [vmem:[#allocation2 + $0x570] sm:$0xff]
        %v4581 = vld [vmem:[#allocation2 + $0x578] sm:$0xff]
        %v4582 = vld [vmem:[#allocation2 + $0x580] sm:$0xff]
        %v4583 = vld [vmem:[#allocation2 + $0x588] sm:$0xff]
        %v4584 = vld [vmem:[#allocation2 + $0x590] sm:$0xff]
        %v4585 = vld [vmem:[#allocation2 + $0x598] sm:$0xff]
        %v4586 = vld [vmem:[#allocation2 + $0x5a0] sm:$0xff]
        %v4587 = vld [vmem:[#allocation2 + $0x5a8] sm:$0xff]
        %v4588 = vld [vmem:[#allocation2 + $0x5b0] sm:$0xff]
        %v4589 = vld [vmem:[#allocation2 + $0x5b8] sm:$0xff]
        %v4590 = vld [vmem:[#allocation2 + $0x5c0] sm:$0xff]
        %v4591 = vld [vmem:[#allocation2 + $0x5c8] sm:$0xff]
        %v4592 = vld [vmem:[#allocation2 + $0x5d0] sm:$0xff]
        %v4593 = vld [vmem:[#allocation2 + $0x5d8] sm:$0xff]
        %v4594 = vld [vmem:[#allocation2 + $0x5e0] sm:$0xff]
        %v4595 = vld [vmem:[#allocation2 + $0x5e8] sm:$0xff]
        %v4596 = vld [vmem:[#allocation2 + $0x5f0] sm:$0xff]
        %v4597 = vld [vmem:[#allocation2 + $0x5f8] sm:$0xff]
        %v4598 = vld [vmem:[#allocation2 + $0x600] sm:$0xff]
        %v4599 = vld [vmem:[#allocation2 + $0x608] sm:$0xff]
        %v4600 = vld [vmem:[#allocation2 + $0x610] sm:$0xff]
        %v4601 = vld [vmem:[#allocation2 + $0x618] sm:$0xff]
        %v4602 = vld [vmem:[#allocation2 + $0x620] sm:$0xff]
        %v4603 = vld [vmem:[#allocation2 + $0x628] sm:$0xff]
        %v4604 = vld [vmem:[#allocation2 + $0x630] sm:$0xff]
        %v4605 = vld [vmem:[#allocation2 + $0x638] sm:$0xff]
        %v4606 = vld [vmem:[#allocation2 + $0x640] sm:$0xff]
        %v4607 = vld [vmem:[#allocation2 + $0x648] sm:$0xff]
        %v4608 = vld [vmem:[#allocation2 + $0x650] sm:$0xff]
        %v4609 = vld [vmem:[#allocation2 + $0x658] sm:$0xff]
        %v4610 = vld [vmem:[#allocation2 + $0x660] sm:$0xff]
        %v4611 = vld [vmem:[#allocation2 + $0x668] sm:$0xff]
        %v4612 = vld [vmem:[#allocation2 + $0x670] sm:$0xff]
        %v4613 = vld [vmem:[#allocation2 + $0x678] sm:$0xff]
        %v4614 = vld [vmem:[#allocation2 + $0x680] sm:$0xff]
        %v4615 = vld [vmem:[#allocation2 + $0x688] sm:$0xff]
        %v4616 = vld [vmem:[#allocation2 + $0x690] sm:$0xff]
        %v4617 = vld [vmem:[#allocation2 + $0x698] sm:$0xff]
        %v4618 = vld [vmem:[#allocation2 + $0x6a0] sm:$0xff]
        %v4619 = vld [vmem:[#allocation2 + $0x6a8] sm:$0xff]
        %v4620 = vld [vmem:[#allocation2 + $0x6b0] sm:$0xff]
        %v4621 = vld [vmem:[#allocation2 + $0x6b8] sm:$0xff]
        %v4622 = vld [vmem:[#allocation2 + $0x6c0] sm:$0xff]
        %v4623 = vld [vmem:[#allocation2 + $0x6c8] sm:$0xff]
        %v4624 = vld [vmem:[#allocation2 + $0x6d0] sm:$0xff]
        %v4625 = vld [vmem:[#allocation2 + $0x6d8] sm:$0xff]
        %v4626 = vld [vmem:[#allocation2 + $0x6e0] sm:$0xff]
        %v4627 = vld [vmem:[#allocation2 + $0x6e8] sm:$0xff]
        %v4628 = vld [vmem:[#allocation2 + $0x6f0] sm:$0xff]
        %v4629 = vld [vmem:[#allocation2 + $0x6f8] sm:$0xff]
        %v4630 = vld [vmem:[#allocation2 + $0x700] sm:$0xff]
        %v4631 = vld [vmem:[#allocation2 + $0x708] sm:$0xff]
        %v4632 = vld [vmem:[#allocation2 + $0x710] sm:$0xff]
        %v4633 = vld [vmem:[#allocation2 + $0x718] sm:$0xff]
        %v4634 = vld [vmem:[#allocation2 + $0x720] sm:$0xff]
        %v4635 = vld [vmem:[#allocation2 + $0x728] sm:$0xff]
        %v4636 = vld [vmem:[#allocation2 + $0x730] sm:$0xff]
        %v4637 = vld [vmem:[#allocation2 + $0x738] sm:$0xff]
        %v4638 = vld [vmem:[#allocation2 + $0x740] sm:$0xff]
        %v4639 = vld [vmem:[#allocation2 + $0x748] sm:$0xff]
        %v4640 = vld [vmem:[#allocation2 + $0x750] sm:$0xff]
        %v4641 = vld [vmem:[#allocation2 + $0x758] sm:$0xff]
        %v4642 = vld [vmem:[#allocation2 + $0x760] sm:$0xff]
        %v4643 = vld [vmem:[#allocation2 + $0x768] sm:$0xff]
        %v4644 = vld [vmem:[#allocation2 + $0x770] sm:$0xff]
        %v4645 = vld [vmem:[#allocation2 + $0x778] sm:$0xff]
        %v4646 = vld [vmem:[#allocation2 + $0x780] sm:$0xff]
        %v4647 = vld [vmem:[#allocation2 + $0x788] sm:$0xff]
        %v4648 = vld [vmem:[#allocation2 + $0x790] sm:$0xff]
        %v4649 = vld [vmem:[#allocation2 + $0x798] sm:$0xff]
        %v4650 = vld [vmem:[#allocation2 + $0x7a0] sm:$0xff]
        %v4651 = vld [vmem:[#allocation2 + $0x7a8] sm:$0xff]
        %v4652 = vld [vmem:[#allocation2 + $0x7b0] sm:$0xff]
        %v4653 = vld [vmem:[#allocation2 + $0x7b8] sm:$0xff]
        %v4654 = vld [vmem:[#allocation2 + $0x7c0] sm:$0xff]
        %v4655 = vld [vmem:[#allocation2 + $0x7c8] sm:$0xff]
        %v4656 = vld [vmem:[#allocation2 + $0x7d0] sm:$0xff]
        %v4657 = vld [vmem:[#allocation2 + $0x7d8] sm:$0xff]
        %v4658 = vld [vmem:[#allocation2 + $0x7e0] sm:$0xff]
        %v4659 = vld [vmem:[#allocation2 + $0x7e8] sm:$0xff]
        %v4660 = vld [vmem:[#allocation2 + $0x7f0] sm:$0xff]
        %v4661 = vld [vmem:[#allocation2 + $0x7f8] sm:$0xff]
        %v4662 = vld [vmem:[#allocation2 + $0x800] sm:$0xff]
        %v4663 = vld [vmem:[#allocation2 + $0x808] sm:$0xff]
        %v4664 = vld [vmem:[#allocation2 + $0x810] sm:$0xff]
        %v4665 = vld [vmem:[#allocation2 + $0x818] sm:$0xff]
        %v4666 = vld [vmem:[#allocation2 + $0x820] sm:$0xff]
        %v4667 = vld [vmem:[#allocation2 + $0x828] sm:$0xff]
        %v4668 = vld [vmem:[#allocation2 + $0x830] sm:$0xff]
        %v4669 = vld [vmem:[#allocation2 + $0x838] sm:$0xff]
        %v4670 = vld [vmem:[#allocation2 + $0x840] sm:$0xff]
        %v4671 = vld [vmem:[#allocation2 + $0x848] sm:$0xff]
        %v4672 = vld [vmem:[#allocation2 + $0x850] sm:$0xff]
        %v4673 = vld [vmem:[#allocation2 + $0x858] sm:$0xff]
        %v4674 = vld [vmem:[#allocation2 + $0x860] sm:$0xff]
        %v4675 = vld [vmem:[#allocation2 + $0x868] sm:$0xff]
        %v4676 = vld [vmem:[#allocation2 + $0x870] sm:$0xff]
        %v4677 = vld [vmem:[#allocation2 + $0x878] sm:$0xff]
        %v4678 = vld [vmem:[#allocation2 + $0x880] sm:$0xff]
        %v4679 = vld [vmem:[#allocation2 + $0x888] sm:$0xff]
        %v4680 = vld [vmem:[#allocation2 + $0x890] sm:$0xff]
        %v4681 = vld [vmem:[#allocation2 + $0x898] sm:$0xff]
        %v4682 = vld [vmem:[#allocation2 + $0x8a0] sm:$0xff]
        %v4683 = vld [vmem:[#allocation2 + $0x8a8] sm:$0xff]
        %v4684 = vld [vmem:[#allocation2 + $0x8b0] sm:$0xff]
        %v4685 = vld [vmem:[#allocation2 + $0x8b8] sm:$0xff]
        %v4686 = vld [vmem:[#allocation2 + $0x8c0] sm:$0xff]
        %v4687 = vld [vmem:[#allocation2 + $0x8c8] sm:$0xff]
        %v4688 = vld [vmem:[#allocation2 + $0x8d0] sm:$0xff]
        %v4689 = vld [vmem:[#allocation2 + $0x8d8] sm:$0xff]
        %v4690 = vld [vmem:[#allocation2 + $0x8e0] sm:$0xff]
        %v4691 = vld [vmem:[#allocation2 + $0x8e8] sm:$0xff]
        %v4692 = vld [vmem:[#allocation2 + $0x8f0] sm:$0xff]
        %v4693 = vld [vmem:[#allocation2 + $0x8f8] sm:$0xff]
        %v4696 = vunpack.c.l.s4 1983009808
        %v4697 = vunpack.c.0.s8 %v4696
        %v4698 = vlaneseq
        %v4699 = vshrl.u32 %v4698, 7
        %v4700 = vsub.s32 %v4697, %v4699
        %v4701 = vrot.slane %v323, %v4700
        %v4702 = vcombine.high %v4701, %v4701
        %4705 = vmatprep.subr.bf16.mxu0 %v4407
        %4706 = vmatpush1.bf16.msra.mxu0 %v4406
        %4707 = vmatprep.subr.bf16.mxu0 %v4425
        %4708 = vmatpush1.bf16.msra.mxu0 %v4424
        %4709 = vmatprep.subr.bf16.mxu0 %v4443
        %4710 = vmatpush1.bf16.msra.mxu0 %v4442
        %4711 = vmatprep.subr.bf16.mxu0 %v4461
        %4712 = vmatpush1.bf16.msra.mxu0 %v4460
        %4713 = vmatprep.subr.bf16.mxu0 %v4479
        %4714 = vmatpush1.bf16.msra.mxu0 %v4478
        %4715 = vmatprep.subr.bf16.mxu0 %v4497
        %4716 = vmatpush1.bf16.msra.mxu0 %v4496
        %4717 = vmatprep.subr.bf16.mxu0 %v4515
        %4718 = vmatpush1.bf16.msra.mxu0 %v4514
        %4719 = vmatprep.subr.bf16.mxu0 %v4533
        %4720 = vmatpush1.bf16.msra.mxu0 %v4532
        %4721 = vmatprep.subr.bf16.mxu0 %v4551
        %4722 = vmatpush1.bf16.msra.mxu0 %v4550
        %4723 = vmatprep.subr.bf16.mxu0 %v4569
        %4724 = vmatpush1.bf16.msra.mxu0 %v4568
        %4725 = vmatprep.subr.bf16.mxu0 %v4587
        %4726 = vmatpush1.bf16.msra.mxu0 %v4586
        %4727 = vmatprep.subr.bf16.mxu0 %v4605
        %4728 = vmatpush1.bf16.msra.mxu0 %v4604
        %4729 = vmatprep.subr.bf16.mxu0 %v4623
        %4730 = vmatpush1.bf16.msra.mxu0 %v4622
        %4731 = vmatprep.subr.bf16.mxu0 %v4641
        %4732 = vmatpush1.bf16.msra.mxu0 %v4640
        %4733 = vmatprep.subr.bf16.mxu0 %v4659
        %4734 = vmatpush1.bf16.msra.mxu0 %v4658
        %4735 = vmatprep.subr.bf16.mxu0 %v4677
        %4736 = vmatpush1.bf16.msra.mxu0 %v4676
        %4737 = vmatprep.mubr.bf16.mxu0 %v4702
        %4738 = vmatmul.mubr.bf16.gmra.mrb[0].mxu0 %v4701
        %v4739 = vpop.f32.mrb[0].mxu0
        %v4740 = vadd.f32 0.0, %v4739
        %v4741 = vpop.f32.mrb[0].mxu0
        %v4742 = vadd.f32 0.0, %v4741
        %v4743 = vpop.f32.mrb[0].mxu0
        %v4744 = vpop.f32.mrb[0].mxu0
        %4745 = vdwg.mxu0
        %4746 = vmatprep.subr.bf16.mxu0 %v4409
        %4747 = vmatpush1.bf16.msra.mxu0 %v4408
        %4748 = vmatprep.subr.bf16.mxu0 %v4427
        %4749 = vmatpush1.bf16.msra.mxu0 %v4426
        %4750 = vmatprep.subr.bf16.mxu0 %v4445
        %4751 = vmatpush1.bf16.msra.mxu0 %v4444
        %4752 = vmatprep.subr.bf16.mxu0 %v4463
        %4753 = vmatpush1.bf16.msra.mxu0 %v4462
        %4754 = vmatprep.subr.bf16.mxu0 %v4481
        %4755 = vmatpush1.bf16.msra.mxu0 %v4480
        %4756 = vmatprep.subr.bf16.mxu0 %v4499
        %4757 = vmatpush1.bf16.msra.mxu0 %v4498
        %4758 = vmatprep.subr.bf16.mxu0 %v4517
        %4759 = vmatpush1.bf16.msra.mxu0 %v4516
        %4760 = vmatprep.subr.bf16.mxu0 %v4535
        %4761 = vmatpush1.bf16.msra.mxu0 %v4534
        %4762 = vmatprep.subr.bf16.mxu0 %v4553
        %4763 = vmatpush1.bf16.msra.mxu0 %v4552
        %4764 = vmatprep.subr.bf16.mxu0 %v4571
        %4765 = vmatpush1.bf16.msra.mxu0 %v4570
        %4766 = vmatprep.subr.bf16.mxu0 %v4589
        %4767 = vmatpush1.bf16.msra.mxu0 %v4588
        %4768 = vmatprep.subr.bf16.mxu0 %v4607
        %4769 = vmatpush1.bf16.msra.mxu0 %v4606
        %4770 = vmatprep.subr.bf16.mxu0 %v4625
        %4771 = vmatpush1.bf16.msra.mxu0 %v4624
        %4772 = vmatprep.subr.bf16.mxu0 %v4643
        %4773 = vmatpush1.bf16.msra.mxu0 %v4642
        %4774 = vmatprep.subr.bf16.mxu0 %v4661
        %4775 = vmatpush1.bf16.msra.mxu0 %v4660
        %4776 = vmatprep.subr.bf16.mxu0 %v4679
        %4777 = vmatpush1.bf16.msra.mxu0 %v4678
        %4778 = vmatprep.mubr.bf16.mxu0 %v4702
        %4779 = vmatmul.mubr.bf16.gmra.mrb[0].mxu0 %v4701
        %v4780 = vpop.f32.mrb[0].mxu0
        %v4781 = vadd.f32 0.0, %v4780
        %v4782 = vpop.f32.mrb[0].mxu0
        %v4783 = vadd.f32 0.0, %v4782
        %v4784 = vpop.f32.mrb[0].mxu0
        %v4785 = vpop.f32.mrb[0].mxu0
        %4786 = vdwg.mxu0
        %4787 = vmatprep.subr.bf16.mxu0 %v4411
        %4788 = vmatpush1.bf16.msra.mxu0 %v4410
        %4789 = vmatprep.subr.bf16.mxu0 %v4429
        %4790 = vmatpush1.bf16.msra.mxu0 %v4428
        %4791 = vmatprep.subr.bf16.mxu0 %v4447
        %4792 = vmatpush1.bf16.msra.mxu0 %v4446
        %4793 = vmatprep.subr.bf16.mxu0 %v4465
        %4794 = vmatpush1.bf16.msra.mxu0 %v4464
        %4795 = vmatprep.subr.bf16.mxu0 %v4483
        %4796 = vmatpush1.bf16.msra.mxu0 %v4482
        %4797 = vmatprep.subr.bf16.mxu0 %v4501
        %4798 = vmatpush1.bf16.msra.mxu0 %v4500
        %4799 = vmatprep.subr.bf16.mxu0 %v4519
        %4800 = vmatpush1.bf16.msra.mxu0 %v4518
        %4801 = vmatprep.subr.bf16.mxu0 %v4537
        %4802 = vmatpush1.bf16.msra.mxu0 %v4536
        %4803 = vmatprep.subr.bf16.mxu0 %v4555
        %4804 = vmatpush1.bf16.msra.mxu0 %v4554
        %4805 = vmatprep.subr.bf16.mxu0 %v4573
        %4806 = vmatpush1.bf16.msra.mxu0 %v4572
        %4807 = vmatprep.subr.bf16.mxu0 %v4591
        %4808 = vmatpush1.bf16.msra.mxu0 %v4590
        %4809 = vmatprep.subr.bf16.mxu0 %v4609
        %4810 = vmatpush1.bf16.msra.mxu0 %v4608
        %4811 = vmatprep.subr.bf16.mxu0 %v4627
        %4812 = vmatpush1.bf16.msra.mxu0 %v4626
        %4813 = vmatprep.subr.bf16.mxu0 %v4645
        %4814 = vmatpush1.bf16.msra.mxu0 %v4644
        %4815 = vmatprep.subr.bf16.mxu0 %v4663
        %4816 = vmatpush1.bf16.msra.mxu0 %v4662
        %4817 = vmatprep.subr.bf16.mxu0 %v4681
        %4818 = vmatpush1.bf16.msra.mxu0 %v4680
        %4819 = vmatprep.mubr.bf16.mxu0 %v4702
        %4820 = vmatmul.mubr.bf16.gmra.mrb[0].mxu0 %v4701
        %v4821 = vpop.f32.mrb[0].mxu0
        %v4822 = vadd.f32 0.0, %v4821
        %v4823 = vpop.f32.mrb[0].mxu0
        %v4824 = vadd.f32 0.0, %v4823
        %v4825 = vpop.f32.mrb[0].mxu0
        %v4826 = vpop.f32.mrb[0].mxu0
        %4827 = vdwg.mxu0
        %4828 = vmatprep.subr.bf16.mxu0 %v4413
        %4829 = vmatpush1.bf16.msra.mxu0 %v4412
        %4830 = vmatprep.subr.bf16.mxu0 %v4431
        %4831 = vmatpush1.bf16.msra.mxu0 %v4430
        %4832 = vmatprep.subr.bf16.mxu0 %v4449
        %4833 = vmatpush1.bf16.msra.mxu0 %v4448
        %4834 = vmatprep.subr.bf16.mxu0 %v4467
        %4835 = vmatpush1.bf16.msra.mxu0 %v4466
        %4836 = vmatprep.subr.bf16.mxu0 %v4485
        %4837 = vmatpush1.bf16.msra.mxu0 %v4484
        %4838 = vmatprep.subr.bf16.mxu0 %v4503
        %4839 = vmatpush1.bf16.msra.mxu0 %v4502
        %4840 = vmatprep.subr.bf16.mxu0 %v4521
        %4841 = vmatpush1.bf16.msra.mxu0 %v4520
        %4842 = vmatprep.subr.bf16.mxu0 %v4539
        %4843 = vmatpush1.bf16.msra.mxu0 %v4538
        %4844 = vmatprep.subr.bf16.mxu0 %v4557
        %4845 = vmatpush1.bf16.msra.mxu0 %v4556
        %4846 = vmatprep.subr.bf16.mxu0 %v4575
        %4847 = vmatpush1.bf16.msra.mxu0 %v4574
        %4848 = vmatprep.subr.bf16.mxu0 %v4593
        %4849 = vmatpush1.bf16.msra.mxu0 %v4592
        %4850 = vmatprep.subr.bf16.mxu0 %v4611
        %4851 = vmatpush1.bf16.msra.mxu0 %v4610
        %4852 = vmatprep.subr.bf16.mxu0 %v4629
        %4853 = vmatpush1.bf16.msra.mxu0 %v4628
        %4854 = vmatprep.subr.bf16.mxu0 %v4647
        %4855 = vmatpush1.bf16.msra.mxu0 %v4646
        %4856 = vmatprep.subr.bf16.mxu0 %v4665
        %4857 = vmatpush1.bf16.msra.mxu0 %v4664
        %4858 = vmatprep.subr.bf16.mxu0 %v4683
        %4859 = vmatpush1.bf16.msra.mxu0 %v4682
        %4860 = vmatprep.mubr.bf16.mxu0 %v4702
        %4861 = vmatmul.mubr.bf16.gmra.mrb[0].mxu0 %v4701
        %v4862 = vpop.f32.mrb[0].mxu0
        %v4863 = vadd.f32 0.0, %v4862
        %v4864 = vpop.f32.mrb[0].mxu0
        %v4865 = vadd.f32 0.0, %v4864
        %v4866 = vpop.f32.mrb[0].mxu0
        %v4867 = vpop.f32.mrb[0].mxu0
        %4868 = vdwg.mxu0
        %4869 = vmatprep.subr.bf16.mxu0 %v4415
        %4870 = vmatpush1.bf16.msra.mxu0 %v4414
        %4871 = vmatprep.subr.bf16.mxu0 %v4433
        %4872 = vmatpush1.bf16.msra.mxu0 %v4432
        %4873 = vmatprep.subr.bf16.mxu0 %v4451
        %4874 = vmatpush1.bf16.msra.mxu0 %v4450
        %4875 = vmatprep.subr.bf16.mxu0 %v4469
        %4876 = vmatpush1.bf16.msra.mxu0 %v4468
        %4877 = vmatprep.subr.bf16.mxu0 %v4487
        %4878 = vmatpush1.bf16.msra.mxu0 %v4486
        %4879 = vmatprep.subr.bf16.mxu0 %v4505
        %4880 = vmatpush1.bf16.msra.mxu0 %v4504
        %4881 = vmatprep.subr.bf16.mxu0 %v4523
        %4882 = vmatpush1.bf16.msra.mxu0 %v4522
        %4883 = vmatprep.subr.bf16.mxu0 %v4541
        %4884 = vmatpush1.bf16.msra.mxu0 %v4540
        %4885 = vmatprep.subr.bf16.mxu0 %v4559
        %4886 = vmatpush1.bf16.msra.mxu0 %v4558
        %4887 = vmatprep.subr.bf16.mxu0 %v4577
        %4888 = vmatpush1.bf16.msra.mxu0 %v4576
        %4889 = vmatprep.subr.bf16.mxu0 %v4595
        %4890 = vmatpush1.bf16.msra.mxu0 %v4594
        %4891 = vmatprep.subr.bf16.mxu0 %v4613
        %4892 = vmatpush1.bf16.msra.mxu0 %v4612
        %4893 = vmatprep.subr.bf16.mxu0 %v4631
        %4894 = vmatpush1.bf16.msra.mxu0 %v4630
        %4895 = vmatprep.subr.bf16.mxu0 %v4649
        %4896 = vmatpush1.bf16.msra.mxu0 %v4648
        %4897 = vmatprep.subr.bf16.mxu0 %v4667
        %4898 = vmatpush1.bf16.msra.mxu0 %v4666
        %4899 = vmatprep.subr.bf16.mxu0 %v4685
        %4900 = vmatpush1.bf16.msra.mxu0 %v4684
        %4901 = vmatprep.mubr.bf16.mxu0 %v4702
        %4902 = vmatmul.mubr.bf16.gmra.mrb[0].mxu0 %v4701
        %v4903 = vpop.f32.mrb[0].mxu0
        %v4904 = vadd.f32 0.0, %v4903
        %v4905 = vpop.f32.mrb[0].mxu0
        %v4906 = vadd.f32 0.0, %v4905
        %v4907 = vpop.f32.mrb[0].mxu0
        %v4908 = vpop.f32.mrb[0].mxu0
        %4909 = vdwg.mxu0
        %4910 = vmatprep.subr.bf16.mxu0 %v4417
        %4911 = vmatpush1.bf16.msra.mxu0 %v4416
        %4912 = vmatprep.subr.bf16.mxu0 %v4435
        %4913 = vmatpush1.bf16.msra.mxu0 %v4434
        %4914 = vmatprep.subr.bf16.mxu0 %v4453
        %4915 = vmatpush1.bf16.msra.mxu0 %v4452
        %4916 = vmatprep.subr.bf16.mxu0 %v4471
        %4917 = vmatpush1.bf16.msra.mxu0 %v4470
        %4918 = vmatprep.subr.bf16.mxu0 %v4489
        %4919 = vmatpush1.bf16.msra.mxu0 %v4488
        %4920 = vmatprep.subr.bf16.mxu0 %v4507
        %4921 = vmatpush1.bf16.msra.mxu0 %v4506
        %4922 = vmatprep.subr.bf16.mxu0 %v4525
        %4923 = vmatpush1.bf16.msra.mxu0 %v4524
        %4924 = vmatprep.subr.bf16.mxu0 %v4543
        %4925 = vmatpush1.bf16.msra.mxu0 %v4542
        %4926 = vmatprep.subr.bf16.mxu0 %v4561
        %4927 = vmatpush1.bf16.msra.mxu0 %v4560
        %4928 = vmatprep.subr.bf16.mxu0 %v4579
        %4929 = vmatpush1.bf16.msra.mxu0 %v4578
        %4930 = vmatprep.subr.bf16.mxu0 %v4597
        %4931 = vmatpush1.bf16.msra.mxu0 %v4596
        %4932 = vmatprep.subr.bf16.mxu0 %v4615
        %4933 = vmatpush1.bf16.msra.mxu0 %v4614
        %4934 = vmatprep.subr.bf16.mxu0 %v4633
        %4935 = vmatpush1.bf16.msra.mxu0 %v4632
        %4936 = vmatprep.subr.bf16.mxu0 %v4651
        %4937 = vmatpush1.bf16.msra.mxu0 %v4650
        %4938 = vmatprep.subr.bf16.mxu0 %v4669
        %4939 = vmatpush1.bf16.msra.mxu0 %v4668
        %4940 = vmatprep.subr.bf16.mxu0 %v4687
        %4941 = vmatpush1.bf16.msra.mxu0 %v4686
        %4942 = vmatprep.mubr.bf16.mxu0 %v4702
        %4943 = vmatmul.mubr.bf16.gmra.mrb[0].mxu0 %v4701
        %v4944 = vpop.f32.mrb[0].mxu0
        %v4945 = vadd.f32 0.0, %v4944
        %v4946 = vpop.f32.mrb[0].mxu0
        %v4947 = vadd.f32 0.0, %v4946
        %v4948 = vpop.f32.mrb[0].mxu0
        %v4949 = vpop.f32.mrb[0].mxu0
        %4950 = vdwg.mxu0
        %4951 = vmatprep.subr.bf16.mxu0 %v4419
        %4952 = vmatpush1.bf16.msra.mxu0 %v4418
        %4953 = vmatprep.subr.bf16.mxu0 %v4437
        %4954 = vmatpush1.bf16.msra.mxu0 %v4436
        %4955 = vmatprep.subr.bf16.mxu0 %v4455
        %4956 = vmatpush1.bf16.msra.mxu0 %v4454
        %4957 = vmatprep.subr.bf16.mxu0 %v4473
        %4958 = vmatpush1.bf16.msra.mxu0 %v4472
        %4959 = vmatprep.subr.bf16.mxu0 %v4491
        %4960 = vmatpush1.bf16.msra.mxu0 %v4490
        %4961 = vmatprep.subr.bf16.mxu0 %v4509
        %4962 = vmatpush1.bf16.msra.mxu0 %v4508
        %4963 = vmatprep.subr.bf16.mxu0 %v4527
        %4964 = vmatpush1.bf16.msra.mxu0 %v4526
        %4965 = vmatprep.subr.bf16.mxu0 %v4545
        %4966 = vmatpush1.bf16.msra.mxu0 %v4544
        %4967 = vmatprep.subr.bf16.mxu0 %v4563
        %4968 = vmatpush1.bf16.msra.mxu0 %v4562
        %4969 = vmatprep.subr.bf16.mxu0 %v4581
        %4970 = vmatpush1.bf16.msra.mxu0 %v4580
        %4971 = vmatprep.subr.bf16.mxu0 %v4599
        %4972 = vmatpush1.bf16.msra.mxu0 %v4598
        %4973 = vmatprep.subr.bf16.mxu0 %v4617
        %4974 = vmatpush1.bf16.msra.mxu0 %v4616
        %4975 = vmatprep.subr.bf16.mxu0 %v4635
        %4976 = vmatpush1.bf16.msra.mxu0 %v4634
        %4977 = vmatprep.subr.bf16.mxu0 %v4653
        %4978 = vmatpush1.bf16.msra.mxu0 %v4652
        %4979 = vmatprep.subr.bf16.mxu0 %v4671
        %4980 = vmatpush1.bf16.msra.mxu0 %v4670
        %4981 = vmatprep.subr.bf16.mxu0 %v4689
        %4982 = vmatpush1.bf16.msra.mxu0 %v4688
        %4983 = vmatprep.mubr.bf16.mxu0 %v4702
        %4984 = vmatmul.mubr.bf16.gmra.mrb[0].mxu0 %v4701
        %v4985 = vpop.f32.mrb[0].mxu0
        %v4986 = vadd.f32 0.0, %v4985
        %v4987 = vpop.f32.mrb[0].mxu0
        %v4988 = vadd.f32 0.0, %v4987
        %v4989 = vpop.f32.mrb[0].mxu0
        %v4990 = vpop.f32.mrb[0].mxu0
        %4991 = vdwg.mxu0
        %4992 = vmatprep.subr.bf16.mxu0 %v4421
        %4993 = vmatpush1.bf16.msra.mxu0 %v4420
        %4994 = vmatprep.subr.bf16.mxu0 %v4439
        %4995 = vmatpush1.bf16.msra.mxu0 %v4438
        %4996 = vmatprep.subr.bf16.mxu0 %v4457
        %4997 = vmatpush1.bf16.msra.mxu0 %v4456
        %4998 = vmatprep.subr.bf16.mxu0 %v4475
        %4999 = vmatpush1.bf16.msra.mxu0 %v4474
        %5000 = vmatprep.subr.bf16.mxu0 %v4493
        %5001 = vmatpush1.bf16.msra.mxu0 %v4492
        %5002 = vmatprep.subr.bf16.mxu0 %v4511
        %5003 = vmatpush1.bf16.msra.mxu0 %v4510
        %5004 = vmatprep.subr.bf16.mxu0 %v4529
        %5005 = vmatpush1.bf16.msra.mxu0 %v4528
        %5006 = vmatprep.subr.bf16.mxu0 %v4547
        %5007 = vmatpush1.bf16.msra.mxu0 %v4546
        %5008 = vmatprep.subr.bf16.mxu0 %v4565
        %5009 = vmatpush1.bf16.msra.mxu0 %v4564
        %5010 = vmatprep.subr.bf16.mxu0 %v4583
        %5011 = vmatpush1.bf16.msra.mxu0 %v4582
        %5012 = vmatprep.subr.bf16.mxu0 %v4601
        %5013 = vmatpush1.bf16.msra.mxu0 %v4600
        %5014 = vmatprep.subr.bf16.mxu0 %v4619
        %5015 = vmatpush1.bf16.msra.mxu0 %v4618
        %5016 = vmatprep.subr.bf16.mxu0 %v4637
        %5017 = vmatpush1.bf16.msra.mxu0 %v4636
        %5018 = vmatprep.subr.bf16.mxu0 %v4655
        %5019 = vmatpush1.bf16.msra.mxu0 %v4654
        %5020 = vmatprep.subr.bf16.mxu0 %v4673
        %5021 = vmatpush1.bf16.msra.mxu0 %v4672
        %5022 = vmatprep.subr.bf16.mxu0 %v4691
        %5023 = vmatpush1.bf16.msra.mxu0 %v4690
        %5024 = vmatprep.mubr.bf16.mxu0 %v4702
        %5025 = vmatmul.mubr.bf16.gmra.mrb[0].mxu0 %v4701
        %v5026 = vpop.f32.mrb[0].mxu0
        %v5027 = vadd.f32 0.0, %v5026
        %v5028 = vpop.f32.mrb[0].mxu0
        %v5029 = vadd.f32 0.0, %v5028
        %v5030 = vpop.f32.mrb[0].mxu0
        %v5031 = vpop.f32.mrb[0].mxu0
        %5032 = vdwg.mxu0
        %5033 = vmatprep.subr.bf16.mxu0 %v4423
        %5034 = vmatpush1.bf16.msra.mxu0 %v4422
        %5035 = vmatprep.subr.bf16.mxu0 %v4441
        %5036 = vmatpush1.bf16.msra.mxu0 %v4440
        %5037 = vmatprep.subr.bf16.mxu0 %v4459
        %5038 = vmatpush1.bf16.msra.mxu0 %v4458
        %5039 = vmatprep.subr.bf16.mxu0 %v4477
        %5040 = vmatpush1.bf16.msra.mxu0 %v4476
        %5041 = vmatprep.subr.bf16.mxu0 %v4495
        %5042 = vmatpush1.bf16.msra.mxu0 %v4494
        %5043 = vmatprep.subr.bf16.mxu0 %v4513
        %5044 = vmatpush1.bf16.msra.mxu0 %v4512
        %5045 = vmatprep.subr.bf16.mxu0 %v4531
        %5046 = vmatpush1.bf16.msra.mxu0 %v4530
        %5047 = vmatprep.subr.bf16.mxu0 %v4549
        %5048 = vmatpush1.bf16.msra.mxu0 %v4548
        %5049 = vmatprep.subr.bf16.mxu0 %v4567
        %5050 = vmatpush1.bf16.msra.mxu0 %v4566
        %5051 = vmatprep.subr.bf16.mxu0 %v4585
        %5052 = vmatpush1.bf16.msra.mxu0 %v4584
        %5053 = vmatprep.subr.bf16.mxu0 %v4603
        %5054 = vmatpush1.bf16.msra.mxu0 %v4602
        %5055 = vmatprep.subr.bf16.mxu0 %v4621
        %5056 = vmatpush1.bf16.msra.mxu0 %v4620
        %5057 = vmatprep.subr.bf16.mxu0 %v4639
        %5058 = vmatpush1.bf16.msra.mxu0 %v4638
        %5059 = vmatprep.subr.bf16.mxu0 %v4657
        %5060 = vmatpush1.bf16.msra.mxu0 %v4656
        %5061 = vmatprep.subr.bf16.mxu0 %v4675
        %5062 = vmatpush1.bf16.msra.mxu0 %v4674
        %5063 = vmatprep.subr.bf16.mxu0 %v4693
        %5064 = vmatpush1.bf16.msra.mxu0 %v4692
        %5065 = vmatprep.mubr.bf16.mxu0 %v4702
        %5066 = vmatmul.mubr.bf16.gmra.mrb[0].mxu0 %v4701
        %v5067 = vpop.f32.mrb[0].mxu0
        %v5068 = vadd.f32 0.0, %v5067
        %v5069 = vpop.f32.mrb[0].mxu0
        %v5070 = vadd.f32 0.0, %v5069
        %v5071 = vpop.f32.mrb[0].mxu0
        %v5072 = vpop.f32.mrb[0].mxu0
        %5073 = vdwg.mxu0
        %5075 = vset.pattern.permute.xlu0 0
        %5076 = vperm.xlu0 %5075, %v324
        %v5077 = vpop.permute.xlu0 %5076
        %v5079 = vmul.f32 %v5077, %v4740
        %v5080 = vmul.f32 %v5077, %v4742
        %v5081 = vadd.f32 %v5079, 0.0
        %v5082 = vadd.f32 %v5080, 0.0
        %5083 = vset.pattern.permute.xlu0 1
        %5084 = vperm.xlu0 %5083, %v324
        %v5085 = vpop.permute.xlu0 %5084
        %v5087 = vmul.f32 %v5085, %v4781
        %v5088 = vmul.f32 %v5085, %v4783
        %v5089 = vadd.f32 %v5081, %v5087
        %v5090 = vadd.f32 %v5082, %v5088
        %5091 = vset.pattern.permute.xlu0 2
        %5092 = vperm.xlu0 %5091, %v324
        %v5093 = vpop.permute.xlu0 %5092
        %v5095 = vmul.f32 %v5093, %v4822
        %v5096 = vmul.f32 %v5093, %v4824
        %v5097 = vadd.f32 %v5089, %v5095
        %v5098 = vadd.f32 %v5090, %v5096
        %5099 = vset.pattern.permute.xlu0 3
        %5100 = vperm.xlu0 %5099, %v324
        %v5101 = vpop.permute.xlu0 %5100
        %v5103 = vmul.f32 %v5101, %v4863
        %v5104 = vmul.f32 %v5101, %v4865
        %v5105 = vadd.f32 %v5097, %v5103
        %v5106 = vadd.f32 %v5098, %v5104
        %5107 = vset.pattern.permute.xlu0 4
        %5108 = vperm.xlu0 %5107, %v324
        %v5109 = vpop.permute.xlu0 %5108
        %v5111 = vmul.f32 %v5109, %v4904
        %v5112 = vmul.f32 %v5109, %v4906
        %v5113 = vadd.f32 %v5105, %v5111
        %v5114 = vadd.f32 %v5106, %v5112
        %5115 = vset.pattern.permute.xlu0 5
        %5116 = vperm.xlu0 %5115, %v324
        %v5117 = vpop.permute.xlu0 %5116
        %v5119 = vmul.f32 %v5117, %v4945
        %v5120 = vmul.f32 %v5117, %v4947
        %v5121 = vadd.f32 %v5113, %v5119
        %v5122 = vadd.f32 %v5114, %v5120
        %5123 = vset.pattern.permute.xlu0 6
        %5124 = vperm.xlu0 %5123, %v324
        %v5125 = vpop.permute.xlu0 %5124
        %v5127 = vmul.f32 %v5125, %v4986
        %v5128 = vmul.f32 %v5125, %v4988
        %v5129 = vadd.f32 %v5121, %v5127
        %v5130 = vadd.f32 %v5122, %v5128
        %5131 = vset.pattern.permute.xlu0 7
        %5132 = vperm.xlu0 %5131, %v324
        %v5133 = vpop.permute.xlu0 %5132
        %v5135 = vmul.f32 %v5133, %v5027
        %v5136 = vmul.f32 %v5133, %v5029
        %v5137 = vadd.f32 %v5129, %v5135
        %v5138 = vadd.f32 %v5130, %v5136
        %5139 = vset.pattern.permute.xlu0 8
        %5140 = vperm.xlu0 %5139, %v324
        %v5141 = vpop.permute.xlu0 %5140
        %v5143 = vmul.f32 %v5141, %v5068
        %v5144 = vmul.f32 %v5141, %v5070
        %v5145 = vadd.f32 %v5137, %v5143
        %v5146 = vadd.f32 %v5138, %v5144
        %v5147 = vld [vmem:[%s4] sm:$0xf]
        %v5148 = vld [vmem:[%s5] sm:$0xf]
        %5150 = vset.pattern.permute.xlu0 0
        %5151 = vperm.xlu0 %5150, %v5148
        %v5152 = vpop.permute.xlu0 %5151
        %vm5154 = vcmask 31744
        %v5156 = vsel %vm5154, %v5147, 0
        %vm5158 = vcmask 1043456
        %v5160 = vsel %vm5158, %v5145, 0
        %v5163 = vsel %vm5158, %v5146, 0
        %5165 = vmatprep.subr.mxu0 %v5163
        %5166 = vmatpush1.msra.mxu0 %v5160
        %5167 = vmatprep.subr.mxu0 0.0
        %5168 = vmatpush1.msra.mxu0 0.0
        %5169 = vmatprep.subr.mxu0 0.0
        %5170 = vmatpush1.msra.mxu0 0.0
        %5171 = vmatprep.subr.mxu0 0.0
        %5172 = vmatpush1.msra.mxu0 0.0
        %5173 = vmatprep.subr.mxu0 0.0
        %5174 = vmatpush1.msra.mxu0 0.0
        %5175 = vmatprep.subr.mxu0 0.0
        %5176 = vmatpush1.msra.mxu0 0.0
        %5177 = vmatprep.subr.mxu0 0.0
        %5178 = vmatpush1.msra.mxu0 0.0
        %5179 = vmatprep.subr.mxu0 0.0
        %5180 = vmatpush1.msra.mxu0 0.0
        %5181 = vmatprep.subr.mxu0 0.0
        %5182 = vmatpush1.msra.mxu0 0.0
        %5183 = vmatprep.subr.mxu0 0.0
        %5184 = vmatpush1.msra.mxu0 0.0
        %5185 = vmatprep.subr.mxu0 0.0
        %5186 = vmatpush1.msra.mxu0 0.0
        %5187 = vmatprep.subr.mxu0 0.0
        %5188 = vmatpush1.msra.mxu0 0.0
        %5189 = vmatprep.subr.mxu0 0.0
        %5190 = vmatpush1.msra.mxu0 0.0
        %5191 = vmatprep.subr.mxu0 0.0
        %5192 = vmatpush1.msra.mxu0 0.0
        %5193 = vmatprep.subr.mxu0 0.0
        %5194 = vmatpush1.msra.mxu0 0.0
        %5195 = vmatprep.subr.mxu0 0.0
        %5196 = vmatpush1.msra.mxu0 0.0
        %5197 = vmatprep.subr.mxu0 0.0
        %5198 = vmatpush1.msra.mxu0 0.0
        %5199 = vmatprep.subr.mxu0 0.0
        %5200 = vmatpush1.msra.mxu0 0.0
        %5201 = vmatprep.subr.mxu0 0.0
        %5202 = vmatpush1.msra.mxu0 0.0
        %5203 = vmatprep.subr.mxu0 0.0
        %5204 = vmatpush1.msra.mxu0 0.0
        %5205 = vmatprep.subr.mxu0 0.0
        %5206 = vmatpush1.msra.mxu0 0.0
        %5207 = vmatprep.subr.mxu0 0.0
        %5208 = vmatpush1.msra.mxu0 0.0
        %5209 = vmatprep.subr.mxu0 0.0
        %5210 = vmatpush1.msra.mxu0 0.0
        %5211 = vmatprep.subr.mxu0 0.0
        %5212 = vmatpush1.msra.mxu0 0.0
        %5213 = vmatprep.subr.mxu0 0.0
        %5214 = vmatpush1.msra.mxu0 0.0
        %5215 = vmatprep.subr.mxu0 0.0
        %5216 = vmatpush1.msra.mxu0 0.0
        %5217 = vmatprep.subr.mxu0 0.0
        %5218 = vmatpush1.msra.mxu0 0.0
        %5219 = vmatprep.subr.mxu0 0.0
        %5220 = vmatpush1.msra.mxu0 0.0
        %5221 = vmatprep.subr.mxu0 0.0
        %5222 = vmatpush1.msra.mxu0 0.0
        %5223 = vmatprep.subr.mxu0 0.0
        %5224 = vmatpush1.msra.mxu0 0.0
        %5225 = vmatprep.subr.mxu0 0.0
        %5226 = vmatpush1.msra.mxu0 0.0
        %5227 = vmatprep.subr.mxu0 0.0
        %5228 = vmatpush1.msra.mxu0 0.0
        %5229 = vmatprep.mubr.f32.mxu0 0.0
        %5230 = vmatmul.mubr.f32.gmra.mrb[0].mxu0 %v5156
        %v5231 = vpop.f32.mrb[0].mxu0
        %v5232 = vadd.f32 %v5152, %v5231
        %v5233 = vpop.f32.mrb[0].mxu0
        %v5234 = vadd.f32 %v5152, %v5233
        %5235 = vdwg.mxu0
        %v5238 = vcombine.low %v5232, %v5234
        %5240 = vst [vmem:[%s300] sm:$0xff] %v5238
        %s5241 = sand.u32 %s185, 1
        %s5242 = scalar_lea.sflag [#allocation4], %s5241
        %s5243 = sand.u32 %s185, 1
        %s5244 = smul.addr %s5243, 8
        %s5245 = scalar_lea.vmem [#allocation3], %s5244
        // Predicated region
        $region45: #{tpu_custom_call.1} parent=43 // pred_check
          %p5246 = pneg %p195
        $region46: #{tpu_custom_call.1} parent=43 // pred_check_branch
          %5248 = sbr.rel (%p5246) target = $region48
        $region47: #{tpu_custom_call.1} parent=43 // pred_region
          %s5249 = smul.u32 2, %s25
          %s5251 = ssub.s32 128, 128
          %5252 = vsyncadd %s5242, %s5251
          %s5253 = smul.addr %s24, 2
          %s5254 = sadd.s32 %s5249, %s5253
          %s5255 = smul.addr %s5254, 64
          %s5256 = scalar_lea.hbm %s6, %s5255
          %s5258 = sshll.u32 %s5245, 4
          %s5259 = int_to_ptr.vmem [resolvable:$true] %s5258
          %5261 = dma.vmem_to_hbm [thread:$0]  %s5259, 128, %s5256, %s5242
        $region48: #{tpu_custom_call.1} parent=43 // pred_fallthru
          _
      $region44: #{tpu_custom_call.1} parent=5 // pred_fallthru
        _
      %p5262 = scmp.le.s32.totalorder 2, %s15
      // Predicated region
      $region49: #{tpu_custom_call.1} parent=5 // pred_check
        %p5263 = pneg %p5262
      $region50: #{tpu_custom_call.1} parent=5 // pred_check_branch
        %5265 = sbr.rel (%p5263) target = $region52
      $region51: #{tpu_custom_call.1} parent=5 // pred_region
        %s5266 = ssub.s32 %s15, 2
        // Predicated region
        $region53: #{tpu_custom_call.1} parent=51 // pred_check
          %p5267 = pneg %p201
        $region54: #{tpu_custom_call.1} parent=51 // pred_check_branch
          %5269 = sbr.rel (%p5267) target = $region56
        $region55: #{tpu_custom_call.1} parent=51 // pred_region
          %s5270 = sand.u32 %s186, 1
          %s5271 = scalar_lea.sflag [#allocation4], %s5270
          %s5272 = sand.u32 %s186, 1
          %s5273 = smul.addr %s5272, 8
          %s5274 = scalar_lea.vmem [#allocation3], %s5273
          %5275 = dma.done %s5271, 128
        $region56: #{tpu_custom_call.1} parent=51 // pred_fallthru
          _
      $region52: #{tpu_custom_call.1} parent=5 // pred_fallthru
        _
    $region6: #{tpu_custom_call.1} parent=1 // loop_footer
      %s19 = sadd.s32 1, %s15
    $region7: #{tpu_custom_call.1} parent=1 // loop_footer_branch
      %14 = sbr.rel target = $region3
    $region8: #{tpu_custom_call.1} parent=1 // loop_exit
      _
    %5276 = vsyncpa [#allocation4], 1
    %s5277 = scalar_lea.sflag [#allocation4], 1
    %5278 = vsyncpa %s5277, 1

</llo_original>
